<compile_context>
chip_gen: v7x
topology: tpu7x:2x2x1
jax: 0.10.0
libtpu: 0.0.40
codegen_flags: <defaults>
</compile_context>

<pallas_src>
import functools

import jax
import jax.numpy as jnp
from jax.experimental import pallas as pl
from jax.experimental.pallas import tpu as pltpu

EMBEDDING_SIZE = 300
HIDDEN_SIZE = 100
NUM_LAYERS = 2
SIM_THRESHOLD = 0.5

HP = 128          # hidden padded to one full 128-lane vreg
GP = 4 * HP       # 4 gates, each in its own 128-lane-aligned slab

# torch gate chunk order is (i, f, g, o); kernel slab order is (i, f, o, g)
GATE_ORDER = (0, 1, 3, 2)


# ----------------------------------------------------------------------------
# Fused 2-layer LSTM kernel: whole (folded-batch) recurrence in one invocation.
# ----------------------------------------------------------------------------
def _lstm2_kernel(lens_ref, xg_ref, wrec_ref, b2_ref, q_ref):
    T, Bt, _ = xg_ref.shape

    wrec = wrec_ref[...]                                     # (2*HP, 2*GP)
    # Hoisted broadcasts (emitted once, not per unrolled step).
    b2b = jnp.broadcast_to(b2_ref[...], (Bt, GP))            # (Bt, GP)
    lens = jnp.broadcast_to(lens_ref[...], (Bt, HP))         # (Bt, HP) int32

    zeros = jnp.zeros((Bt, HP), jnp.float32)

    def cell(gates, c):
        # Slab order (i, f, o, g): one sigmoid over 3 slabs, one tanh for g.
        sg = jax.nn.sigmoid(gates[:, :3 * HP])
        g_g = jnp.tanh(gates[:, 3 * HP:])
        i_g = sg[:, 0 * HP:1 * HP]
        f_g = sg[:, 1 * HP:2 * HP]
        o_g = sg[:, 2 * HP:3 * HP]
        c_new = f_g * c + i_g * g_g
        h_new = o_g * jnp.tanh(c_new)
        return h_new, c_new

    # Prologue: layer-1 timestep 0 (h1_{-1} = 0 so the recurrent term vanishes;
    # b1 is already folded into xg).
    h1, c1 = cell(xg_ref[0], zeros)
    h2, c2 = zeros, zeros
    q = zeros

    def step(s, carry):
        h1, c1, h2, c2, q = carry
        # Merged wavefront matmul:
        #   cols [0:GP]   -> layer-1 gates at t=s      (rows 0:HP = whh1)
        #   cols [GP:2GP] -> layer-2 gates at t=s-1    (rows = [w2 ; whh2])
        lhs = jnp.concatenate([h1, h2], axis=1)              # (Bt, 2*HP)
        gall = jnp.dot(lhs, wrec, preferred_element_type=jnp.float32)
        g1 = gall[:, :GP] + xg_ref[s]
        g2 = gall[:, GP:] + b2b
        h1n, c1n = cell(g1, c1)
        h2n, c2n = cell(g2, c2)
        # h2n is the TOP-layer state for timestep s-1 -> last-valid select when
        # len == s  (i.e. timestep s-1 == len-1).
        qn = jnp.where(lens == s, h2n, q)
        return h1n, c1n, h2n, c2n, qn

    unroll = True if T <= 32 else 8
    h1, c1, h2, c2, q = jax.lax.fori_loop(1, T, step, (h1, c1, h2, c2, q),
                                          unroll=unroll)

    # Epilogue: layer-2 timestep T-1 (uses h1[T-1], h2[T-2]).
    lhs = jnp.concatenate([h1, h2], axis=1)
    gall = jnp.dot(lhs, wrec, preferred_element_type=jnp.float32)
    g2 = gall[:, GP:] + b2b
    h2n, _ = cell(g2, c2)
    q = jnp.where(lens == T, h2n, q)

    # NOTE: if a length is 0 or > T the select never fires and q stays zero.
    q_ref[...] = q


def _run_lstm2(lens, xg, kp):
    """lens: (2B,1) i32; xg: (T,2B,GP) f32 layer-1 pre-activations (b1 folded).
    Returns (2B, HP): top-layer hidden state at the last valid timestep."""
    T, Bt, _ = xg.shape
    vm = pltpu.MemorySpace.VMEM
    return pl.pallas_call(
        _lstm2_kernel,
        out_shape=jax.ShapeDtypeStruct((Bt, HP), jnp.float32),
        in_specs=[
            pl.BlockSpec(memory_space=vm),   # lens  (2B, 1)
            pl.BlockSpec(memory_space=vm),   # xg    (T, 2B, GP)
            pl.BlockSpec(memory_space=vm),   # w_rec (2*HP, 2*GP)
            pl.BlockSpec(memory_space=vm),   # b2    (1, GP)
        ],
        out_specs=pl.BlockSpec(memory_space=vm),
    )(lens, xg, kp["w_rec"], kp["b2"])


# ----------------------------------------------------------------------------
# Parameter prep: PyTorch layout -> padded / gate-slab-aligned kernel layout.
# Done ONCE, outside the jitted forward.
# ----------------------------------------------------------------------------
def _gate_pad_transpose(w, d_pad):
    """PyTorch (4H, D_in) -> (d_pad, GP) f32; slab k holds gate GATE_ORDER[k]."""
    h4, d = w.shape
    h = h4 // 4
    out = jnp.zeros((d_pad, GP), jnp.float32)
    for slab, chunk in enumerate(GATE_ORDER):
        out = out.at[:d, slab * HP:slab * HP + h].set(
            jnp.transpose(w[chunk * h:(chunk + 1) * h, :]).astype(jnp.float32))
    return out


def _gate_pad_bias(b_ih, b_hh):
    h = b_ih.shape[0] // 4
    b = (b_ih + b_hh).astype(jnp.float32)
    out = jnp.zeros((1, GP), jnp.float32)
    for slab, chunk in enumerate(GATE_ORDER):
        out = out.at[0, slab * HP:slab * HP + h].set(b[chunk * h:(chunk + 1) * h])
    return out


def prepare_params(params):
    p1, p2 = params
    w1 = _gate_pad_transpose(p1["w_ih"], EMBEDDING_SIZE)     # (300, GP)
    b1 = _gate_pad_bias(p1["b_ih"], p1["b_hh"])              # (1, GP)
    whh1 = _gate_pad_transpose(p1["w_hh"], HP)               # (HP, GP)
    w2 = _gate_pad_transpose(p2["w_ih"], HP)                 # (HP, GP)
    whh2 = _gate_pad_transpose(p2["w_hh"], HP)               # (HP, GP)
    b2 = _gate_pad_bias(p2["b_ih"], p2["b_hh"])              # (1, GP)

    # Merged recurrent weight for the wavefront step, LHS = [h1 | h2]:
    #   cols [0:GP]   : layer-1 gates  (rows 0:HP = whh1, rows HP:2HP = 0)
    #   cols [GP:2GP] : layer-2 gates  (rows 0:HP = w2,   rows HP:2HP = whh2)
    w_rec = jnp.zeros((2 * HP, 2 * GP), jnp.float32)
    w_rec = w_rec.at[:HP, :GP].set(whh1)
    w_rec = w_rec.at[:HP, GP:].set(w2)
    w_rec = w_rec.at[HP:, GP:].set(whh2)

    return dict(w1=w1, b1=b1, w_rec=w_rec, b2=b2)


def init_params(key):
    """Deterministic LSTM parameters, PyTorch shapes: per layer
    w_ih (4H, D_in), w_hh (4H, H), b_ih (4H,), b_hh (4H,)."""
    params = []
    k = 1.0 / jnp.sqrt(jnp.float32(HIDDEN_SIZE))
    d_in = EMBEDDING_SIZE
    for _ in range(NUM_LAYERS):
        key, k1, k2, k3, k4 = jax.random.split(key, 5)
        params.append(dict(
            w_ih=jax.random.uniform(k1, (4 * HIDDEN_SIZE, d_in), jnp.float32, -k, k),
            w_hh=jax.random.uniform(k2, (4 * HIDDEN_SIZE, HIDDEN_SIZE), jnp.float32, -k, k),
            b_ih=jax.random.uniform(k3, (4 * HIDDEN_SIZE,), jnp.float32, -k, k),
            b_hh=jax.random.uniform(k4, (4 * HIDDEN_SIZE,), jnp.float32, -k, k),
        ))
        d_in = HIDDEN_SIZE
    return params


# ----------------------------------------------------------------------------
# Model wrapper (mirrors dl_model.forward)
# ----------------------------------------------------------------------------
@functools.partial(jax.jit, static_argnames=("is_training",))
def dl_model_forward(kparams, input_batch1, input_batch2, len1, len2,
                     is_training, target_batch=None):
    B, T, _ = input_batch1.shape
    # Fold both questions into the batch: rows 0:B = q1, B:2B = q2.
    x_all = jnp.concatenate([input_batch1, input_batch2], axis=0).astype(jnp.float32)

    # Hoisted layer-1 input projection: one (2B*T, 300) x (300, GP) GEMM.
    xg = jnp.einsum("btd,dg->tbg", x_all, kparams["w1"],
                    preferred_element_type=jnp.float32) + kparams["b1"]
    # -> (T, 2B, GP), time-major.

    lens = jnp.concatenate([len1, len2], axis=0).astype(jnp.int32)[:, None]  # (2B,1)

    q = _run_lstm2(lens, xg, kparams)                          # (2B, HP)
    q1 = q[:B, :HIDDEN_SIZE]
    q2 = q[B:, :HIDDEN_SIZE]

    # Cosine similarity, torch semantics: each norm clamped at eps separately.
    eps = jnp.float32(1e-8)
    dot = jnp.sum(q1 * q2, axis=1)
    n1 = jnp.maximum(jnp.sqrt(jnp.sum(q1 * q1, axis=1)), eps)
    n2 = jnp.maximum(jnp.sqrt(jnp.sum(q2 * q2, axis=1)), eps)
    cos = dot / (n1 * n2)

    if is_training:
        # nn.CosineEmbeddingLoss (margin=0, reduction='mean'):
        #   y==1 -> 1 - cos ; y==-1 -> max(0, cos - margin)
        y = target_batch.astype(jnp.float32)
        per_ex = jnp.where(y > 0, 1.0 - cos, jnp.maximum(0.0, cos))
        return jnp.mean(per_ex), None
    else:
        return None, (cos >= SIM_THRESHOLD).astype(jnp.int32)


if __name__ == "__main__":
    key = jax.random.PRNGKey(0)
    kparam_key, kx1, kx2 = jax.random.split(key, 3)

    B, T = 2, 8
    params = init_params(kparam_key)
    kparams = prepare_params(params)   # padded / merged / transposed once

    x1 = jax.random.normal(kx1, (B, T, EMBEDDING_SIZE), jnp.float32)
    x2 = jax.random.normal(kx2, (B, T, EMBEDDING_SIZE), jnp.float32)
    len1 = jnp.array([T, 5], dtype=jnp.int32)
    len2 = jnp.array([6, T], dtype=jnp.int32)
    target = jnp.array([1.0, -1.0], dtype=jnp.float32)

    # Inference branch
    _, preds = dl_model_forward(kparams, x1, x2, len1, len2, is_training=False)
    preds = jax.block_until_ready(preds)

    # Training branch (cosine embedding loss)
    loss, _ = dl_model_forward(kparams, x1, x2, len1, len2,
                               is_training=True, target_batch=target)
    loss = jax.block_until_ready(loss)

    print("KERNEL_OK")
</pallas_src>

<mosaic_0001>
module attributes {stable_mosaic.version = 11 : i64} {
  func.func @_lstm2_kernel(%arg0: memref<4x1xi32, #tpu.memory_space<vmem>>, %arg1: memref<8x4x512xf32, #tpu.memory_space<vmem>>, %arg2: memref<256x1024xf32, #tpu.memory_space<vmem>>, %arg3: memref<1x512xf32, #tpu.memory_space<vmem>>, %arg4: memref<4x128xf32, #tpu.memory_space<vmem>>) attributes {dimension_semantics = [], scalar_prefetch = 0 : i64, scratch_operands = 0 : i64, tpu.core_type = #tpu.core_type<tc>} {
    %c0 = arith.constant 0 : index
    %c0_0 = arith.constant 0 : index
    %0 = vector.load %arg2[%c0, %c0_0] : memref<256x1024xf32, #tpu.memory_space<vmem>>, vector<256x1024xf32>
    %c0_1 = arith.constant 0 : index
    %c0_2 = arith.constant 0 : index
    %1 = vector.load %arg3[%c0_1, %c0_2] : memref<1x512xf32, #tpu.memory_space<vmem>>, vector<1x512xf32>
    %2 = vector.shape_cast %1 : vector<1x512xf32> to vector<1x512xf32>
    %3 = vector.broadcast %2 : vector<1x512xf32> to vector<4x512xf32>
    %c0_3 = arith.constant 0 : index
    %c0_4 = arith.constant 0 : index
    %4 = vector.load %arg0[%c0_3, %c0_4] : memref<4x1xi32, #tpu.memory_space<vmem>>, vector<4x1xi32>
    %5 = vector.shape_cast %4 : vector<4x1xi32> to vector<4x1xi32>
    %6 = vector.broadcast %5 : vector<4x1xi32> to vector<4x128xi32>
    %cst = arith.constant 0.000000e+00 : f32
    %7 = vector.broadcast %cst : f32 to vector<4x128xf32>
    %c0_5 = arith.constant 0 : index
    %c0_6 = arith.constant 0 : index
    %c0_7 = arith.constant 0 : index
    %8 = vector.load %arg1[%c0_5, %c0_6, %c0_7] : memref<8x4x512xf32, #tpu.memory_space<vmem>>, vector<1x4x512xf32>
    %9 = vector.shape_cast %8 : vector<1x4x512xf32> to vector<4x512xf32>
    %10 = vector.extract_strided_slice %9 {offsets = [0, 0], sizes = [4, 384], strides = [1, 1]} : vector<4x512xf32> to vector<4x384xf32>
    %11 = arith.negf %10 : vector<4x384xf32>
    %12 = math.exp %11 : vector<4x384xf32>
    %cst_8 = arith.constant 1.000000e+00 : f32
    %13 = vector.broadcast %cst_8 : f32 to vector<4x384xf32>
    %14 = arith.addf %13, %12 : vector<4x384xf32>
    %15 = arith.divf %13, %14 : vector<4x384xf32>
    %16 = vector.extract_strided_slice %9 {offsets = [0, 384], sizes = [4, 128], strides = [1, 1]} : vector<4x512xf32> to vector<4x128xf32>
    %17 = math.tanh %16 : vector<4x128xf32>
    %18 = vector.extract_strided_slice %15 {offsets = [0, 0], sizes = [4, 128], strides = [1, 1]} : vector<4x384xf32> to vector<4x128xf32>
    %19 = vector.extract_strided_slice %15 {offsets = [0, 128], sizes = [4, 128], strides = [1, 1]} : vector<4x384xf32> to vector<4x128xf32>
    %20 = vector.extract_strided_slice %15 {offsets = [0, 256], sizes = [4, 128], strides = [1, 1]} : vector<4x384xf32> to vector<4x128xf32>
    %21 = arith.mulf %19, %7 : vector<4x128xf32>
    %22 = arith.mulf %18, %17 : vector<4x128xf32>
    %23 = arith.addf %21, %22 : vector<4x128xf32>
    %24 = math.tanh %23 : vector<4x128xf32>
    %25 = arith.mulf %20, %24 : vector<4x128xf32>
    %c1_i32 = arith.constant 1 : i32
    %26 = tpu.concatenate %25, %7 in 1 : vector<4x128xf32>, vector<4x128xf32> -> vector<4x256xf32>
    %cst_9 = arith.constant dense<0.000000e+00> : vector<4x1024xf32>
    %27 = tpu.matmul %26, %0, %cst_9 {dimension_numbers = #tpu.dot_dimension_numbers<[1], [0], [0], [1], [0, 0, 1, 1], [], []>} : vector<4x256xf32>, vector<256x1024xf32>, vector<4x1024xf32> -> vector<4x1024xf32>
    %28 = vector.extract_strided_slice %27 {offsets = [0, 0], sizes = [4, 512], strides = [1, 1]} : vector<4x1024xf32> to vector<4x512xf32>
    %29 = arith.index_cast %c1_i32 : i32 to index
    %c0_10 = arith.constant 0 : index
    %c0_11 = arith.constant 0 : index
    %30 = vector.load %arg1[%29, %c0_10, %c0_11] : memref<8x4x512xf32, #tpu.memory_space<vmem>>, vector<1x4x512xf32>
    %31 = vector.shape_cast %30 : vector<1x4x512xf32> to vector<4x512xf32>
    %32 = arith.addf %28, %31 : vector<4x512xf32>
    %33 = vector.extract_strided_slice %27 {offsets = [0, 512], sizes = [4, 512], strides = [1, 1]} : vector<4x1024xf32> to vector<4x512xf32>
    %34 = arith.addf %33, %3 : vector<4x512xf32>
    %35 = vector.extract_strided_slice %32 {offsets = [0, 0], sizes = [4, 384], strides = [1, 1]} : vector<4x512xf32> to vector<4x384xf32>
    %36 = arith.negf %35 : vector<4x384xf32>
    %37 = math.exp %36 : vector<4x384xf32>
    %cst_12 = arith.constant 1.000000e+00 : f32
    %38 = vector.broadcast %cst_12 : f32 to vector<4x384xf32>
    %39 = arith.addf %38, %37 : vector<4x384xf32>
    %40 = arith.divf %38, %39 : vector<4x384xf32>
    %41 = vector.extract_strided_slice %32 {offsets = [0, 384], sizes = [4, 128], strides = [1, 1]} : vector<4x512xf32> to vector<4x128xf32>
    %42 = math.tanh %41 : vector<4x128xf32>
    %43 = vector.extract_strided_slice %40 {offsets = [0, 0], sizes = [4, 128], strides = [1, 1]} : vector<4x384xf32> to vector<4x128xf32>
    %44 = vector.extract_strided_slice %40 {offsets = [0, 128], sizes = [4, 128], strides = [1, 1]} : vector<4x384xf32> to vector<4x128xf32>
    %45 = vector.extract_strided_slice %40 {offsets = [0, 256], sizes = [4, 128], strides = [1, 1]} : vector<4x384xf32> to vector<4x128xf32>
    %46 = arith.mulf %44, %23 : vector<4x128xf32>
    %47 = arith.mulf %43, %42 : vector<4x128xf32>
    %48 = arith.addf %46, %47 : vector<4x128xf32>
    %49 = math.tanh %48 : vector<4x128xf32>
    %50 = arith.mulf %45, %49 : vector<4x128xf32>
    %51 = vector.extract_strided_slice %34 {offsets = [0, 0], sizes = [4, 384], strides = [1, 1]} : vector<4x512xf32> to vector<4x384xf32>
    %52 = arith.negf %51 : vector<4x384xf32>
    %53 = math.exp %52 : vector<4x384xf32>
    %cst_13 = arith.constant 1.000000e+00 : f32
    %54 = vector.broadcast %cst_13 : f32 to vector<4x384xf32>
    %55 = arith.addf %54, %53 : vector<4x384xf32>
    %56 = arith.divf %54, %55 : vector<4x384xf32>
    %57 = vector.extract_strided_slice %34 {offsets = [0, 384], sizes = [4, 128], strides = [1, 1]} : vector<4x512xf32> to vector<4x128xf32>
    %58 = math.tanh %57 : vector<4x128xf32>
    %59 = vector.extract_strided_slice %56 {offsets = [0, 0], sizes = [4, 128], strides = [1, 1]} : vector<4x384xf32> to vector<4x128xf32>
    %60 = vector.extract_strided_slice %56 {offsets = [0, 128], sizes = [4, 128], strides = [1, 1]} : vector<4x384xf32> to vector<4x128xf32>
    %61 = vector.extract_strided_slice %56 {offsets = [0, 256], sizes = [4, 128], strides = [1, 1]} : vector<4x384xf32> to vector<4x128xf32>
    %62 = arith.mulf %60, %7 : vector<4x128xf32>
    %63 = arith.mulf %59, %58 : vector<4x128xf32>
    %64 = arith.addf %62, %63 : vector<4x128xf32>
    %65 = math.tanh %64 : vector<4x128xf32>
    %66 = arith.mulf %61, %65 : vector<4x128xf32>
    %67 = vector.broadcast %c1_i32 : i32 to vector<4x128xi32>
    %68 = arith.cmpi eq, %6, %67 : vector<4x128xi32>
    %69 = arith.select %68, %66, %7 : vector<4x128xi1>, vector<4x128xf32>
    %c2_i32 = arith.constant 2 : i32
    %70 = tpu.concatenate %50, %66 in 1 : vector<4x128xf32>, vector<4x128xf32> -> vector<4x256xf32>
    %cst_14 = arith.constant dense<0.000000e+00> : vector<4x1024xf32>
    %71 = tpu.matmul %70, %0, %cst_14 {dimension_numbers = #tpu.dot_dimension_numbers<[1], [0], [0], [1], [0, 0, 1, 1], [], []>} : vector<4x256xf32>, vector<256x1024xf32>, vector<4x1024xf32> -> vector<4x1024xf32>
    %72 = vector.extract_strided_slice %71 {offsets = [0, 0], sizes = [4, 512], strides = [1, 1]} : vector<4x1024xf32> to vector<4x512xf32>
    %73 = arith.index_cast %c2_i32 : i32 to index
    %c0_15 = arith.constant 0 : index
    %c0_16 = arith.constant 0 : index
    %74 = vector.load %arg1[%73, %c0_15, %c0_16] : memref<8x4x512xf32, #tpu.memory_space<vmem>>, vector<1x4x512xf32>
    %75 = vector.shape_cast %74 : vector<1x4x512xf32> to vector<4x512xf32>
    %76 = arith.addf %72, %75 : vector<4x512xf32>
    %77 = vector.extract_strided_slice %71 {offsets = [0, 512], sizes = [4, 512], strides = [1, 1]} : vector<4x1024xf32> to vector<4x512xf32>
    %78 = arith.addf %77, %3 : vector<4x512xf32>
    %79 = vector.extract_strided_slice %76 {offsets = [0, 0], sizes = [4, 384], strides = [1, 1]} : vector<4x512xf32> to vector<4x384xf32>
    %80 = arith.negf %79 : vector<4x384xf32>
    %81 = math.exp %80 : vector<4x384xf32>
    %cst_17 = arith.constant 1.000000e+00 : f32
    %82 = vector.broadcast %cst_17 : f32 to vector<4x384xf32>
    %83 = arith.addf %82, %81 : vector<4x384xf32>
    %84 = arith.divf %82, %83 : vector<4x384xf32>
    %85 = vector.extract_strided_slice %76 {offsets = [0, 384], sizes = [4, 128], strides = [1, 1]} : vector<4x512xf32> to vector<4x128xf32>
    %86 = math.tanh %85 : vector<4x128xf32>
    %87 = vector.extract_strided_slice %84 {offsets = [0, 0], sizes = [4, 128], strides = [1, 1]} : vector<4x384xf32> to vector<4x128xf32>
    %88 = vector.extract_strided_slice %84 {offsets = [0, 128], sizes = [4, 128], strides = [1, 1]} : vector<4x384xf32> to vector<4x128xf32>
    %89 = vector.extract_strided_slice %84 {offsets = [0, 256], sizes = [4, 128], strides = [1, 1]} : vector<4x384xf32> to vector<4x128xf32>
    %90 = arith.mulf %88, %48 : vector<4x128xf32>
    %91 = arith.mulf %87, %86 : vector<4x128xf32>
    %92 = arith.addf %90, %91 : vector<4x128xf32>
    %93 = math.tanh %92 : vector<4x128xf32>
    %94 = arith.mulf %89, %93 : vector<4x128xf32>
    %95 = vector.extract_strided_slice %78 {offsets = [0, 0], sizes = [4, 384], strides = [1, 1]} : vector<4x512xf32> to vector<4x384xf32>
    %96 = arith.negf %95 : vector<4x384xf32>
    %97 = math.exp %96 : vector<4x384xf32>
    %cst_18 = arith.constant 1.000000e+00 : f32
    %98 = vector.broadcast %cst_18 : f32 to vector<4x384xf32>
    %99 = arith.addf %98, %97 : vector<4x384xf32>
    %100 = arith.divf %98, %99 : vector<4x384xf32>
    %101 = vector.extract_strided_slice %78 {offsets = [0, 384], sizes = [4, 128], strides = [1, 1]} : vector<4x512xf32> to vector<4x128xf32>
    %102 = math.tanh %101 : vector<4x128xf32>
    %103 = vector.extract_strided_slice %100 {offsets = [0, 0], sizes = [4, 128], strides = [1, 1]} : vector<4x384xf32> to vector<4x128xf32>
    %104 = vector.extract_strided_slice %100 {offsets = [0, 128], sizes = [4, 128], strides = [1, 1]} : vector<4x384xf32> to vector<4x128xf32>
    %105 = vector.extract_strided_slice %100 {offsets = [0, 256], sizes = [4, 128], strides = [1, 1]} : vector<4x384xf32> to vector<4x128xf32>
    %106 = arith.mulf %104, %64 : vector<4x128xf32>
    %107 = arith.mulf %103, %102 : vector<4x128xf32>
    %108 = arith.addf %106, %107 : vector<4x128xf32>
    %109 = math.tanh %108 : vector<4x128xf32>
    %110 = arith.mulf %105, %109 : vector<4x128xf32>
    %111 = vector.broadcast %c2_i32 : i32 to vector<4x128xi32>
    %112 = arith.cmpi eq, %6, %111 : vector<4x128xi32>
    %113 = arith.select %112, %110, %69 : vector<4x128xi1>, vector<4x128xf32>
    %c3_i32 = arith.constant 3 : i32
    %114 = tpu.concatenate %94, %110 in 1 : vector<4x128xf32>, vector<4x128xf32> -> vector<4x256xf32>
    %cst_19 = arith.constant dense<0.000000e+00> : vector<4x1024xf32>
    %115 = tpu.matmul %114, %0, %cst_19 {dimension_numbers = #tpu.dot_dimension_numbers<[1], [0], [0], [1], [0, 0, 1, 1], [], []>} : vector<4x256xf32>, vector<256x1024xf32>, vector<4x1024xf32> -> vector<4x1024xf32>
    %116 = vector.extract_strided_slice %115 {offsets = [0, 0], sizes = [4, 512], strides = [1, 1]} : vector<4x1024xf32> to vector<4x512xf32>
    %117 = arith.index_cast %c3_i32 : i32 to index
    %c0_20 = arith.constant 0 : index
    %c0_21 = arith.constant 0 : index
    %118 = vector.load %arg1[%117, %c0_20, %c0_21] : memref<8x4x512xf32, #tpu.memory_space<vmem>>, vector<1x4x512xf32>
    %119 = vector.shape_cast %118 : vector<1x4x512xf32> to vector<4x512xf32>
    %120 = arith.addf %116, %119 : vector<4x512xf32>
    %121 = vector.extract_strided_slice %115 {offsets = [0, 512], sizes = [4, 512], strides = [1, 1]} : vector<4x1024xf32> to vector<4x512xf32>
    %122 = arith.addf %121, %3 : vector<4x512xf32>
    %123 = vector.extract_strided_slice %120 {offsets = [0, 0], sizes = [4, 384], strides = [1, 1]} : vector<4x512xf32> to vector<4x384xf32>
    %124 = arith.negf %123 : vector<4x384xf32>
    %125 = math.exp %124 : vector<4x384xf32>
    %cst_22 = arith.constant 1.000000e+00 : f32
    %126 = vector.broadcast %cst_22 : f32 to vector<4x384xf32>
    %127 = arith.addf %126, %125 : vector<4x384xf32>
    %128 = arith.divf %126, %127 : vector<4x384xf32>
    %129 = vector.extract_strided_slice %120 {offsets = [0, 384], sizes = [4, 128], strides = [1, 1]} : vector<4x512xf32> to vector<4x128xf32>
    %130 = math.tanh %129 : vector<4x128xf32>
    %131 = vector.extract_strided_slice %128 {offsets = [0, 0], sizes = [4, 128], strides = [1, 1]} : vector<4x384xf32> to vector<4x128xf32>
    %132 = vector.extract_strided_slice %128 {offsets = [0, 128], sizes = [4, 128], strides = [1, 1]} : vector<4x384xf32> to vector<4x128xf32>
    %133 = vector.extract_strided_slice %128 {offsets = [0, 256], sizes = [4, 128], strides = [1, 1]} : vector<4x384xf32> to vector<4x128xf32>
    %134 = arith.mulf %132, %92 : vector<4x128xf32>
    %135 = arith.mulf %131, %130 : vector<4x128xf32>
    %136 = arith.addf %134, %135 : vector<4x128xf32>
    %137 = math.tanh %136 : vector<4x128xf32>
    %138 = arith.mulf %133, %137 : vector<4x128xf32>
    %139 = vector.extract_strided_slice %122 {offsets = [0, 0], sizes = [4, 384], strides = [1, 1]} : vector<4x512xf32> to vector<4x384xf32>
    %140 = arith.negf %139 : vector<4x384xf32>
    %141 = math.exp %140 : vector<4x384xf32>
    %cst_23 = arith.constant 1.000000e+00 : f32
    %142 = vector.broadcast %cst_23 : f32 to vector<4x384xf32>
    %143 = arith.addf %142, %141 : vector<4x384xf32>
    %144 = arith.divf %142, %143 : vector<4x384xf32>
    %145 = vector.extract_strided_slice %122 {offsets = [0, 384], sizes = [4, 128], strides = [1, 1]} : vector<4x512xf32> to vector<4x128xf32>
    %146 = math.tanh %145 : vector<4x128xf32>
    %147 = vector.extract_strided_slice %144 {offsets = [0, 0], sizes = [4, 128], strides = [1, 1]} : vector<4x384xf32> to vector<4x128xf32>
    %148 = vector.extract_strided_slice %144 {offsets = [0, 128], sizes = [4, 128], strides = [1, 1]} : vector<4x384xf32> to vector<4x128xf32>
    %149 = vector.extract_strided_slice %144 {offsets = [0, 256], sizes = [4, 128], strides = [1, 1]} : vector<4x384xf32> to vector<4x128xf32>
    %150 = arith.mulf %148, %108 : vector<4x128xf32>
    %151 = arith.mulf %147, %146 : vector<4x128xf32>
    %152 = arith.addf %150, %151 : vector<4x128xf32>
    %153 = math.tanh %152 : vector<4x128xf32>
    %154 = arith.mulf %149, %153 : vector<4x128xf32>
    %155 = vector.broadcast %c3_i32 : i32 to vector<4x128xi32>
    %156 = arith.cmpi eq, %6, %155 : vector<4x128xi32>
    %157 = arith.select %156, %154, %113 : vector<4x128xi1>, vector<4x128xf32>
    %c4_i32 = arith.constant 4 : i32
    %158 = tpu.concatenate %138, %154 in 1 : vector<4x128xf32>, vector<4x128xf32> -> vector<4x256xf32>
    %cst_24 = arith.constant dense<0.000000e+00> : vector<4x1024xf32>
    %159 = tpu.matmul %158, %0, %cst_24 {dimension_numbers = #tpu.dot_dimension_numbers<[1], [0], [0], [1], [0, 0, 1, 1], [], []>} : vector<4x256xf32>, vector<256x1024xf32>, vector<4x1024xf32> -> vector<4x1024xf32>
    %160 = vector.extract_strided_slice %159 {offsets = [0, 0], sizes = [4, 512], strides = [1, 1]} : vector<4x1024xf32> to vector<4x512xf32>
    %161 = arith.index_cast %c4_i32 : i32 to index
    %c0_25 = arith.constant 0 : index
    %c0_26 = arith.constant 0 : index
    %162 = vector.load %arg1[%161, %c0_25, %c0_26] : memref<8x4x512xf32, #tpu.memory_space<vmem>>, vector<1x4x512xf32>
    %163 = vector.shape_cast %162 : vector<1x4x512xf32> to vector<4x512xf32>
    %164 = arith.addf %160, %163 : vector<4x512xf32>
    %165 = vector.extract_strided_slice %159 {offsets = [0, 512], sizes = [4, 512], strides = [1, 1]} : vector<4x1024xf32> to vector<4x512xf32>
    %166 = arith.addf %165, %3 : vector<4x512xf32>
    %167 = vector.extract_strided_slice %164 {offsets = [0, 0], sizes = [4, 384], strides = [1, 1]} : vector<4x512xf32> to vector<4x384xf32>
    %168 = arith.negf %167 : vector<4x384xf32>
    %169 = math.exp %168 : vector<4x384xf32>
    %cst_27 = arith.constant 1.000000e+00 : f32
    %170 = vector.broadcast %cst_27 : f32 to vector<4x384xf32>
    %171 = arith.addf %170, %169 : vector<4x384xf32>
    %172 = arith.divf %170, %171 : vector<4x384xf32>
    %173 = vector.extract_strided_slice %164 {offsets = [0, 384], sizes = [4, 128], strides = [1, 1]} : vector<4x512xf32> to vector<4x128xf32>
    %174 = math.tanh %173 : vector<4x128xf32>
    %175 = vector.extract_strided_slice %172 {offsets = [0, 0], sizes = [4, 128], strides = [1, 1]} : vector<4x384xf32> to vector<4x128xf32>
    %176 = vector.extract_strided_slice %172 {offsets = [0, 128], sizes = [4, 128], strides = [1, 1]} : vector<4x384xf32> to vector<4x128xf32>
    %177 = vector.extract_strided_slice %172 {offsets = [0, 256], sizes = [4, 128], strides = [1, 1]} : vector<4x384xf32> to vector<4x128xf32>
    %178 = arith.mulf %176, %136 : vector<4x128xf32>
    %179 = arith.mulf %175, %174 : vector<4x128xf32>
    %180 = arith.addf %178, %179 : vector<4x128xf32>
    %181 = math.tanh %180 : vector<4x128xf32>
    %182 = arith.mulf %177, %181 : vector<4x128xf32>
    %183 = vector.extract_strided_slice %166 {offsets = [0, 0], sizes = [4, 384], strides = [1, 1]} : vector<4x512xf32> to vector<4x384xf32>
    %184 = arith.negf %183 : vector<4x384xf32>
    %185 = math.exp %184 : vector<4x384xf32>
    %cst_28 = arith.constant 1.000000e+00 : f32
    %186 = vector.broadcast %cst_28 : f32 to vector<4x384xf32>
    %187 = arith.addf %186, %185 : vector<4x384xf32>
    %188 = arith.divf %186, %187 : vector<4x384xf32>
    %189 = vector.extract_strided_slice %166 {offsets = [0, 384], sizes = [4, 128], strides = [1, 1]} : vector<4x512xf32> to vector<4x128xf32>
    %190 = math.tanh %189 : vector<4x128xf32>
    %191 = vector.extract_strided_slice %188 {offsets = [0, 0], sizes = [4, 128], strides = [1, 1]} : vector<4x384xf32> to vector<4x128xf32>
    %192 = vector.extract_strided_slice %188 {offsets = [0, 128], sizes = [4, 128], strides = [1, 1]} : vector<4x384xf32> to vector<4x128xf32>
    %193 = vector.extract_strided_slice %188 {offsets = [0, 256], sizes = [4, 128], strides = [1, 1]} : vector<4x384xf32> to vector<4x128xf32>
    %194 = arith.mulf %192, %152 : vector<4x128xf32>
    %195 = arith.mulf %191, %190 : vector<4x128xf32>
    %196 = arith.addf %194, %195 : vector<4x128xf32>
    %197 = math.tanh %196 : vector<4x128xf32>
    %198 = arith.mulf %193, %197 : vector<4x128xf32>
    %199 = vector.broadcast %c4_i32 : i32 to vector<4x128xi32>
    %200 = arith.cmpi eq, %6, %199 : vector<4x128xi32>
    %201 = arith.select %200, %198, %157 : vector<4x128xi1>, vector<4x128xf32>
    %c5_i32 = arith.constant 5 : i32
    %202 = tpu.concatenate %182, %198 in 1 : vector<4x128xf32>, vector<4x128xf32> -> vector<4x256xf32>
    %cst_29 = arith.constant dense<0.000000e+00> : vector<4x1024xf32>
    %203 = tpu.matmul %202, %0, %cst_29 {dimension_numbers = #tpu.dot_dimension_numbers<[1], [0], [0], [1], [0, 0, 1, 1], [], []>} : vector<4x256xf32>, vector<256x1024xf32>, vector<4x1024xf32> -> vector<4x1024xf32>
    %204 = vector.extract_strided_slice %203 {offsets = [0, 0], sizes = [4, 512], strides = [1, 1]} : vector<4x1024xf32> to vector<4x512xf32>
    %205 = arith.index_cast %c5_i32 : i32 to index
    %c0_30 = arith.constant 0 : index
    %c0_31 = arith.constant 0 : index
    %206 = vector.load %arg1[%205, %c0_30, %c0_31] : memref<8x4x512xf32, #tpu.memory_space<vmem>>, vector<1x4x512xf32>
    %207 = vector.shape_cast %206 : vector<1x4x512xf32> to vector<4x512xf32>
    %208 = arith.addf %204, %207 : vector<4x512xf32>
    %209 = vector.extract_strided_slice %203 {offsets = [0, 512], sizes = [4, 512], strides = [1, 1]} : vector<4x1024xf32> to vector<4x512xf32>
    %210 = arith.addf %209, %3 : vector<4x512xf32>
    %211 = vector.extract_strided_slice %208 {offsets = [0, 0], sizes = [4, 384], strides = [1, 1]} : vector<4x512xf32> to vector<4x384xf32>
    %212 = arith.negf %211 : vector<4x384xf32>
    %213 = math.exp %212 : vector<4x384xf32>
    %cst_32 = arith.constant 1.000000e+00 : f32
    %214 = vector.broadcast %cst_32 : f32 to vector<4x384xf32>
    %215 = arith.addf %214, %213 : vector<4x384xf32>
    %216 = arith.divf %214, %215 : vector<4x384xf32>
    %217 = vector.extract_strided_slice %208 {offsets = [0, 384], sizes = [4, 128], strides = [1, 1]} : vector<4x512xf32> to vector<4x128xf32>
    %218 = math.tanh %217 : vector<4x128xf32>
    %219 = vector.extract_strided_slice %216 {offsets = [0, 0], sizes = [4, 128], strides = [1, 1]} : vector<4x384xf32> to vector<4x128xf32>
    %220 = vector.extract_strided_slice %216 {offsets = [0, 128], sizes = [4, 128], strides = [1, 1]} : vector<4x384xf32> to vector<4x128xf32>
    %221 = vector.extract_strided_slice %216 {offsets = [0, 256], sizes = [4, 128], strides = [1, 1]} : vector<4x384xf32> to vector<4x128xf32>
    %222 = arith.mulf %220, %180 : vector<4x128xf32>
    %223 = arith.mulf %219, %218 : vector<4x128xf32>
    %224 = arith.addf %222, %223 : vector<4x128xf32>
    %225 = math.tanh %224 : vector<4x128xf32>
    %226 = arith.mulf %221, %225 : vector<4x128xf32>
    %227 = vector.extract_strided_slice %210 {offsets = [0, 0], sizes = [4, 384], strides = [1, 1]} : vector<4x512xf32> to vector<4x384xf32>
    %228 = arith.negf %227 : vector<4x384xf32>
    %229 = math.exp %228 : vector<4x384xf32>
    %cst_33 = arith.constant 1.000000e+00 : f32
    %230 = vector.broadcast %cst_33 : f32 to vector<4x384xf32>
    %231 = arith.addf %230, %229 : vector<4x384xf32>
    %232 = arith.divf %230, %231 : vector<4x384xf32>
    %233 = vector.extract_strided_slice %210 {offsets = [0, 384], sizes = [4, 128], strides = [1, 1]} : vector<4x512xf32> to vector<4x128xf32>
    %234 = math.tanh %233 : vector<4x128xf32>
    %235 = vector.extract_strided_slice %232 {offsets = [0, 0], sizes = [4, 128], strides = [1, 1]} : vector<4x384xf32> to vector<4x128xf32>
    %236 = vector.extract_strided_slice %232 {offsets = [0, 128], sizes = [4, 128], strides = [1, 1]} : vector<4x384xf32> to vector<4x128xf32>
    %237 = vector.extract_strided_slice %232 {offsets = [0, 256], sizes = [4, 128], strides = [1, 1]} : vector<4x384xf32> to vector<4x128xf32>
    %238 = arith.mulf %236, %196 : vector<4x128xf32>
    %239 = arith.mulf %235, %234 : vector<4x128xf32>
    %240 = arith.addf %238, %239 : vector<4x128xf32>
    %241 = math.tanh %240 : vector<4x128xf32>
    %242 = arith.mulf %237, %241 : vector<4x128xf32>
    %243 = vector.broadcast %c5_i32 : i32 to vector<4x128xi32>
    %244 = arith.cmpi eq, %6, %243 : vector<4x128xi32>
    %245 = arith.select %244, %242, %201 : vector<4x128xi1>, vector<4x128xf32>
    %c6_i32 = arith.constant 6 : i32
    %246 = tpu.concatenate %226, %242 in 1 : vector<4x128xf32>, vector<4x128xf32> -> vector<4x256xf32>
    %cst_34 = arith.constant dense<0.000000e+00> : vector<4x1024xf32>
    %247 = tpu.matmul %246, %0, %cst_34 {dimension_numbers = #tpu.dot_dimension_numbers<[1], [0], [0], [1], [0, 0, 1, 1], [], []>} : vector<4x256xf32>, vector<256x1024xf32>, vector<4x1024xf32> -> vector<4x1024xf32>
    %248 = vector.extract_strided_slice %247 {offsets = [0, 0], sizes = [4, 512], strides = [1, 1]} : vector<4x1024xf32> to vector<4x512xf32>
    %249 = arith.index_cast %c6_i32 : i32 to index
    %c0_35 = arith.constant 0 : index
    %c0_36 = arith.constant 0 : index
    %250 = vector.load %arg1[%249, %c0_35, %c0_36] : memref<8x4x512xf32, #tpu.memory_space<vmem>>, vector<1x4x512xf32>
    %251 = vector.shape_cast %250 : vector<1x4x512xf32> to vector<4x512xf32>
    %252 = arith.addf %248, %251 : vector<4x512xf32>
    %253 = vector.extract_strided_slice %247 {offsets = [0, 512], sizes = [4, 512], strides = [1, 1]} : vector<4x1024xf32> to vector<4x512xf32>
    %254 = arith.addf %253, %3 : vector<4x512xf32>
    %255 = vector.extract_strided_slice %252 {offsets = [0, 0], sizes = [4, 384], strides = [1, 1]} : vector<4x512xf32> to vector<4x384xf32>
    %256 = arith.negf %255 : vector<4x384xf32>
    %257 = math.exp %256 : vector<4x384xf32>
    %cst_37 = arith.constant 1.000000e+00 : f32
    %258 = vector.broadcast %cst_37 : f32 to vector<4x384xf32>
    %259 = arith.addf %258, %257 : vector<4x384xf32>
    %260 = arith.divf %258, %259 : vector<4x384xf32>
    %261 = vector.extract_strided_slice %252 {offsets = [0, 384], sizes = [4, 128], strides = [1, 1]} : vector<4x512xf32> to vector<4x128xf32>
    %262 = math.tanh %261 : vector<4x128xf32>
    %263 = vector.extract_strided_slice %260 {offsets = [0, 0], sizes = [4, 128], strides = [1, 1]} : vector<4x384xf32> to vector<4x128xf32>
    %264 = vector.extract_strided_slice %260 {offsets = [0, 128], sizes = [4, 128], strides = [1, 1]} : vector<4x384xf32> to vector<4x128xf32>
    %265 = vector.extract_strided_slice %260 {offsets = [0, 256], sizes = [4, 128], strides = [1, 1]} : vector<4x384xf32> to vector<4x128xf32>
    %266 = arith.mulf %264, %224 : vector<4x128xf32>
    %267 = arith.mulf %263, %262 : vector<4x128xf32>
    %268 = arith.addf %266, %267 : vector<4x128xf32>
    %269 = math.tanh %268 : vector<4x128xf32>
    %270 = arith.mulf %265, %269 : vector<4x128xf32>
    %271 = vector.extract_strided_slice %254 {offsets = [0, 0], sizes = [4, 384], strides = [1, 1]} : vector<4x512xf32> to vector<4x384xf32>
    %272 = arith.negf %271 : vector<4x384xf32>
    %273 = math.exp %272 : vector<4x384xf32>
    %cst_38 = arith.constant 1.000000e+00 : f32
    %274 = vector.broadcast %cst_38 : f32 to vector<4x384xf32>
    %275 = arith.addf %274, %273 : vector<4x384xf32>
    %276 = arith.divf %274, %275 : vector<4x384xf32>
    %277 = vector.extract_strided_slice %254 {offsets = [0, 384], sizes = [4, 128], strides = [1, 1]} : vector<4x512xf32> to vector<4x128xf32>
    %278 = math.tanh %277 : vector<4x128xf32>
    %279 = vector.extract_strided_slice %276 {offsets = [0, 0], sizes = [4, 128], strides = [1, 1]} : vector<4x384xf32> to vector<4x128xf32>
    %280 = vector.extract_strided_slice %276 {offsets = [0, 128], sizes = [4, 128], strides = [1, 1]} : vector<4x384xf32> to vector<4x128xf32>
    %281 = vector.extract_strided_slice %276 {offsets = [0, 256], sizes = [4, 128], strides = [1, 1]} : vector<4x384xf32> to vector<4x128xf32>
    %282 = arith.mulf %280, %240 : vector<4x128xf32>
    %283 = arith.mulf %279, %278 : vector<4x128xf32>
    %284 = arith.addf %282, %283 : vector<4x128xf32>
    %285 = math.tanh %284 : vector<4x128xf32>
    %286 = arith.mulf %281, %285 : vector<4x128xf32>
    %287 = vector.broadcast %c6_i32 : i32 to vector<4x128xi32>
    %288 = arith.cmpi eq, %6, %287 : vector<4x128xi32>
    %289 = arith.select %288, %286, %245 : vector<4x128xi1>, vector<4x128xf32>
    %c7_i32 = arith.constant 7 : i32
    %290 = tpu.concatenate %270, %286 in 1 : vector<4x128xf32>, vector<4x128xf32> -> vector<4x256xf32>
    %cst_39 = arith.constant dense<0.000000e+00> : vector<4x1024xf32>
    %291 = tpu.matmul %290, %0, %cst_39 {dimension_numbers = #tpu.dot_dimension_numbers<[1], [0], [0], [1], [0, 0, 1, 1], [], []>} : vector<4x256xf32>, vector<256x1024xf32>, vector<4x1024xf32> -> vector<4x1024xf32>
    %292 = vector.extract_strided_slice %291 {offsets = [0, 0], sizes = [4, 512], strides = [1, 1]} : vector<4x1024xf32> to vector<4x512xf32>
    %293 = arith.index_cast %c7_i32 : i32 to index
    %c0_40 = arith.constant 0 : index
    %c0_41 = arith.constant 0 : index
    %294 = vector.load %arg1[%293, %c0_40, %c0_41] : memref<8x4x512xf32, #tpu.memory_space<vmem>>, vector<1x4x512xf32>
    %295 = vector.shape_cast %294 : vector<1x4x512xf32> to vector<4x512xf32>
    %296 = arith.addf %292, %295 : vector<4x512xf32>
    %297 = vector.extract_strided_slice %291 {offsets = [0, 512], sizes = [4, 512], strides = [1, 1]} : vector<4x1024xf32> to vector<4x512xf32>
    %298 = arith.addf %297, %3 : vector<4x512xf32>
    %299 = vector.extract_strided_slice %296 {offsets = [0, 0], sizes = [4, 384], strides = [1, 1]} : vector<4x512xf32> to vector<4x384xf32>
    %300 = arith.negf %299 : vector<4x384xf32>
    %301 = math.exp %300 : vector<4x384xf32>
    %cst_42 = arith.constant 1.000000e+00 : f32
    %302 = vector.broadcast %cst_42 : f32 to vector<4x384xf32>
    %303 = arith.addf %302, %301 : vector<4x384xf32>
    %304 = arith.divf %302, %303 : vector<4x384xf32>
    %305 = vector.extract_strided_slice %296 {offsets = [0, 384], sizes = [4, 128], strides = [1, 1]} : vector<4x512xf32> to vector<4x128xf32>
    %306 = math.tanh %305 : vector<4x128xf32>
    %307 = vector.extract_strided_slice %304 {offsets = [0, 0], sizes = [4, 128], strides = [1, 1]} : vector<4x384xf32> to vector<4x128xf32>
    %308 = vector.extract_strided_slice %304 {offsets = [0, 128], sizes = [4, 128], strides = [1, 1]} : vector<4x384xf32> to vector<4x128xf32>
    %309 = vector.extract_strided_slice %304 {offsets = [0, 256], sizes = [4, 128], strides = [1, 1]} : vector<4x384xf32> to vector<4x128xf32>
    %310 = arith.mulf %308, %268 : vector<4x128xf32>
    %311 = arith.mulf %307, %306 : vector<4x128xf32>
    %312 = arith.addf %310, %311 : vector<4x128xf32>
    %313 = math.tanh %312 : vector<4x128xf32>
    %314 = arith.mulf %309, %313 : vector<4x128xf32>
    %315 = vector.extract_strided_slice %298 {offsets = [0, 0], sizes = [4, 384], strides = [1, 1]} : vector<4x512xf32> to vector<4x384xf32>
    %316 = arith.negf %315 : vector<4x384xf32>
    %317 = math.exp %316 : vector<4x384xf32>
    %cst_43 = arith.constant 1.000000e+00 : f32
    %318 = vector.broadcast %cst_43 : f32 to vector<4x384xf32>
    %319 = arith.addf %318, %317 : vector<4x384xf32>
    %320 = arith.divf %318, %319 : vector<4x384xf32>
    %321 = vector.extract_strided_slice %298 {offsets = [0, 384], sizes = [4, 128], strides = [1, 1]} : vector<4x512xf32> to vector<4x128xf32>
    %322 = math.tanh %321 : vector<4x128xf32>
    %323 = vector.extract_strided_slice %320 {offsets = [0, 0], sizes = [4, 128], strides = [1, 1]} : vector<4x384xf32> to vector<4x128xf32>
    %324 = vector.extract_strided_slice %320 {offsets = [0, 128], sizes = [4, 128], strides = [1, 1]} : vector<4x384xf32> to vector<4x128xf32>
    %325 = vector.extract_strided_slice %320 {offsets = [0, 256], sizes = [4, 128], strides = [1, 1]} : vector<4x384xf32> to vector<4x128xf32>
    %326 = arith.mulf %324, %284 : vector<4x128xf32>
    %327 = arith.mulf %323, %322 : vector<4x128xf32>
    %328 = arith.addf %326, %327 : vector<4x128xf32>
    %329 = math.tanh %328 : vector<4x128xf32>
    %330 = arith.mulf %325, %329 : vector<4x128xf32>
    %331 = vector.broadcast %c7_i32 : i32 to vector<4x128xi32>
    %332 = arith.cmpi eq, %6, %331 : vector<4x128xi32>
    %333 = arith.select %332, %330, %289 : vector<4x128xi1>, vector<4x128xf32>
    %c7_i32_44 = arith.constant 7 : i32
    %334 = tpu.concatenate %314, %330 in 1 : vector<4x128xf32>, vector<4x128xf32> -> vector<4x256xf32>
    %cst_45 = arith.constant dense<0.000000e+00> : vector<4x1024xf32>
    %335 = tpu.matmul %334, %0, %cst_45 {dimension_numbers = #tpu.dot_dimension_numbers<[1], [0], [0], [1], [0, 0, 1, 1], [], []>} : vector<4x256xf32>, vector<256x1024xf32>, vector<4x1024xf32> -> vector<4x1024xf32>
    %336 = vector.extract_strided_slice %335 {offsets = [0, 512], sizes = [4, 512], strides = [1, 1]} : vector<4x1024xf32> to vector<4x512xf32>
    %337 = arith.addf %336, %3 : vector<4x512xf32>
    %338 = vector.extract_strided_slice %337 {offsets = [0, 0], sizes = [4, 384], strides = [1, 1]} : vector<4x512xf32> to vector<4x384xf32>
    %339 = arith.negf %338 : vector<4x384xf32>
    %340 = math.exp %339 : vector<4x384xf32>
    %cst_46 = arith.constant 1.000000e+00 : f32
    %341 = vector.broadcast %cst_46 : f32 to vector<4x384xf32>
    %342 = arith.addf %341, %340 : vector<4x384xf32>
    %343 = arith.divf %341, %342 : vector<4x384xf32>
    %344 = vector.extract_strided_slice %337 {offsets = [0, 384], sizes = [4, 128], strides = [1, 1]} : vector<4x512xf32> to vector<4x128xf32>
    %345 = math.tanh %344 : vector<4x128xf32>
    %346 = vector.extract_strided_slice %343 {offsets = [0, 0], sizes = [4, 128], strides = [1, 1]} : vector<4x384xf32> to vector<4x128xf32>
    %347 = vector.extract_strided_slice %343 {offsets = [0, 128], sizes = [4, 128], strides = [1, 1]} : vector<4x384xf32> to vector<4x128xf32>
    %348 = vector.extract_strided_slice %343 {offsets = [0, 256], sizes = [4, 128], strides = [1, 1]} : vector<4x384xf32> to vector<4x128xf32>
    %349 = arith.mulf %347, %328 : vector<4x128xf32>
    %350 = arith.mulf %346, %345 : vector<4x128xf32>
    %351 = arith.addf %349, %350 : vector<4x128xf32>
    %352 = math.tanh %351 : vector<4x128xf32>
    %353 = arith.mulf %348, %352 : vector<4x128xf32>
    %c8_i32 = arith.constant 8 : i32
    %354 = vector.broadcast %c8_i32 : i32 to vector<4x128xi32>
    %355 = arith.cmpi eq, %6, %354 : vector<4x128xi32>
    %356 = arith.select %355, %353, %333 : vector<4x128xi1>, vector<4x128xf32>
    %c0_47 = arith.constant 0 : index
    %c0_48 = arith.constant 0 : index
    %357 = vector.load %arg4[%c0_47, %c0_48] : memref<4x128xf32, #tpu.memory_space<vmem>>, vector<4x128xf32>
    tpu.vector_store %arg4[%c0_47, %c0_48], %356 {strides = array<i32>} : memref<4x128xf32, #tpu.memory_space<vmem>>, vector<4x128xf32>,
    return
  }
}

</mosaic_0001>

<llo_original>
// kernel: dl_model_forward.1
$region0: #{dl_model_forward.1}
  #allocation0 [shape = 'u32[]', space=smem, size = 0x4, offset = 0x4, fixed_abs, tag = 'smem constant byte address 0x4 - core index']
  #allocation1 [shape = 'u32[144,128]{1,0:T(1,128)}', space=vmem, size = 0x12000, scoped, tag = 'internal scratch']
  %s0 = inlined_call_operand.vmem [shape: s32[4,1], index: 0, kind: input, shape index: {}]
  %s1 = inlined_call_operand.vmem [shape: f32[8,4,512], index: 1, kind: input, shape index: {}]
  %s2 = inlined_call_operand.hbm [shape: f32[256,1024], index: 2, kind: input, shape index: {}]
  %s3 = inlined_call_operand.vmem [shape: f32[1,512], index: 3, kind: input, shape index: {}]
  %s4 = inlined_call_operand.vmem [shape: f32[4,128], index: 4, kind: output, shape index: {}]
  %s5 = sld [smem:[#allocation0]]
  $region30: #{dl_model_forward.1} parent=0
    _
  %s7 = ssub.s32 1, %s5
  %s8 = scalar_select 0, %s7, %s5
  $region1: #{dl_model_forward.1} parent=0
    #allocation2 [shape = 'u8[1048576]{0}', space=vmem, size = 0x100000, scoped, tag = 'input window, operand 2, single buffered']
    #allocation3 [shape = 's32[1]{0}', space=sflag, size = 0x4, scoped, tag = 'scoped memory for dl_model_forward.1']
    %9 = vsyncpa [#allocation3], 0
    // Predicated region
    $region2: #{dl_model_forward.1} parent=1 // pred_check
      _
    $region3: #{dl_model_forward.1} parent=1 // pred_check_branch
      %11 = sbr.rel (0) target = $region5
    $region4: #{dl_model_forward.1} parent=1 // pred_region
      _
    $region5: #{dl_model_forward.1} parent=1 // pred_fallthru
      _
    // Predicated region
    $region6: #{dl_model_forward.1} parent=1 // pred_check
      _
    $region7: #{dl_model_forward.1} parent=1 // pred_check_branch
      %13 = sbr.rel (0) target = $region9
    $region8: #{dl_model_forward.1} parent=1 // pred_region
      _
    $region9: #{dl_model_forward.1} parent=1 // pred_fallthru
      _
    // Predicated region
    $region10: #{dl_model_forward.1} parent=1 // pred_check
      _
    $region11: #{dl_model_forward.1} parent=1 // pred_check_branch
      %15 = sbr.rel (0) target = $region13
    $region12: #{dl_model_forward.1} parent=1 // pred_region
      %s17 = ssub.s32 32768, 32768
      %18 = vsyncadd [#allocation3], %s17
      %s19 = sshll.u32 [#allocation2], 4
      %s20 = int_to_ptr.vmem [resolvable:$true] %s19
      %25 = dma.hbm_to_vmem [thread:$0]  %s2, 32768, %s20, [#allocation3], 1024, 1024, 64
    $region13: #{dl_model_forward.1} parent=1 // pred_fallthru
      _
    // Predicated region
    $region14: #{dl_model_forward.1} parent=1 // pred_check
      _
    $region15: #{dl_model_forward.1} parent=1 // pred_check_branch
      %27 = sbr.rel (0) target = $region17
    $region16: #{dl_model_forward.1} parent=1 // pred_region
      _
    $region17: #{dl_model_forward.1} parent=1 // pred_fallthru
      _
    // Predicated region
    $region18: #{dl_model_forward.1} parent=1 // pred_check
      _
    $region19: #{dl_model_forward.1} parent=1 // pred_check_branch
      %29 = sbr.rel (0) target = $region21
    $region20: #{dl_model_forward.1} parent=1 // pred_region
      %30 = dma.done [#allocation3], 32768
    $region21: #{dl_model_forward.1} parent=1 // pred_fallthru
      _
    %v31 = vld [vmem:[#allocation2] sm:$0xff]
    %v32 = vld [vmem:[#allocation2 + $0x8] sm:$0xff]
    %v33 = vld [vmem:[#allocation2 + $0x10] sm:$0xff]
    %v34 = vld [vmem:[#allocation2 + $0x18] sm:$0xff]
    %v35 = vld [vmem:[#allocation2 + $0x20] sm:$0xff]
    %v36 = vld [vmem:[#allocation2 + $0x28] sm:$0xff]
    %v37 = vld [vmem:[#allocation2 + $0x30] sm:$0xff]
    %v38 = vld [vmem:[#allocation2 + $0x38] sm:$0xff]
    %v39 = vld [vmem:[#allocation2 + $0x40] sm:$0xff]
    %v40 = vld [vmem:[#allocation2 + $0x48] sm:$0xff]
    %v41 = vld [vmem:[#allocation2 + $0x50] sm:$0xff]
    %v42 = vld [vmem:[#allocation2 + $0x58] sm:$0xff]
    %v43 = vld [vmem:[#allocation2 + $0x60] sm:$0xff]
    %v44 = vld [vmem:[#allocation2 + $0x68] sm:$0xff]
    %v45 = vld [vmem:[#allocation2 + $0x70] sm:$0xff]
    %v46 = vld [vmem:[#allocation2 + $0x78] sm:$0xff]
    %v47 = vld [vmem:[#allocation2 + $0x80] sm:$0xff]
    %v48 = vld [vmem:[#allocation2 + $0x88] sm:$0xff]
    %v49 = vld [vmem:[#allocation2 + $0x90] sm:$0xff]
    %v50 = vld [vmem:[#allocation2 + $0x98] sm:$0xff]
    %v51 = vld [vmem:[#allocation2 + $0xa0] sm:$0xff]
    %v52 = vld [vmem:[#allocation2 + $0xa8] sm:$0xff]
    %v53 = vld [vmem:[#allocation2 + $0xb0] sm:$0xff]
    %v54 = vld [vmem:[#allocation2 + $0xb8] sm:$0xff]
    %v55 = vld [vmem:[#allocation2 + $0xc0] sm:$0xff]
    %v56 = vld [vmem:[#allocation2 + $0xc8] sm:$0xff]
    %v57 = vld [vmem:[#allocation2 + $0xd0] sm:$0xff]
    %v58 = vld [vmem:[#allocation2 + $0xd8] sm:$0xff]
    %v59 = vld [vmem:[#allocation2 + $0xe0] sm:$0xff]
    %v60 = vld [vmem:[#allocation2 + $0xe8] sm:$0xff]
    %v61 = vld [vmem:[#allocation2 + $0xf0] sm:$0xff]
    %v62 = vld [vmem:[#allocation2 + $0xf8] sm:$0xff]
    %v63 = vld [vmem:[#allocation2 + $0x100] sm:$0xff]
    %v64 = vld [vmem:[#allocation2 + $0x108] sm:$0xff]
    %v65 = vld [vmem:[#allocation2 + $0x110] sm:$0xff]
    %v66 = vld [vmem:[#allocation2 + $0x118] sm:$0xff]
    %v67 = vld [vmem:[#allocation2 + $0x120] sm:$0xff]
    %v68 = vld [vmem:[#allocation2 + $0x128] sm:$0xff]
    %v69 = vld [vmem:[#allocation2 + $0x130] sm:$0xff]
    %v70 = vld [vmem:[#allocation2 + $0x138] sm:$0xff]
    %v71 = vld [vmem:[#allocation2 + $0x140] sm:$0xff]
    %v72 = vld [vmem:[#allocation2 + $0x148] sm:$0xff]
    %v73 = vld [vmem:[#allocation2 + $0x150] sm:$0xff]
    %v74 = vld [vmem:[#allocation2 + $0x158] sm:$0xff]
    %v75 = vld [vmem:[#allocation2 + $0x160] sm:$0xff]
    %v76 = vld [vmem:[#allocation2 + $0x168] sm:$0xff]
    %v77 = vld [vmem:[#allocation2 + $0x170] sm:$0xff]
    %v78 = vld [vmem:[#allocation2 + $0x178] sm:$0xff]
    %v79 = vld [vmem:[#allocation2 + $0x180] sm:$0xff]
    %v80 = vld [vmem:[#allocation2 + $0x188] sm:$0xff]
    %v81 = vld [vmem:[#allocation2 + $0x190] sm:$0xff]
    %v82 = vld [vmem:[#allocation2 + $0x198] sm:$0xff]
    %v83 = vld [vmem:[#allocation2 + $0x1a0] sm:$0xff]
    %v84 = vld [vmem:[#allocation2 + $0x1a8] sm:$0xff]
    %v85 = vld [vmem:[#allocation2 + $0x1b0] sm:$0xff]
    %v86 = vld [vmem:[#allocation2 + $0x1b8] sm:$0xff]
    %v87 = vld [vmem:[#allocation2 + $0x1c0] sm:$0xff]
    %v88 = vld [vmem:[#allocation2 + $0x1c8] sm:$0xff]
    %v89 = vld [vmem:[#allocation2 + $0x1d0] sm:$0xff]
    %v90 = vld [vmem:[#allocation2 + $0x1d8] sm:$0xff]
    %v91 = vld [vmem:[#allocation2 + $0x1e0] sm:$0xff]
    %v92 = vld [vmem:[#allocation2 + $0x1e8] sm:$0xff]
    %v93 = vld [vmem:[#allocation2 + $0x1f0] sm:$0xff]
    %v94 = vld [vmem:[#allocation2 + $0x1f8] sm:$0xff]
    %v95 = vld [vmem:[#allocation2 + $0x200] sm:$0xff]
    %v96 = vld [vmem:[#allocation2 + $0x208] sm:$0xff]
    %v97 = vld [vmem:[#allocation2 + $0x210] sm:$0xff]
    %v98 = vld [vmem:[#allocation2 + $0x218] sm:$0xff]
    %v99 = vld [vmem:[#allocation2 + $0x220] sm:$0xff]
    %v100 = vld [vmem:[#allocation2 + $0x228] sm:$0xff]
    %v101 = vld [vmem:[#allocation2 + $0x230] sm:$0xff]
    %v102 = vld [vmem:[#allocation2 + $0x238] sm:$0xff]
    %v103 = vld [vmem:[#allocation2 + $0x240] sm:$0xff]
    %v104 = vld [vmem:[#allocation2 + $0x248] sm:$0xff]
    %v105 = vld [vmem:[#allocation2 + $0x250] sm:$0xff]
    %v106 = vld [vmem:[#allocation2 + $0x258] sm:$0xff]
    %v107 = vld [vmem:[#allocation2 + $0x260] sm:$0xff]
    %v108 = vld [vmem:[#allocation2 + $0x268] sm:$0xff]
    %v109 = vld [vmem:[#allocation2 + $0x270] sm:$0xff]
    %v110 = vld [vmem:[#allocation2 + $0x278] sm:$0xff]
    %v111 = vld [vmem:[#allocation2 + $0x280] sm:$0xff]
    %v112 = vld [vmem:[#allocation2 + $0x288] sm:$0xff]
    %v113 = vld [vmem:[#allocation2 + $0x290] sm:$0xff]
    %v114 = vld [vmem:[#allocation2 + $0x298] sm:$0xff]
    %v115 = vld [vmem:[#allocation2 + $0x2a0] sm:$0xff]
    %v116 = vld [vmem:[#allocation2 + $0x2a8] sm:$0xff]
    %v117 = vld [vmem:[#allocation2 + $0x2b0] sm:$0xff]
    %v118 = vld [vmem:[#allocation2 + $0x2b8] sm:$0xff]
    %v119 = vld [vmem:[#allocation2 + $0x2c0] sm:$0xff]
    %v120 = vld [vmem:[#allocation2 + $0x2c8] sm:$0xff]
    %v121 = vld [vmem:[#allocation2 + $0x2d0] sm:$0xff]
    %v122 = vld [vmem:[#allocation2 + $0x2d8] sm:$0xff]
    %v123 = vld [vmem:[#allocation2 + $0x2e0] sm:$0xff]
    %v124 = vld [vmem:[#allocation2 + $0x2e8] sm:$0xff]
    %v125 = vld [vmem:[#allocation2 + $0x2f0] sm:$0xff]
    %v126 = vld [vmem:[#allocation2 + $0x2f8] sm:$0xff]
    %v127 = vld [vmem:[#allocation2 + $0x300] sm:$0xff]
    %v128 = vld [vmem:[#allocation2 + $0x308] sm:$0xff]
    %v129 = vld [vmem:[#allocation2 + $0x310] sm:$0xff]
    %v130 = vld [vmem:[#allocation2 + $0x318] sm:$0xff]
    %v131 = vld [vmem:[#allocation2 + $0x320] sm:$0xff]
    %v132 = vld [vmem:[#allocation2 + $0x328] sm:$0xff]
    %v133 = vld [vmem:[#allocation2 + $0x330] sm:$0xff]
    %v134 = vld [vmem:[#allocation2 + $0x338] sm:$0xff]
    %v135 = vld [vmem:[#allocation2 + $0x340] sm:$0xff]
    %v136 = vld [vmem:[#allocation2 + $0x348] sm:$0xff]
    %v137 = vld [vmem:[#allocation2 + $0x350] sm:$0xff]
    %v138 = vld [vmem:[#allocation2 + $0x358] sm:$0xff]
    %v139 = vld [vmem:[#allocation2 + $0x360] sm:$0xff]
    %v140 = vld [vmem:[#allocation2 + $0x368] sm:$0xff]
    %v141 = vld [vmem:[#allocation2 + $0x370] sm:$0xff]
    %v142 = vld [vmem:[#allocation2 + $0x378] sm:$0xff]
    %v143 = vld [vmem:[#allocation2 + $0x380] sm:$0xff]
    %v144 = vld [vmem:[#allocation2 + $0x388] sm:$0xff]
    %v145 = vld [vmem:[#allocation2 + $0x390] sm:$0xff]
    %v146 = vld [vmem:[#allocation2 + $0x398] sm:$0xff]
    %v147 = vld [vmem:[#allocation2 + $0x3a0] sm:$0xff]
    %v148 = vld [vmem:[#allocation2 + $0x3a8] sm:$0xff]
    %v149 = vld [vmem:[#allocation2 + $0x3b0] sm:$0xff]
    %v150 = vld [vmem:[#allocation2 + $0x3b8] sm:$0xff]
    %v151 = vld [vmem:[#allocation2 + $0x3c0] sm:$0xff]
    %v152 = vld [vmem:[#allocation2 + $0x3c8] sm:$0xff]
    %v153 = vld [vmem:[#allocation2 + $0x3d0] sm:$0xff]
    %v154 = vld [vmem:[#allocation2 + $0x3d8] sm:$0xff]
    %v155 = vld [vmem:[#allocation2 + $0x3e0] sm:$0xff]
    %v156 = vld [vmem:[#allocation2 + $0x3e8] sm:$0xff]
    %v157 = vld [vmem:[#allocation2 + $0x3f0] sm:$0xff]
    %v158 = vld [vmem:[#allocation2 + $0x3f8] sm:$0xff]
    %v159 = vld [vmem:[#allocation2 + $0x400] sm:$0xff]
    %v160 = vld [vmem:[#allocation2 + $0x408] sm:$0xff]
    %v161 = vld [vmem:[#allocation2 + $0x410] sm:$0xff]
    %v162 = vld [vmem:[#allocation2 + $0x418] sm:$0xff]
    %v163 = vld [vmem:[#allocation2 + $0x420] sm:$0xff]
    %v164 = vld [vmem:[#allocation2 + $0x428] sm:$0xff]
    %v165 = vld [vmem:[#allocation2 + $0x430] sm:$0xff]
    %v166 = vld [vmem:[#allocation2 + $0x438] sm:$0xff]
    %v167 = vld [vmem:[#allocation2 + $0x440] sm:$0xff]
    %v168 = vld [vmem:[#allocation2 + $0x448] sm:$0xff]
    %v169 = vld [vmem:[#allocation2 + $0x450] sm:$0xff]
    %v170 = vld [vmem:[#allocation2 + $0x458] sm:$0xff]
    %v171 = vld [vmem:[#allocation2 + $0x460] sm:$0xff]
    %v172 = vld [vmem:[#allocation2 + $0x468] sm:$0xff]
    %v173 = vld [vmem:[#allocation2 + $0x470] sm:$0xff]
    %v174 = vld [vmem:[#allocation2 + $0x478] sm:$0xff]
    %v175 = vld [vmem:[#allocation2 + $0x480] sm:$0xff]
    %v176 = vld [vmem:[#allocation2 + $0x488] sm:$0xff]
    %v177 = vld [vmem:[#allocation2 + $0x490] sm:$0xff]
    %v178 = vld [vmem:[#allocation2 + $0x498] sm:$0xff]
    %v179 = vld [vmem:[#allocation2 + $0x4a0] sm:$0xff]
    %v180 = vld [vmem:[#allocation2 + $0x4a8] sm:$0xff]
    %v181 = vld [vmem:[#allocation2 + $0x4b0] sm:$0xff]
    %v182 = vld [vmem:[#allocation2 + $0x4b8] sm:$0xff]
    %v183 = vld [vmem:[#allocation2 + $0x4c0] sm:$0xff]
    %v184 = vld [vmem:[#allocation2 + $0x4c8] sm:$0xff]
    %v185 = vld [vmem:[#allocation2 + $0x4d0] sm:$0xff]
    %v186 = vld [vmem:[#allocation2 + $0x4d8] sm:$0xff]
    %v187 = vld [vmem:[#allocation2 + $0x4e0] sm:$0xff]
    %v188 = vld [vmem:[#allocation2 + $0x4e8] sm:$0xff]
    %v189 = vld [vmem:[#allocation2 + $0x4f0] sm:$0xff]
    %v190 = vld [vmem:[#allocation2 + $0x4f8] sm:$0xff]
    %v191 = vld [vmem:[#allocation2 + $0x500] sm:$0xff]
    %v192 = vld [vmem:[#allocation2 + $0x508] sm:$0xff]
    %v193 = vld [vmem:[#allocation2 + $0x510] sm:$0xff]
    %v194 = vld [vmem:[#allocation2 + $0x518] sm:$0xff]
    %v195 = vld [vmem:[#allocation2 + $0x520] sm:$0xff]
    %v196 = vld [vmem:[#allocation2 + $0x528] sm:$0xff]
    %v197 = vld [vmem:[#allocation2 + $0x530] sm:$0xff]
    %v198 = vld [vmem:[#allocation2 + $0x538] sm:$0xff]
    %v199 = vld [vmem:[#allocation2 + $0x540] sm:$0xff]
    %v200 = vld [vmem:[#allocation2 + $0x548] sm:$0xff]
    %v201 = vld [vmem:[#allocation2 + $0x550] sm:$0xff]
    %v202 = vld [vmem:[#allocation2 + $0x558] sm:$0xff]
    %v203 = vld [vmem:[#allocation2 + $0x560] sm:$0xff]
    %v204 = vld [vmem:[#allocation2 + $0x568] sm:$0xff]
    %v205 = vld [vmem:[#allocation2 + $0x570] sm:$0xff]
    %v206 = vld [vmem:[#allocation2 + $0x578] sm:$0xff]
    %v207 = vld [vmem:[#allocation2 + $0x580] sm:$0xff]
    %v208 = vld [vmem:[#allocation2 + $0x588] sm:$0xff]
    %v209 = vld [vmem:[#allocation2 + $0x590] sm:$0xff]
    %v210 = vld [vmem:[#allocation2 + $0x598] sm:$0xff]
    %v211 = vld [vmem:[#allocation2 + $0x5a0] sm:$0xff]
    %v212 = vld [vmem:[#allocation2 + $0x5a8] sm:$0xff]
    %v213 = vld [vmem:[#allocation2 + $0x5b0] sm:$0xff]
    %v214 = vld [vmem:[#allocation2 + $0x5b8] sm:$0xff]
    %v215 = vld [vmem:[#allocation2 + $0x5c0] sm:$0xff]
    %v216 = vld [vmem:[#allocation2 + $0x5c8] sm:$0xff]
    %v217 = vld [vmem:[#allocation2 + $0x5d0] sm:$0xff]
    %v218 = vld [vmem:[#allocation2 + $0x5d8] sm:$0xff]
    %v219 = vld [vmem:[#allocation2 + $0x5e0] sm:$0xff]
    %v220 = vld [vmem:[#allocation2 + $0x5e8] sm:$0xff]
    %v221 = vld [vmem:[#allocation2 + $0x5f0] sm:$0xff]
    %v222 = vld [vmem:[#allocation2 + $0x5f8] sm:$0xff]
    %v223 = vld [vmem:[#allocation2 + $0x600] sm:$0xff]
    %v224 = vld [vmem:[#allocation2 + $0x608] sm:$0xff]
    %v225 = vld [vmem:[#allocation2 + $0x610] sm:$0xff]
    %v226 = vld [vmem:[#allocation2 + $0x618] sm:$0xff]
    %v227 = vld [vmem:[#allocation2 + $0x620] sm:$0xff]
    %v228 = vld [vmem:[#allocation2 + $0x628] sm:$0xff]
    %v229 = vld [vmem:[#allocation2 + $0x630] sm:$0xff]
    %v230 = vld [vmem:[#allocation2 + $0x638] sm:$0xff]
    %v231 = vld [vmem:[#allocation2 + $0x640] sm:$0xff]
    %v232 = vld [vmem:[#allocation2 + $0x648] sm:$0xff]
    %v233 = vld [vmem:[#allocation2 + $0x650] sm:$0xff]
    %v234 = vld [vmem:[#allocation2 + $0x658] sm:$0xff]
    %v235 = vld [vmem:[#allocation2 + $0x660] sm:$0xff]
    %v236 = vld [vmem:[#allocation2 + $0x668] sm:$0xff]
    %v237 = vld [vmem:[#allocation2 + $0x670] sm:$0xff]
    %v238 = vld [vmem:[#allocation2 + $0x678] sm:$0xff]
    %v239 = vld [vmem:[#allocation2 + $0x680] sm:$0xff]
    %v240 = vld [vmem:[#allocation2 + $0x688] sm:$0xff]
    %v241 = vld [vmem:[#allocation2 + $0x690] sm:$0xff]
    %v242 = vld [vmem:[#allocation2 + $0x698] sm:$0xff]
    %v243 = vld [vmem:[#allocation2 + $0x6a0] sm:$0xff]
    %v244 = vld [vmem:[#allocation2 + $0x6a8] sm:$0xff]
    %v245 = vld [vmem:[#allocation2 + $0x6b0] sm:$0xff]
    %v246 = vld [vmem:[#allocation2 + $0x6b8] sm:$0xff]
    %v247 = vld [vmem:[#allocation2 + $0x6c0] sm:$0xff]
    %v248 = vld [vmem:[#allocation2 + $0x6c8] sm:$0xff]
    %v249 = vld [vmem:[#allocation2 + $0x6d0] sm:$0xff]
    %v250 = vld [vmem:[#allocation2 + $0x6d8] sm:$0xff]
    %v251 = vld [vmem:[#allocation2 + $0x6e0] sm:$0xff]
    %v252 = vld [vmem:[#allocation2 + $0x6e8] sm:$0xff]
    %v253 = vld [vmem:[#allocation2 + $0x6f0] sm:$0xff]
    %v254 = vld [vmem:[#allocation2 + $0x6f8] sm:$0xff]
    %v255 = vld [vmem:[#allocation2 + $0x700] sm:$0xff]
    %v256 = vld [vmem:[#allocation2 + $0x708] sm:$0xff]
    %v257 = vld [vmem:[#allocation2 + $0x710] sm:$0xff]
    %v258 = vld [vmem:[#allocation2 + $0x718] sm:$0xff]
    %v259 = vld [vmem:[#allocation2 + $0x720] sm:$0xff]
    %v260 = vld [vmem:[#allocation2 + $0x728] sm:$0xff]
    %v261 = vld [vmem:[#allocation2 + $0x730] sm:$0xff]
    %v262 = vld [vmem:[#allocation2 + $0x738] sm:$0xff]
    %v263 = vld [vmem:[#allocation2 + $0x740] sm:$0xff]
    %v264 = vld [vmem:[#allocation2 + $0x748] sm:$0xff]
    %v265 = vld [vmem:[#allocation2 + $0x750] sm:$0xff]
    %v266 = vld [vmem:[#allocation2 + $0x758] sm:$0xff]
    %v267 = vld [vmem:[#allocation2 + $0x760] sm:$0xff]
    %v268 = vld [vmem:[#allocation2 + $0x768] sm:$0xff]
    %v269 = vld [vmem:[#allocation2 + $0x770] sm:$0xff]
    %v270 = vld [vmem:[#allocation2 + $0x778] sm:$0xff]
    %v271 = vld [vmem:[#allocation2 + $0x780] sm:$0xff]
    %v272 = vld [vmem:[#allocation2 + $0x788] sm:$0xff]
    %v273 = vld [vmem:[#allocation2 + $0x790] sm:$0xff]
    %v274 = vld [vmem:[#allocation2 + $0x798] sm:$0xff]
    %v275 = vld [vmem:[#allocation2 + $0x7a0] sm:$0xff]
    %v276 = vld [vmem:[#allocation2 + $0x7a8] sm:$0xff]
    %v277 = vld [vmem:[#allocation2 + $0x7b0] sm:$0xff]
    %v278 = vld [vmem:[#allocation2 + $0x7b8] sm:$0xff]
    %v279 = vld [vmem:[#allocation2 + $0x7c0] sm:$0xff]
    %v280 = vld [vmem:[#allocation2 + $0x7c8] sm:$0xff]
    %v281 = vld [vmem:[#allocation2 + $0x7d0] sm:$0xff]
    %v282 = vld [vmem:[#allocation2 + $0x7d8] sm:$0xff]
    %v283 = vld [vmem:[#allocation2 + $0x7e0] sm:$0xff]
    %v284 = vld [vmem:[#allocation2 + $0x7e8] sm:$0xff]
    %v285 = vld [vmem:[#allocation2 + $0x7f0] sm:$0xff]
    %v286 = vld [vmem:[#allocation2 + $0x7f8] sm:$0xff]
    %v287 = vld [vmem:[%s3] sm:$0xf]
    %v289 = vlaneseq
    %v290 = vshrl.u32 %v289, 7
    %v291 = vsub.s32 0, %v290
    %v292 = vrot.slane %v287, %v291
    %v293 = vlaneseq
    %v294 = vshrl.u32 %v293, 7
    %v295 = vsub.s32 1, %v294
    %v296 = vrot.slane %v287, %v295
    %v297 = vlaneseq
    %v298 = vshrl.u32 %v297, 7
    %v299 = vsub.s32 2, %v298
    %v300 = vrot.slane %v287, %v299
    %v301 = vlaneseq
    %v302 = vshrl.u32 %v301, 7
    %v303 = vsub.s32 3, %v302
    %v304 = vrot.slane %v287, %v303
    %v309 = vld [vmem:[%s0] sm:$0xf]
    %310 = vset.pattern.permute.xlu0 0
    %311 = vperm.xlu0 %310, %v309
    %v312 = vpop.permute.xlu0 %311
    %v313 = vld [vmem:[%s1] sm:$0xff]
    %v314 = vld [vmem:[%s1 + $0x8] sm:$0xff]
    %v315 = vxor.u32 %v313, 2147483648
    %v316 = vxor.u32 %v314, 2147483648
    %v317 = vmul.f32 %v315, 1.442695
    %v318 = vpow.pop %v317
    %v319 = vmul.f32 %v316, 1.442695
    %v320 = vpow.pop %v319
    %v321 = vadd.f32 %v318, 1.0
    %v322 = vadd.f32 %v320, 1.0
    %v323 = vrcp.pop %v321
    %v324 = vmul.f32 1.0, %v323
    %v325 = vrcp.pop %v322
    %v326 = vmul.f32 1.0, %v325
    %v328 = vrot.slane %v314, 4
    %v330 = vtanh.pop %v328
    %v332 = vrot.slane %v324, 4
    %v334 = vmul.f32 %v332, 0.0
    %v335 = vmul.f32 %v324, %v330
    %v336 = vadd.f32 %v334, %v335
    %v337 = vtanh.pop %v336
    %v338 = vmul.f32 %v326, %v337
    %339 = vmatprep.subr.mxu0 %v32
    %340 = vmatpush1.msra.mxu0 %v31
    %341 = vmatprep.subr.mxu0 %v40
    %342 = vmatpush1.msra.mxu0 %v39
    %343 = vmatprep.subr.mxu0 %v48
    %344 = vmatpush1.msra.mxu0 %v47
    %345 = vmatprep.subr.mxu0 %v56
    %346 = vmatpush1.msra.mxu0 %v55
    %347 = vmatprep.subr.mxu0 %v64
    %348 = vmatpush1.msra.mxu0 %v63
    %349 = vmatprep.subr.mxu0 %v72
    %350 = vmatpush1.msra.mxu0 %v71
    %351 = vmatprep.subr.mxu0 %v80
    %352 = vmatpush1.msra.mxu0 %v79
    %353 = vmatprep.subr.mxu0 %v88
    %354 = vmatpush1.msra.mxu0 %v87
    %355 = vmatprep.subr.mxu0 %v96
    %356 = vmatpush1.msra.mxu0 %v95
    %357 = vmatprep.subr.mxu0 %v104
    %358 = vmatpush1.msra.mxu0 %v103
    %359 = vmatprep.subr.mxu0 %v112
    %360 = vmatpush1.msra.mxu0 %v111
    %361 = vmatprep.subr.mxu0 %v120
    %362 = vmatpush1.msra.mxu0 %v119
    %363 = vmatprep.subr.mxu0 %v128
    %364 = vmatpush1.msra.mxu0 %v127
    %365 = vmatprep.subr.mxu0 %v136
    %366 = vmatpush1.msra.mxu0 %v135
    %367 = vmatprep.subr.mxu0 %v144
    %368 = vmatpush1.msra.mxu0 %v143
    %369 = vmatprep.subr.mxu0 %v152
    %370 = vmatpush1.msra.mxu0 %v151
    %371 = vmatprep.subr.mxu0 %v160
    %372 = vmatpush1.msra.mxu0 %v159
    %373 = vmatprep.subr.mxu0 %v168
    %374 = vmatpush1.msra.mxu0 %v167
    %375 = vmatprep.subr.mxu0 %v176
    %376 = vmatpush1.msra.mxu0 %v175
    %377 = vmatprep.subr.mxu0 %v184
    %378 = vmatpush1.msra.mxu0 %v183
    %379 = vmatprep.subr.mxu0 %v192
    %380 = vmatpush1.msra.mxu0 %v191
    %381 = vmatprep.subr.mxu0 %v200
    %382 = vmatpush1.msra.mxu0 %v199
    %383 = vmatprep.subr.mxu0 %v208
    %384 = vmatpush1.msra.mxu0 %v207
    %385 = vmatprep.subr.mxu0 %v216
    %386 = vmatpush1.msra.mxu0 %v215
    %387 = vmatprep.subr.mxu0 %v224
    %388 = vmatpush1.msra.mxu0 %v223
    %389 = vmatprep.subr.mxu0 %v232
    %390 = vmatpush1.msra.mxu0 %v231
    %391 = vmatprep.subr.mxu0 %v240
    %392 = vmatpush1.msra.mxu0 %v239
    %393 = vmatprep.subr.mxu0 %v248
    %394 = vmatpush1.msra.mxu0 %v247
    %395 = vmatprep.subr.mxu0 %v256
    %396 = vmatpush1.msra.mxu0 %v255
    %397 = vmatprep.subr.mxu0 %v264
    %398 = vmatpush1.msra.mxu0 %v263
    %399 = vmatprep.subr.mxu0 %v272
    %400 = vmatpush1.msra.mxu0 %v271
    %401 = vmatprep.subr.mxu0 %v280
    %402 = vmatpush1.msra.mxu0 %v279
    %403 = vmatprep.mubr.f32.mxu0 0.0
    %404 = vmatmul.mubr.f32.gmra.mrb[0].mxu0 %v338
    %v405 = vpop.f32.mrb[0].mxu0
    %v406 = vadd.f32 0.0, %v405
    %v407 = vpop.f32.mrb[0].mxu0
    %v408 = vadd.f32 0.0, %v407
    %409 = vdwg.mxu0
    %410 = vmatprep.subr.mxu0 %v34
    %411 = vmatpush1.msra.mxu0 %v33
    %412 = vmatprep.subr.mxu0 %v42
    %413 = vmatpush1.msra.mxu0 %v41
    %414 = vmatprep.subr.mxu0 %v50
    %415 = vmatpush1.msra.mxu0 %v49
    %416 = vmatprep.subr.mxu0 %v58
    %417 = vmatpush1.msra.mxu0 %v57
    %418 = vmatprep.subr.mxu0 %v66
    %419 = vmatpush1.msra.mxu0 %v65
    %420 = vmatprep.subr.mxu0 %v74
    %421 = vmatpush1.msra.mxu0 %v73
    %422 = vmatprep.subr.mxu0 %v82
    %423 = vmatpush1.msra.mxu0 %v81
    %424 = vmatprep.subr.mxu0 %v90
    %425 = vmatpush1.msra.mxu0 %v89
    %426 = vmatprep.subr.mxu0 %v98
    %427 = vmatpush1.msra.mxu0 %v97
    %428 = vmatprep.subr.mxu0 %v106
    %429 = vmatpush1.msra.mxu0 %v105
    %430 = vmatprep.subr.mxu0 %v114
    %431 = vmatpush1.msra.mxu0 %v113
    %432 = vmatprep.subr.mxu0 %v122
    %433 = vmatpush1.msra.mxu0 %v121
    %434 = vmatprep.subr.mxu0 %v130
    %435 = vmatpush1.msra.mxu0 %v129
    %436 = vmatprep.subr.mxu0 %v138
    %437 = vmatpush1.msra.mxu0 %v137
    %438 = vmatprep.subr.mxu0 %v146
    %439 = vmatpush1.msra.mxu0 %v145
    %440 = vmatprep.subr.mxu0 %v154
    %441 = vmatpush1.msra.mxu0 %v153
    %442 = vmatprep.subr.mxu0 %v162
    %443 = vmatpush1.msra.mxu0 %v161
    %444 = vmatprep.subr.mxu0 %v170
    %445 = vmatpush1.msra.mxu0 %v169
    %446 = vmatprep.subr.mxu0 %v178
    %447 = vmatpush1.msra.mxu0 %v177
    %448 = vmatprep.subr.mxu0 %v186
    %449 = vmatpush1.msra.mxu0 %v185
    %450 = vmatprep.subr.mxu0 %v194
    %451 = vmatpush1.msra.mxu0 %v193
    %452 = vmatprep.subr.mxu0 %v202
    %453 = vmatpush1.msra.mxu0 %v201
    %454 = vmatprep.subr.mxu0 %v210
    %455 = vmatpush1.msra.mxu0 %v209
    %456 = vmatprep.subr.mxu0 %v218
    %457 = vmatpush1.msra.mxu0 %v217
    %458 = vmatprep.subr.mxu0 %v226
    %459 = vmatpush1.msra.mxu0 %v225
    %460 = vmatprep.subr.mxu0 %v234
    %461 = vmatpush1.msra.mxu0 %v233
    %462 = vmatprep.subr.mxu0 %v242
    %463 = vmatpush1.msra.mxu0 %v241
    %464 = vmatprep.subr.mxu0 %v250
    %465 = vmatpush1.msra.mxu0 %v249
    %466 = vmatprep.subr.mxu0 %v258
    %467 = vmatpush1.msra.mxu0 %v257
    %468 = vmatprep.subr.mxu0 %v266
    %469 = vmatpush1.msra.mxu0 %v265
    %470 = vmatprep.subr.mxu0 %v274
    %471 = vmatpush1.msra.mxu0 %v273
    %472 = vmatprep.subr.mxu0 %v282
    %473 = vmatpush1.msra.mxu0 %v281
    %474 = vmatprep.mubr.f32.mxu0 0.0
    %475 = vmatmul.mubr.f32.gmra.mrb[0].mxu0 %v338
    %v476 = vpop.f32.mrb[0].mxu0
    %v477 = vadd.f32 0.0, %v476
    %v478 = vpop.f32.mrb[0].mxu0
    %v479 = vadd.f32 0.0, %v478
    %480 = vdwg.mxu0
    %481 = vmatprep.subr.mxu0 %v36
    %482 = vmatpush1.msra.mxu0 %v35
    %483 = vmatprep.subr.mxu0 %v44
    %484 = vmatpush1.msra.mxu0 %v43
    %485 = vmatprep.subr.mxu0 %v52
    %486 = vmatpush1.msra.mxu0 %v51
    %487 = vmatprep.subr.mxu0 %v60
    %488 = vmatpush1.msra.mxu0 %v59
    %489 = vmatprep.subr.mxu0 %v68
    %490 = vmatpush1.msra.mxu0 %v67
    %491 = vmatprep.subr.mxu0 %v76
    %492 = vmatpush1.msra.mxu0 %v75
    %493 = vmatprep.subr.mxu0 %v84
    %494 = vmatpush1.msra.mxu0 %v83
    %495 = vmatprep.subr.mxu0 %v92
    %496 = vmatpush1.msra.mxu0 %v91
    %497 = vmatprep.subr.mxu0 %v100
    %498 = vmatpush1.msra.mxu0 %v99
    %499 = vmatprep.subr.mxu0 %v108
    %500 = vmatpush1.msra.mxu0 %v107
    %501 = vmatprep.subr.mxu0 %v116
    %502 = vmatpush1.msra.mxu0 %v115
    %503 = vmatprep.subr.mxu0 %v124
    %504 = vmatpush1.msra.mxu0 %v123
    %505 = vmatprep.subr.mxu0 %v132
    %506 = vmatpush1.msra.mxu0 %v131
    %507 = vmatprep.subr.mxu0 %v140
    %508 = vmatpush1.msra.mxu0 %v139
    %509 = vmatprep.subr.mxu0 %v148
    %510 = vmatpush1.msra.mxu0 %v147
    %511 = vmatprep.subr.mxu0 %v156
    %512 = vmatpush1.msra.mxu0 %v155
    %513 = vmatprep.subr.mxu0 %v164
    %514 = vmatpush1.msra.mxu0 %v163
    %515 = vmatprep.subr.mxu0 %v172
    %516 = vmatpush1.msra.mxu0 %v171
    %517 = vmatprep.subr.mxu0 %v180
    %518 = vmatpush1.msra.mxu0 %v179
    %519 = vmatprep.subr.mxu0 %v188
    %520 = vmatpush1.msra.mxu0 %v187
    %521 = vmatprep.subr.mxu0 %v196
    %522 = vmatpush1.msra.mxu0 %v195
    %523 = vmatprep.subr.mxu0 %v204
    %524 = vmatpush1.msra.mxu0 %v203
    %525 = vmatprep.subr.mxu0 %v212
    %526 = vmatpush1.msra.mxu0 %v211
    %527 = vmatprep.subr.mxu0 %v220
    %528 = vmatpush1.msra.mxu0 %v219
    %529 = vmatprep.subr.mxu0 %v228
    %530 = vmatpush1.msra.mxu0 %v227
    %531 = vmatprep.subr.mxu0 %v236
    %532 = vmatpush1.msra.mxu0 %v235
    %533 = vmatprep.subr.mxu0 %v244
    %534 = vmatpush1.msra.mxu0 %v243
    %535 = vmatprep.subr.mxu0 %v252
    %536 = vmatpush1.msra.mxu0 %v251
    %537 = vmatprep.subr.mxu0 %v260
    %538 = vmatpush1.msra.mxu0 %v259
    %539 = vmatprep.subr.mxu0 %v268
    %540 = vmatpush1.msra.mxu0 %v267
    %541 = vmatprep.subr.mxu0 %v276
    %542 = vmatpush1.msra.mxu0 %v275
    %543 = vmatprep.subr.mxu0 %v284
    %544 = vmatpush1.msra.mxu0 %v283
    %545 = vmatprep.mubr.f32.mxu0 0.0
    %546 = vmatmul.mubr.f32.gmra.mrb[0].mxu0 %v338
    %v547 = vpop.f32.mrb[0].mxu0
    %v548 = vadd.f32 0.0, %v547
    %v549 = vpop.f32.mrb[0].mxu0
    %v550 = vadd.f32 0.0, %v549
    %551 = vdwg.mxu0
    %552 = vmatprep.subr.mxu0 %v38
    %553 = vmatpush1.msra.mxu0 %v37
    %554 = vmatprep.subr.mxu0 %v46
    %555 = vmatpush1.msra.mxu0 %v45
    %556 = vmatprep.subr.mxu0 %v54
    %557 = vmatpush1.msra.mxu0 %v53
    %558 = vmatprep.subr.mxu0 %v62
    %559 = vmatpush1.msra.mxu0 %v61
    %560 = vmatprep.subr.mxu0 %v70
    %561 = vmatpush1.msra.mxu0 %v69
    %562 = vmatprep.subr.mxu0 %v78
    %563 = vmatpush1.msra.mxu0 %v77
    %564 = vmatprep.subr.mxu0 %v86
    %565 = vmatpush1.msra.mxu0 %v85
    %566 = vmatprep.subr.mxu0 %v94
    %567 = vmatpush1.msra.mxu0 %v93
    %568 = vmatprep.subr.mxu0 %v102
    %569 = vmatpush1.msra.mxu0 %v101
    %570 = vmatprep.subr.mxu0 %v110
    %571 = vmatpush1.msra.mxu0 %v109
    %572 = vmatprep.subr.mxu0 %v118
    %573 = vmatpush1.msra.mxu0 %v117
    %574 = vmatprep.subr.mxu0 %v126
    %575 = vmatpush1.msra.mxu0 %v125
    %576 = vmatprep.subr.mxu0 %v134
    %577 = vmatpush1.msra.mxu0 %v133
    %578 = vmatprep.subr.mxu0 %v142
    %579 = vmatpush1.msra.mxu0 %v141
    %580 = vmatprep.subr.mxu0 %v150
    %581 = vmatpush1.msra.mxu0 %v149
    %582 = vmatprep.subr.mxu0 %v158
    %583 = vmatpush1.msra.mxu0 %v157
    %584 = vmatprep.subr.mxu0 %v166
    %585 = vmatpush1.msra.mxu0 %v165
    %586 = vmatprep.subr.mxu0 %v174
    %587 = vmatpush1.msra.mxu0 %v173
    %588 = vmatprep.subr.mxu0 %v182
    %589 = vmatpush1.msra.mxu0 %v181
    %590 = vmatprep.subr.mxu0 %v190
    %591 = vmatpush1.msra.mxu0 %v189
    %592 = vmatprep.subr.mxu0 %v198
    %593 = vmatpush1.msra.mxu0 %v197
    %594 = vmatprep.subr.mxu0 %v206
    %595 = vmatpush1.msra.mxu0 %v205
    %596 = vmatprep.subr.mxu0 %v214
    %597 = vmatpush1.msra.mxu0 %v213
    %598 = vmatprep.subr.mxu0 %v222
    %599 = vmatpush1.msra.mxu0 %v221
    %600 = vmatprep.subr.mxu0 %v230
    %601 = vmatpush1.msra.mxu0 %v229
    %602 = vmatprep.subr.mxu0 %v238
    %603 = vmatpush1.msra.mxu0 %v237
    %604 = vmatprep.subr.mxu0 %v246
    %605 = vmatpush1.msra.mxu0 %v245
    %606 = vmatprep.subr.mxu0 %v254
    %607 = vmatpush1.msra.mxu0 %v253
    %608 = vmatprep.subr.mxu0 %v262
    %609 = vmatpush1.msra.mxu0 %v261
    %610 = vmatprep.subr.mxu0 %v270
    %611 = vmatpush1.msra.mxu0 %v269
    %612 = vmatprep.subr.mxu0 %v278
    %613 = vmatpush1.msra.mxu0 %v277
    %614 = vmatprep.subr.mxu0 %v286
    %615 = vmatpush1.msra.mxu0 %v285
    %616 = vmatprep.mubr.f32.mxu0 0.0
    %617 = vmatmul.mubr.f32.gmra.mrb[0].mxu0 %v338
    %v618 = vpop.f32.mrb[0].mxu0
    %v619 = vadd.f32 0.0, %v618
    %v620 = vpop.f32.mrb[0].mxu0
    %v621 = vadd.f32 0.0, %v620
    %622 = vdwg.mxu0
    %s623 = scalar_lea.vmem %s1, 16
    %v624 = vld [vmem:[%s623] sm:$0xff]
    %v625 = vld [vmem:[%s623 + $0x8] sm:$0xff]
    %v628 = vcombine.high %v624, %v624
    %v629 = vcombine.high %v625, %v625
    %v632 = vadd.f32 %v406, %v624
    %v633 = vadd.f32 %v408, %v628
    %v634 = vadd.f32 %v477, %v625
    %v635 = vadd.f32 %v479, %v629
    %v636 = vadd.f32 %v548, %v292
    %v637 = vadd.f32 %v550, %v296
    %v638 = vadd.f32 %v619, %v300
    %v639 = vadd.f32 %v621, %v304
    %v640 = vxor.u32 %v632, 2147483648
    %v641 = vxor.u32 %v633, 2147483648
    %v642 = vxor.u32 %v634, 2147483648
    %v643 = vmul.f32 %v640, 1.442695
    %v644 = vpow.pop %v643
    %v645 = vmul.f32 %v641, 1.442695
    %v646 = vpow.pop %v645
    %v647 = vmul.f32 %v642, 1.442695
    %v648 = vpow.pop %v647
    %v649 = vadd.f32 %v644, 1.0
    %v650 = vadd.f32 %v646, 1.0
    %v651 = vadd.f32 %v648, 1.0
    %v652 = vrcp.pop %v649
    %v653 = vmul.f32 1.0, %v652
    %v654 = vrcp.pop %v650
    %v655 = vmul.f32 1.0, %v654
    %v656 = vrcp.pop %v651
    %v657 = vmul.f32 1.0, %v656
    %v658 = vtanh.pop %v635
    %v659 = vmul.f32 %v655, %v336
    %v660 = vmul.f32 %v653, %v658
    %v661 = vadd.f32 %v659, %v660
    %v662 = vtanh.pop %v661
    %v663 = vmul.f32 %v657, %v662
    %v664 = vxor.u32 %v636, 2147483648
    %v665 = vxor.u32 %v637, 2147483648
    %v666 = vxor.u32 %v638, 2147483648
    %v667 = vmul.f32 %v664, 1.442695
    %v668 = vpow.pop %v667
    %v669 = vmul.f32 %v665, 1.442695
    %v670 = vpow.pop %v669
    %v671 = vmul.f32 %v666, 1.442695
    %v672 = vpow.pop %v671
    %v673 = vadd.f32 %v668, 1.0
    %v674 = vadd.f32 %v670, 1.0
    %v675 = vadd.f32 %v672, 1.0
    %v676 = vrcp.pop %v673
    %v677 = vmul.f32 1.0, %v676
    %v678 = vrcp.pop %v674
    %v679 = vmul.f32 1.0, %v678
    %v680 = vrcp.pop %v675
    %v681 = vmul.f32 1.0, %v680
    %v682 = vtanh.pop %v639
    %v683 = vmul.f32 %v679, 0.0
    %v684 = vmul.f32 %v677, %v682
    %v685 = vadd.f32 %v683, %v684
    %v686 = vtanh.pop %v685
    %v687 = vmul.f32 %v681, %v686
    %vm688 = vcmp.eq.s32.totalorder %v312, 1
    %v689 = vsel %vm688, %v687, 0.0
    %690 = vmatprep.subr.mxu0 %v32
    %691 = vmatpush1.msra.mxu0 %v31
    %692 = vmatprep.subr.mxu0 %v40
    %693 = vmatpush1.msra.mxu0 %v39
    %694 = vmatprep.subr.mxu0 %v48
    %695 = vmatpush1.msra.mxu0 %v47
    %696 = vmatprep.subr.mxu0 %v56
    %697 = vmatpush1.msra.mxu0 %v55
    %698 = vmatprep.subr.mxu0 %v64
    %699 = vmatpush1.msra.mxu0 %v63
    %700 = vmatprep.subr.mxu0 %v72
    %701 = vmatpush1.msra.mxu0 %v71
    %702 = vmatprep.subr.mxu0 %v80
    %703 = vmatpush1.msra.mxu0 %v79
    %704 = vmatprep.subr.mxu0 %v88
    %705 = vmatpush1.msra.mxu0 %v87
    %706 = vmatprep.subr.mxu0 %v96
    %707 = vmatpush1.msra.mxu0 %v95
    %708 = vmatprep.subr.mxu0 %v104
    %709 = vmatpush1.msra.mxu0 %v103
    %710 = vmatprep.subr.mxu0 %v112
    %711 = vmatpush1.msra.mxu0 %v111
    %712 = vmatprep.subr.mxu0 %v120
    %713 = vmatpush1.msra.mxu0 %v119
    %714 = vmatprep.subr.mxu0 %v128
    %715 = vmatpush1.msra.mxu0 %v127
    %716 = vmatprep.subr.mxu0 %v136
    %717 = vmatpush1.msra.mxu0 %v135
    %718 = vmatprep.subr.mxu0 %v144
    %719 = vmatpush1.msra.mxu0 %v143
    %720 = vmatprep.subr.mxu0 %v152
    %721 = vmatpush1.msra.mxu0 %v151
    %722 = vmatprep.subr.mxu0 %v160
    %723 = vmatpush1.msra.mxu0 %v159
    %724 = vmatprep.subr.mxu0 %v168
    %725 = vmatpush1.msra.mxu0 %v167
    %726 = vmatprep.subr.mxu0 %v176
    %727 = vmatpush1.msra.mxu0 %v175
    %728 = vmatprep.subr.mxu0 %v184
    %729 = vmatpush1.msra.mxu0 %v183
    %730 = vmatprep.subr.mxu0 %v192
    %731 = vmatpush1.msra.mxu0 %v191
    %732 = vmatprep.subr.mxu0 %v200
    %733 = vmatpush1.msra.mxu0 %v199
    %734 = vmatprep.subr.mxu0 %v208
    %735 = vmatpush1.msra.mxu0 %v207
    %736 = vmatprep.subr.mxu0 %v216
    %737 = vmatpush1.msra.mxu0 %v215
    %738 = vmatprep.subr.mxu0 %v224
    %739 = vmatpush1.msra.mxu0 %v223
    %740 = vmatprep.subr.mxu0 %v232
    %741 = vmatpush1.msra.mxu0 %v231
    %742 = vmatprep.subr.mxu0 %v240
    %743 = vmatpush1.msra.mxu0 %v239
    %744 = vmatprep.subr.mxu0 %v248
    %745 = vmatpush1.msra.mxu0 %v247
    %746 = vmatprep.subr.mxu0 %v256
    %747 = vmatpush1.msra.mxu0 %v255
    %748 = vmatprep.subr.mxu0 %v264
    %749 = vmatpush1.msra.mxu0 %v263
    %750 = vmatprep.subr.mxu0 %v272
    %751 = vmatpush1.msra.mxu0 %v271
    %752 = vmatprep.subr.mxu0 %v280
    %753 = vmatpush1.msra.mxu0 %v279
    %754 = vmatprep.mubr.f32.mxu0 %v687
    %755 = vmatmul.mubr.f32.gmra.mrb[0].mxu0 %v663
    %v756 = vpop.f32.mrb[0].mxu0
    %v757 = vadd.f32 0.0, %v756
    %v758 = vpop.f32.mrb[0].mxu0
    %v759 = vadd.f32 0.0, %v758
    %760 = vdwg.mxu0
    %761 = vmatprep.subr.mxu0 %v34
    %762 = vmatpush1.msra.mxu0 %v33
    %763 = vmatprep.subr.mxu0 %v42
    %764 = vmatpush1.msra.mxu0 %v41
    %765 = vmatprep.subr.mxu0 %v50
    %766 = vmatpush1.msra.mxu0 %v49
    %767 = vmatprep.subr.mxu0 %v58
    %768 = vmatpush1.msra.mxu0 %v57
    %769 = vmatprep.subr.mxu0 %v66
    %770 = vmatpush1.msra.mxu0 %v65
    %771 = vmatprep.subr.mxu0 %v74
    %772 = vmatpush1.msra.mxu0 %v73
    %773 = vmatprep.subr.mxu0 %v82
    %774 = vmatpush1.msra.mxu0 %v81
    %775 = vmatprep.subr.mxu0 %v90
    %776 = vmatpush1.msra.mxu0 %v89
    %777 = vmatprep.subr.mxu0 %v98
    %778 = vmatpush1.msra.mxu0 %v97
    %779 = vmatprep.subr.mxu0 %v106
    %780 = vmatpush1.msra.mxu0 %v105
    %781 = vmatprep.subr.mxu0 %v114
    %782 = vmatpush1.msra.mxu0 %v113
    %783 = vmatprep.subr.mxu0 %v122
    %784 = vmatpush1.msra.mxu0 %v121
    %785 = vmatprep.subr.mxu0 %v130
    %786 = vmatpush1.msra.mxu0 %v129
    %787 = vmatprep.subr.mxu0 %v138
    %788 = vmatpush1.msra.mxu0 %v137
    %789 = vmatprep.subr.mxu0 %v146
    %790 = vmatpush1.msra.mxu0 %v145
    %791 = vmatprep.subr.mxu0 %v154
    %792 = vmatpush1.msra.mxu0 %v153
    %793 = vmatprep.subr.mxu0 %v162
    %794 = vmatpush1.msra.mxu0 %v161
    %795 = vmatprep.subr.mxu0 %v170
    %796 = vmatpush1.msra.mxu0 %v169
    %797 = vmatprep.subr.mxu0 %v178
    %798 = vmatpush1.msra.mxu0 %v177
    %799 = vmatprep.subr.mxu0 %v186
    %800 = vmatpush1.msra.mxu0 %v185
    %801 = vmatprep.subr.mxu0 %v194
    %802 = vmatpush1.msra.mxu0 %v193
    %803 = vmatprep.subr.mxu0 %v202
    %804 = vmatpush1.msra.mxu0 %v201
    %805 = vmatprep.subr.mxu0 %v210
    %806 = vmatpush1.msra.mxu0 %v209
    %807 = vmatprep.subr.mxu0 %v218
    %808 = vmatpush1.msra.mxu0 %v217
    %809 = vmatprep.subr.mxu0 %v226
    %810 = vmatpush1.msra.mxu0 %v225
    %811 = vmatprep.subr.mxu0 %v234
    %812 = vmatpush1.msra.mxu0 %v233
    %813 = vmatprep.subr.mxu0 %v242
    %814 = vmatpush1.msra.mxu0 %v241
    %815 = vmatprep.subr.mxu0 %v250
    %816 = vmatpush1.msra.mxu0 %v249
    %817 = vmatprep.subr.mxu0 %v258
    %818 = vmatpush1.msra.mxu0 %v257
    %819 = vmatprep.subr.mxu0 %v266
    %820 = vmatpush1.msra.mxu0 %v265
    %821 = vmatprep.subr.mxu0 %v274
    %822 = vmatpush1.msra.mxu0 %v273
    %823 = vmatprep.subr.mxu0 %v282
    %824 = vmatpush1.msra.mxu0 %v281
    %825 = vmatprep.mubr.f32.mxu0 %v687
    %826 = vmatmul.mubr.f32.gmra.mrb[0].mxu0 %v663
    %v827 = vpop.f32.mrb[0].mxu0
    %v828 = vadd.f32 0.0, %v827
    %v829 = vpop.f32.mrb[0].mxu0
    %v830 = vadd.f32 0.0, %v829
    %831 = vdwg.mxu0
    %832 = vmatprep.subr.mxu0 %v36
    %833 = vmatpush1.msra.mxu0 %v35
    %834 = vmatprep.subr.mxu0 %v44
    %835 = vmatpush1.msra.mxu0 %v43
    %836 = vmatprep.subr.mxu0 %v52
    %837 = vmatpush1.msra.mxu0 %v51
    %838 = vmatprep.subr.mxu0 %v60
    %839 = vmatpush1.msra.mxu0 %v59
    %840 = vmatprep.subr.mxu0 %v68
    %841 = vmatpush1.msra.mxu0 %v67
    %842 = vmatprep.subr.mxu0 %v76
    %843 = vmatpush1.msra.mxu0 %v75
    %844 = vmatprep.subr.mxu0 %v84
    %845 = vmatpush1.msra.mxu0 %v83
    %846 = vmatprep.subr.mxu0 %v92
    %847 = vmatpush1.msra.mxu0 %v91
    %848 = vmatprep.subr.mxu0 %v100
    %849 = vmatpush1.msra.mxu0 %v99
    %850 = vmatprep.subr.mxu0 %v108
    %851 = vmatpush1.msra.mxu0 %v107
    %852 = vmatprep.subr.mxu0 %v116
    %853 = vmatpush1.msra.mxu0 %v115
    %854 = vmatprep.subr.mxu0 %v124
    %855 = vmatpush1.msra.mxu0 %v123
    %856 = vmatprep.subr.mxu0 %v132
    %857 = vmatpush1.msra.mxu0 %v131
    %858 = vmatprep.subr.mxu0 %v140
    %859 = vmatpush1.msra.mxu0 %v139
    %860 = vmatprep.subr.mxu0 %v148
    %861 = vmatpush1.msra.mxu0 %v147
    %862 = vmatprep.subr.mxu0 %v156
    %863 = vmatpush1.msra.mxu0 %v155
    %864 = vmatprep.subr.mxu0 %v164
    %865 = vmatpush1.msra.mxu0 %v163
    %866 = vmatprep.subr.mxu0 %v172
    %867 = vmatpush1.msra.mxu0 %v171
    %868 = vmatprep.subr.mxu0 %v180
    %869 = vmatpush1.msra.mxu0 %v179
    %870 = vmatprep.subr.mxu0 %v188
    %871 = vmatpush1.msra.mxu0 %v187
    %872 = vmatprep.subr.mxu0 %v196
    %873 = vmatpush1.msra.mxu0 %v195
    %874 = vmatprep.subr.mxu0 %v204
    %875 = vmatpush1.msra.mxu0 %v203
    %876 = vmatprep.subr.mxu0 %v212
    %877 = vmatpush1.msra.mxu0 %v211
    %878 = vmatprep.subr.mxu0 %v220
    %879 = vmatpush1.msra.mxu0 %v219
    %880 = vmatprep.subr.mxu0 %v228
    %881 = vmatpush1.msra.mxu0 %v227
    %882 = vmatprep.subr.mxu0 %v236
    %883 = vmatpush1.msra.mxu0 %v235
    %884 = vmatprep.subr.mxu0 %v244
    %885 = vmatpush1.msra.mxu0 %v243
    %886 = vmatprep.subr.mxu0 %v252
    %887 = vmatpush1.msra.mxu0 %v251
    %888 = vmatprep.subr.mxu0 %v260
    %889 = vmatpush1.msra.mxu0 %v259
    %890 = vmatprep.subr.mxu0 %v268
    %891 = vmatpush1.msra.mxu0 %v267
    %892 = vmatprep.subr.mxu0 %v276
    %893 = vmatpush1.msra.mxu0 %v275
    %894 = vmatprep.subr.mxu0 %v284
    %895 = vmatpush1.msra.mxu0 %v283
    %896 = vmatprep.mubr.f32.mxu0 %v687
    %897 = vmatmul.mubr.f32.gmra.mrb[0].mxu0 %v663
    %v898 = vpop.f32.mrb[0].mxu0
    %v899 = vadd.f32 0.0, %v898
    %v900 = vpop.f32.mrb[0].mxu0
    %v901 = vadd.f32 0.0, %v900
    %902 = vdwg.mxu0
    %903 = vmatprep.subr.mxu0 %v38
    %904 = vmatpush1.msra.mxu0 %v37
    %905 = vmatprep.subr.mxu0 %v46
    %906 = vmatpush1.msra.mxu0 %v45
    %907 = vmatprep.subr.mxu0 %v54
    %908 = vmatpush1.msra.mxu0 %v53
    %909 = vmatprep.subr.mxu0 %v62
    %910 = vmatpush1.msra.mxu0 %v61
    %911 = vmatprep.subr.mxu0 %v70
    %912 = vmatpush1.msra.mxu0 %v69
    %913 = vmatprep.subr.mxu0 %v78
    %914 = vmatpush1.msra.mxu0 %v77
    %915 = vmatprep.subr.mxu0 %v86
    %916 = vmatpush1.msra.mxu0 %v85
    %917 = vmatprep.subr.mxu0 %v94
    %918 = vmatpush1.msra.mxu0 %v93
    %919 = vmatprep.subr.mxu0 %v102
    %920 = vmatpush1.msra.mxu0 %v101
    %921 = vmatprep.subr.mxu0 %v110
    %922 = vmatpush1.msra.mxu0 %v109
    %923 = vmatprep.subr.mxu0 %v118
    %924 = vmatpush1.msra.mxu0 %v117
    %925 = vmatprep.subr.mxu0 %v126
    %926 = vmatpush1.msra.mxu0 %v125
    %927 = vmatprep.subr.mxu0 %v134
    %928 = vmatpush1.msra.mxu0 %v133
    %929 = vmatprep.subr.mxu0 %v142
    %930 = vmatpush1.msra.mxu0 %v141
    %931 = vmatprep.subr.mxu0 %v150
    %932 = vmatpush1.msra.mxu0 %v149
    %933 = vmatprep.subr.mxu0 %v158
    %934 = vmatpush1.msra.mxu0 %v157
    %935 = vmatprep.subr.mxu0 %v166
    %936 = vmatpush1.msra.mxu0 %v165
    %937 = vmatprep.subr.mxu0 %v174
    %938 = vmatpush1.msra.mxu0 %v173
    %939 = vmatprep.subr.mxu0 %v182
    %940 = vmatpush1.msra.mxu0 %v181
    %941 = vmatprep.subr.mxu0 %v190
    %942 = vmatpush1.msra.mxu0 %v189
    %943 = vmatprep.subr.mxu0 %v198
    %944 = vmatpush1.msra.mxu0 %v197
    %945 = vmatprep.subr.mxu0 %v206
    %946 = vmatpush1.msra.mxu0 %v205
    %947 = vmatprep.subr.mxu0 %v214
    %948 = vmatpush1.msra.mxu0 %v213
    %949 = vmatprep.subr.mxu0 %v222
    %950 = vmatpush1.msra.mxu0 %v221
    %951 = vmatprep.subr.mxu0 %v230
    %952 = vmatpush1.msra.mxu0 %v229
    %953 = vmatprep.subr.mxu0 %v238
    %954 = vmatpush1.msra.mxu0 %v237
    %955 = vmatprep.subr.mxu0 %v246
    %956 = vmatpush1.msra.mxu0 %v245
    %957 = vmatprep.subr.mxu0 %v254
    %958 = vmatpush1.msra.mxu0 %v253
    %959 = vmatprep.subr.mxu0 %v262
    %960 = vmatpush1.msra.mxu0 %v261
    %961 = vmatprep.subr.mxu0 %v270
    %962 = vmatpush1.msra.mxu0 %v269
    %963 = vmatprep.subr.mxu0 %v278
    %964 = vmatpush1.msra.mxu0 %v277
    %965 = vmatprep.subr.mxu0 %v286
    %966 = vmatpush1.msra.mxu0 %v285
    %967 = vmatprep.mubr.f32.mxu0 %v687
    %968 = vmatmul.mubr.f32.gmra.mrb[0].mxu0 %v663
    %v969 = vpop.f32.mrb[0].mxu0
    %v970 = vadd.f32 0.0, %v969
    %v971 = vpop.f32.mrb[0].mxu0
    %v972 = vadd.f32 0.0, %v971
    %973 = vdwg.mxu0
    %s974 = scalar_lea.vmem %s1, 32
    %v975 = vld [vmem:[%s974] sm:$0xff]
    %v976 = vld [vmem:[%s974 + $0x8] sm:$0xff]
    %v979 = vcombine.high %v975, %v975
    %v980 = vcombine.high %v976, %v976
    %v983 = vadd.f32 %v757, %v975
    %v984 = vadd.f32 %v759, %v979
    %v985 = vadd.f32 %v828, %v976
    %v986 = vadd.f32 %v830, %v980
    %v987 = vadd.f32 %v899, %v292
    %v988 = vadd.f32 %v901, %v296
    %v989 = vadd.f32 %v970, %v300
    %v990 = vadd.f32 %v972, %v304
    %v991 = vxor.u32 %v983, 2147483648
    %v992 = vxor.u32 %v984, 2147483648
    %v993 = vxor.u32 %v985, 2147483648
    %v994 = vmul.f32 %v991, 1.442695
    %v995 = vpow.pop %v994
    %v996 = vmul.f32 %v992, 1.442695
    %v997 = vpow.pop %v996
    %v998 = vmul.f32 %v993, 1.442695
    %v999 = vpow.pop %v998
    %v1000 = vadd.f32 %v995, 1.0
    %v1001 = vadd.f32 %v997, 1.0
    %v1002 = vadd.f32 %v999, 1.0
    %v1003 = vrcp.pop %v1000
    %v1004 = vmul.f32 1.0, %v1003
    %v1005 = vrcp.pop %v1001
    %v1006 = vmul.f32 1.0, %v1005
    %v1007 = vrcp.pop %v1002
    %v1008 = vmul.f32 1.0, %v1007
    %v1009 = vtanh.pop %v986
    %v1010 = vmul.f32 %v1006, %v661
    %v1011 = vmul.f32 %v1004, %v1009
    %v1012 = vadd.f32 %v1010, %v1011
    %v1013 = vtanh.pop %v1012
    %v1014 = vmul.f32 %v1008, %v1013
    %v1015 = vxor.u32 %v987, 2147483648
    %v1016 = vxor.u32 %v988, 2147483648
    %v1017 = vxor.u32 %v989, 2147483648
    %v1018 = vmul.f32 %v1015, 1.442695
    %v1019 = vpow.pop %v1018
    %v1020 = vmul.f32 %v1016, 1.442695
    %v1021 = vpow.pop %v1020
    %v1022 = vmul.f32 %v1017, 1.442695
    %v1023 = vpow.pop %v1022
    %v1024 = vadd.f32 %v1019, 1.0
    %v1025 = vadd.f32 %v1021, 1.0
    %v1026 = vadd.f32 %v1023, 1.0
    %v1027 = vrcp.pop %v1024
    %v1028 = vmul.f32 1.0, %v1027
    %v1029 = vrcp.pop %v1025
    %v1030 = vmul.f32 1.0, %v1029
    %v1031 = vrcp.pop %v1026
    %v1032 = vmul.f32 1.0, %v1031
    %v1033 = vtanh.pop %v990
    %v1034 = vmul.f32 %v1030, %v685
    %v1035 = vmul.f32 %v1028, %v1033
    %v1036 = vadd.f32 %v1034, %v1035
    %v1037 = vtanh.pop %v1036
    %v1038 = vmul.f32 %v1032, %v1037
    %vm1039 = vcmp.eq.s32.totalorder %v312, 2
    %v1040 = vsel %vm1039, %v1038, %v689
    %1041 = vmatprep.subr.mxu0 %v32
    %1042 = vmatpush1.msra.mxu0 %v31
    %1043 = vmatprep.subr.mxu0 %v40
    %1044 = vmatpush1.msra.mxu0 %v39
    %1045 = vmatprep.subr.mxu0 %v48
    %1046 = vmatpush1.msra.mxu0 %v47
    %1047 = vmatprep.subr.mxu0 %v56
    %1048 = vmatpush1.msra.mxu0 %v55
    %1049 = vmatprep.subr.mxu0 %v64
    %1050 = vmatpush1.msra.mxu0 %v63
    %1051 = vmatprep.subr.mxu0 %v72
    %1052 = vmatpush1.msra.mxu0 %v71
    %1053 = vmatprep.subr.mxu0 %v80
    %1054 = vmatpush1.msra.mxu0 %v79
    %1055 = vmatprep.subr.mxu0 %v88
    %1056 = vmatpush1.msra.mxu0 %v87
    %1057 = vmatprep.subr.mxu0 %v96
    %1058 = vmatpush1.msra.mxu0 %v95
    %1059 = vmatprep.subr.mxu0 %v104
    %1060 = vmatpush1.msra.mxu0 %v103
    %1061 = vmatprep.subr.mxu0 %v112
    %1062 = vmatpush1.msra.mxu0 %v111
    %1063 = vmatprep.subr.mxu0 %v120
    %1064 = vmatpush1.msra.mxu0 %v119
    %1065 = vmatprep.subr.mxu0 %v128
    %1066 = vmatpush1.msra.mxu0 %v127
    %1067 = vmatprep.subr.mxu0 %v136
    %1068 = vmatpush1.msra.mxu0 %v135
    %1069 = vmatprep.subr.mxu0 %v144
    %1070 = vmatpush1.msra.mxu0 %v143
    %1071 = vmatprep.subr.mxu0 %v152
    %1072 = vmatpush1.msra.mxu0 %v151
    %1073 = vmatprep.subr.mxu0 %v160
    %1074 = vmatpush1.msra.mxu0 %v159
    %1075 = vmatprep.subr.mxu0 %v168
    %1076 = vmatpush1.msra.mxu0 %v167
    %1077 = vmatprep.subr.mxu0 %v176
    %1078 = vmatpush1.msra.mxu0 %v175
    %1079 = vmatprep.subr.mxu0 %v184
    %1080 = vmatpush1.msra.mxu0 %v183
    %1081 = vmatprep.subr.mxu0 %v192
    %1082 = vmatpush1.msra.mxu0 %v191
    %1083 = vmatprep.subr.mxu0 %v200
    %1084 = vmatpush1.msra.mxu0 %v199
    %1085 = vmatprep.subr.mxu0 %v208
    %1086 = vmatpush1.msra.mxu0 %v207
    %1087 = vmatprep.subr.mxu0 %v216
    %1088 = vmatpush1.msra.mxu0 %v215
    %1089 = vmatprep.subr.mxu0 %v224
    %1090 = vmatpush1.msra.mxu0 %v223
    %1091 = vmatprep.subr.mxu0 %v232
    %1092 = vmatpush1.msra.mxu0 %v231
    %1093 = vmatprep.subr.mxu0 %v240
    %1094 = vmatpush1.msra.mxu0 %v239
    %1095 = vmatprep.subr.mxu0 %v248
    %1096 = vmatpush1.msra.mxu0 %v247
    %1097 = vmatprep.subr.mxu0 %v256
    %1098 = vmatpush1.msra.mxu0 %v255
    %1099 = vmatprep.subr.mxu0 %v264
    %1100 = vmatpush1.msra.mxu0 %v263
    %1101 = vmatprep.subr.mxu0 %v272
    %1102 = vmatpush1.msra.mxu0 %v271
    %1103 = vmatprep.subr.mxu0 %v280
    %1104 = vmatpush1.msra.mxu0 %v279
    %1105 = vmatprep.mubr.f32.mxu0 %v1038
    %1106 = vmatmul.mubr.f32.gmra.mrb[0].mxu0 %v1014
    %v1107 = vpop.f32.mrb[0].mxu0
    %v1108 = vadd.f32 0.0, %v1107
    %v1109 = vpop.f32.mrb[0].mxu0
    %v1110 = vadd.f32 0.0, %v1109
    %1111 = vdwg.mxu0
    %1112 = vmatprep.subr.mxu0 %v34
    %1113 = vmatpush1.msra.mxu0 %v33
    %1114 = vmatprep.subr.mxu0 %v42
    %1115 = vmatpush1.msra.mxu0 %v41
    %1116 = vmatprep.subr.mxu0 %v50
    %1117 = vmatpush1.msra.mxu0 %v49
    %1118 = vmatprep.subr.mxu0 %v58
    %1119 = vmatpush1.msra.mxu0 %v57
    %1120 = vmatprep.subr.mxu0 %v66
    %1121 = vmatpush1.msra.mxu0 %v65
    %1122 = vmatprep.subr.mxu0 %v74
    %1123 = vmatpush1.msra.mxu0 %v73
    %1124 = vmatprep.subr.mxu0 %v82
    %1125 = vmatpush1.msra.mxu0 %v81
    %1126 = vmatprep.subr.mxu0 %v90
    %1127 = vmatpush1.msra.mxu0 %v89
    %1128 = vmatprep.subr.mxu0 %v98
    %1129 = vmatpush1.msra.mxu0 %v97
    %1130 = vmatprep.subr.mxu0 %v106
    %1131 = vmatpush1.msra.mxu0 %v105
    %1132 = vmatprep.subr.mxu0 %v114
    %1133 = vmatpush1.msra.mxu0 %v113
    %1134 = vmatprep.subr.mxu0 %v122
    %1135 = vmatpush1.msra.mxu0 %v121
    %1136 = vmatprep.subr.mxu0 %v130
    %1137 = vmatpush1.msra.mxu0 %v129
    %1138 = vmatprep.subr.mxu0 %v138
    %1139 = vmatpush1.msra.mxu0 %v137
    %1140 = vmatprep.subr.mxu0 %v146
    %1141 = vmatpush1.msra.mxu0 %v145
    %1142 = vmatprep.subr.mxu0 %v154
    %1143 = vmatpush1.msra.mxu0 %v153
    %1144 = vmatprep.subr.mxu0 %v162
    %1145 = vmatpush1.msra.mxu0 %v161
    %1146 = vmatprep.subr.mxu0 %v170
    %1147 = vmatpush1.msra.mxu0 %v169
    %1148 = vmatprep.subr.mxu0 %v178
    %1149 = vmatpush1.msra.mxu0 %v177
    %1150 = vmatprep.subr.mxu0 %v186
    %1151 = vmatpush1.msra.mxu0 %v185
    %1152 = vmatprep.subr.mxu0 %v194
    %1153 = vmatpush1.msra.mxu0 %v193
    %1154 = vmatprep.subr.mxu0 %v202
    %1155 = vmatpush1.msra.mxu0 %v201
    %1156 = vmatprep.subr.mxu0 %v210
    %1157 = vmatpush1.msra.mxu0 %v209
    %1158 = vmatprep.subr.mxu0 %v218
    %1159 = vmatpush1.msra.mxu0 %v217
    %1160 = vmatprep.subr.mxu0 %v226
    %1161 = vmatpush1.msra.mxu0 %v225
    %1162 = vmatprep.subr.mxu0 %v234
    %1163 = vmatpush1.msra.mxu0 %v233
    %1164 = vmatprep.subr.mxu0 %v242
    %1165 = vmatpush1.msra.mxu0 %v241
    %1166 = vmatprep.subr.mxu0 %v250
    %1167 = vmatpush1.msra.mxu0 %v249
    %1168 = vmatprep.subr.mxu0 %v258
    %1169 = vmatpush1.msra.mxu0 %v257
    %1170 = vmatprep.subr.mxu0 %v266
    %1171 = vmatpush1.msra.mxu0 %v265
    %1172 = vmatprep.subr.mxu0 %v274
    %1173 = vmatpush1.msra.mxu0 %v273
    %1174 = vmatprep.subr.mxu0 %v282
    %1175 = vmatpush1.msra.mxu0 %v281
    %1176 = vmatprep.mubr.f32.mxu0 %v1038
    %1177 = vmatmul.mubr.f32.gmra.mrb[0].mxu0 %v1014
    %v1178 = vpop.f32.mrb[0].mxu0
    %v1179 = vadd.f32 0.0, %v1178
    %v1180 = vpop.f32.mrb[0].mxu0
    %v1181 = vadd.f32 0.0, %v1180
    %1182 = vdwg.mxu0
    %1183 = vmatprep.subr.mxu0 %v36
    %1184 = vmatpush1.msra.mxu0 %v35
    %1185 = vmatprep.subr.mxu0 %v44
    %1186 = vmatpush1.msra.mxu0 %v43
    %1187 = vmatprep.subr.mxu0 %v52
    %1188 = vmatpush1.msra.mxu0 %v51
    %1189 = vmatprep.subr.mxu0 %v60
    %1190 = vmatpush1.msra.mxu0 %v59
    %1191 = vmatprep.subr.mxu0 %v68
    %1192 = vmatpush1.msra.mxu0 %v67
    %1193 = vmatprep.subr.mxu0 %v76
    %1194 = vmatpush1.msra.mxu0 %v75
    %1195 = vmatprep.subr.mxu0 %v84
    %1196 = vmatpush1.msra.mxu0 %v83
    %1197 = vmatprep.subr.mxu0 %v92
    %1198 = vmatpush1.msra.mxu0 %v91
    %1199 = vmatprep.subr.mxu0 %v100
    %1200 = vmatpush1.msra.mxu0 %v99
    %1201 = vmatprep.subr.mxu0 %v108
    %1202 = vmatpush1.msra.mxu0 %v107
    %1203 = vmatprep.subr.mxu0 %v116
    %1204 = vmatpush1.msra.mxu0 %v115
    %1205 = vmatprep.subr.mxu0 %v124
    %1206 = vmatpush1.msra.mxu0 %v123
    %1207 = vmatprep.subr.mxu0 %v132
    %1208 = vmatpush1.msra.mxu0 %v131
    %1209 = vmatprep.subr.mxu0 %v140
    %1210 = vmatpush1.msra.mxu0 %v139
    %1211 = vmatprep.subr.mxu0 %v148
    %1212 = vmatpush1.msra.mxu0 %v147
    %1213 = vmatprep.subr.mxu0 %v156
    %1214 = vmatpush1.msra.mxu0 %v155
    %1215 = vmatprep.subr.mxu0 %v164
    %1216 = vmatpush1.msra.mxu0 %v163
    %1217 = vmatprep.subr.mxu0 %v172
    %1218 = vmatpush1.msra.mxu0 %v171
    %1219 = vmatprep.subr.mxu0 %v180
    %1220 = vmatpush1.msra.mxu0 %v179
    %1221 = vmatprep.subr.mxu0 %v188
    %1222 = vmatpush1.msra.mxu0 %v187
    %1223 = vmatprep.subr.mxu0 %v196
    %1224 = vmatpush1.msra.mxu0 %v195
    %1225 = vmatprep.subr.mxu0 %v204
    %1226 = vmatpush1.msra.mxu0 %v203
    %1227 = vmatprep.subr.mxu0 %v212
    %1228 = vmatpush1.msra.mxu0 %v211
    %1229 = vmatprep.subr.mxu0 %v220
    %1230 = vmatpush1.msra.mxu0 %v219
    %1231 = vmatprep.subr.mxu0 %v228
    %1232 = vmatpush1.msra.mxu0 %v227
    %1233 = vmatprep.subr.mxu0 %v236
    %1234 = vmatpush1.msra.mxu0 %v235
    %1235 = vmatprep.subr.mxu0 %v244
    %1236 = vmatpush1.msra.mxu0 %v243
    %1237 = vmatprep.subr.mxu0 %v252
    %1238 = vmatpush1.msra.mxu0 %v251
    %1239 = vmatprep.subr.mxu0 %v260
    %1240 = vmatpush1.msra.mxu0 %v259
    %1241 = vmatprep.subr.mxu0 %v268
    %1242 = vmatpush1.msra.mxu0 %v267
    %1243 = vmatprep.subr.mxu0 %v276
    %1244 = vmatpush1.msra.mxu0 %v275
    %1245 = vmatprep.subr.mxu0 %v284
    %1246 = vmatpush1.msra.mxu0 %v283
    %1247 = vmatprep.mubr.f32.mxu0 %v1038
    %1248 = vmatmul.mubr.f32.gmra.mrb[0].mxu0 %v1014
    %v1249 = vpop.f32.mrb[0].mxu0
    %v1250 = vadd.f32 0.0, %v1249
    %v1251 = vpop.f32.mrb[0].mxu0
    %v1252 = vadd.f32 0.0, %v1251
    %1253 = vdwg.mxu0
    %1254 = vmatprep.subr.mxu0 %v38
    %1255 = vmatpush1.msra.mxu0 %v37
    %1256 = vmatprep.subr.mxu0 %v46
    %1257 = vmatpush1.msra.mxu0 %v45
    %1258 = vmatprep.subr.mxu0 %v54
    %1259 = vmatpush1.msra.mxu0 %v53
    %1260 = vmatprep.subr.mxu0 %v62
    %1261 = vmatpush1.msra.mxu0 %v61
    %1262 = vmatprep.subr.mxu0 %v70
    %1263 = vmatpush1.msra.mxu0 %v69
    %1264 = vmatprep.subr.mxu0 %v78
    %1265 = vmatpush1.msra.mxu0 %v77
    %1266 = vmatprep.subr.mxu0 %v86
    %1267 = vmatpush1.msra.mxu0 %v85
    %1268 = vmatprep.subr.mxu0 %v94
    %1269 = vmatpush1.msra.mxu0 %v93
    %1270 = vmatprep.subr.mxu0 %v102
    %1271 = vmatpush1.msra.mxu0 %v101
    %1272 = vmatprep.subr.mxu0 %v110
    %1273 = vmatpush1.msra.mxu0 %v109
    %1274 = vmatprep.subr.mxu0 %v118
    %1275 = vmatpush1.msra.mxu0 %v117
    %1276 = vmatprep.subr.mxu0 %v126
    %1277 = vmatpush1.msra.mxu0 %v125
    %1278 = vmatprep.subr.mxu0 %v134
    %1279 = vmatpush1.msra.mxu0 %v133
    %1280 = vmatprep.subr.mxu0 %v142
    %1281 = vmatpush1.msra.mxu0 %v141
    %1282 = vmatprep.subr.mxu0 %v150
    %1283 = vmatpush1.msra.mxu0 %v149
    %1284 = vmatprep.subr.mxu0 %v158
    %1285 = vmatpush1.msra.mxu0 %v157
    %1286 = vmatprep.subr.mxu0 %v166
    %1287 = vmatpush1.msra.mxu0 %v165
    %1288 = vmatprep.subr.mxu0 %v174
    %1289 = vmatpush1.msra.mxu0 %v173
    %1290 = vmatprep.subr.mxu0 %v182
    %1291 = vmatpush1.msra.mxu0 %v181
    %1292 = vmatprep.subr.mxu0 %v190
    %1293 = vmatpush1.msra.mxu0 %v189
    %1294 = vmatprep.subr.mxu0 %v198
    %1295 = vmatpush1.msra.mxu0 %v197
    %1296 = vmatprep.subr.mxu0 %v206
    %1297 = vmatpush1.msra.mxu0 %v205
    %1298 = vmatprep.subr.mxu0 %v214
    %1299 = vmatpush1.msra.mxu0 %v213
    %1300 = vmatprep.subr.mxu0 %v222
    %1301 = vmatpush1.msra.mxu0 %v221
    %1302 = vmatprep.subr.mxu0 %v230
    %1303 = vmatpush1.msra.mxu0 %v229
    %1304 = vmatprep.subr.mxu0 %v238
    %1305 = vmatpush1.msra.mxu0 %v237
    %1306 = vmatprep.subr.mxu0 %v246
    %1307 = vmatpush1.msra.mxu0 %v245
    %1308 = vmatprep.subr.mxu0 %v254
    %1309 = vmatpush1.msra.mxu0 %v253
    %1310 = vmatprep.subr.mxu0 %v262
    %1311 = vmatpush1.msra.mxu0 %v261
    %1312 = vmatprep.subr.mxu0 %v270
    %1313 = vmatpush1.msra.mxu0 %v269
    %1314 = vmatprep.subr.mxu0 %v278
    %1315 = vmatpush1.msra.mxu0 %v277
    %1316 = vmatprep.subr.mxu0 %v286
    %1317 = vmatpush1.msra.mxu0 %v285
    %1318 = vmatprep.mubr.f32.mxu0 %v1038
    %1319 = vmatmul.mubr.f32.gmra.mrb[0].mxu0 %v1014
    %v1320 = vpop.f32.mrb[0].mxu0
    %v1321 = vadd.f32 0.0, %v1320
    %v1322 = vpop.f32.mrb[0].mxu0
    %v1323 = vadd.f32 0.0, %v1322
    %1324 = vdwg.mxu0
    %s1325 = scalar_lea.vmem %s1, 48
    %v1326 = vld [vmem:[%s1325] sm:$0xff]
    %v1327 = vld [vmem:[%s1325 + $0x8] sm:$0xff]
    %v1330 = vcombine.high %v1326, %v1326
    %v1331 = vcombine.high %v1327, %v1327
    %v1334 = vadd.f32 %v1108, %v1326
    %v1335 = vadd.f32 %v1110, %v1330
    %v1336 = vadd.f32 %v1179, %v1327
    %v1337 = vadd.f32 %v1181, %v1331
    %v1338 = vadd.f32 %v1250, %v292
    %v1339 = vadd.f32 %v1252, %v296
    %v1340 = vadd.f32 %v1321, %v300
    %v1341 = vadd.f32 %v1323, %v304
    %v1342 = vxor.u32 %v1334, 2147483648
    %v1343 = vxor.u32 %v1335, 2147483648
    %v1344 = vxor.u32 %v1336, 2147483648
    %v1345 = vmul.f32 %v1342, 1.442695
    %v1346 = vpow.pop %v1345
    %v1347 = vmul.f32 %v1343, 1.442695
    %v1348 = vpow.pop %v1347
    %v1349 = vmul.f32 %v1344, 1.442695
    %v1350 = vpow.pop %v1349
    %v1351 = vadd.f32 %v1346, 1.0
    %v1352 = vadd.f32 %v1348, 1.0
    %v1353 = vadd.f32 %v1350, 1.0
    %v1354 = vrcp.pop %v1351
    %v1355 = vmul.f32 1.0, %v1354
    %v1356 = vrcp.pop %v1352
    %v1357 = vmul.f32 1.0, %v1356
    %v1358 = vrcp.pop %v1353
    %v1359 = vmul.f32 1.0, %v1358
    %v1360 = vtanh.pop %v1337
    %v1361 = vmul.f32 %v1357, %v1012
    %v1362 = vmul.f32 %v1355, %v1360
    %v1363 = vadd.f32 %v1361, %v1362
    %v1364 = vtanh.pop %v1363
    %v1365 = vmul.f32 %v1359, %v1364
    %v1366 = vxor.u32 %v1338, 2147483648
    %v1367 = vxor.u32 %v1339, 2147483648
    %v1368 = vxor.u32 %v1340, 2147483648
    %v1369 = vmul.f32 %v1366, 1.442695
    %v1370 = vpow.pop %v1369
    %v1371 = vmul.f32 %v1367, 1.442695
    %v1372 = vpow.pop %v1371
    %v1373 = vmul.f32 %v1368, 1.442695
    %v1374 = vpow.pop %v1373
    %v1375 = vadd.f32 %v1370, 1.0
    %v1376 = vadd.f32 %v1372, 1.0
    %v1377 = vadd.f32 %v1374, 1.0
    %v1378 = vrcp.pop %v1375
    %v1379 = vmul.f32 1.0, %v1378
    %v1380 = vrcp.pop %v1376
    %v1381 = vmul.f32 1.0, %v1380
    %v1382 = vrcp.pop %v1377
    %v1383 = vmul.f32 1.0, %v1382
    %v1384 = vtanh.pop %v1341
    %v1385 = vmul.f32 %v1381, %v1036
    %v1386 = vmul.f32 %v1379, %v1384
    %v1387 = vadd.f32 %v1385, %v1386
    %v1388 = vtanh.pop %v1387
    %v1389 = vmul.f32 %v1383, %v1388
    %vm1390 = vcmp.eq.s32.totalorder %v312, 3
    %v1391 = vsel %vm1390, %v1389, %v1040
    %1392 = vmatprep.subr.mxu0 %v32
    %1393 = vmatpush1.msra.mxu0 %v31
    %1394 = vmatprep.subr.mxu0 %v40
    %1395 = vmatpush1.msra.mxu0 %v39
    %1396 = vmatprep.subr.mxu0 %v48
    %1397 = vmatpush1.msra.mxu0 %v47
    %1398 = vmatprep.subr.mxu0 %v56
    %1399 = vmatpush1.msra.mxu0 %v55
    %1400 = vmatprep.subr.mxu0 %v64
    %1401 = vmatpush1.msra.mxu0 %v63
    %1402 = vmatprep.subr.mxu0 %v72
    %1403 = vmatpush1.msra.mxu0 %v71
    %1404 = vmatprep.subr.mxu0 %v80
    %1405 = vmatpush1.msra.mxu0 %v79
    %1406 = vmatprep.subr.mxu0 %v88
    %1407 = vmatpush1.msra.mxu0 %v87
    %1408 = vmatprep.subr.mxu0 %v96
    %1409 = vmatpush1.msra.mxu0 %v95
    %1410 = vmatprep.subr.mxu0 %v104
    %1411 = vmatpush1.msra.mxu0 %v103
    %1412 = vmatprep.subr.mxu0 %v112
    %1413 = vmatpush1.msra.mxu0 %v111
    %1414 = vmatprep.subr.mxu0 %v120
    %1415 = vmatpush1.msra.mxu0 %v119
    %1416 = vmatprep.subr.mxu0 %v128
    %1417 = vmatpush1.msra.mxu0 %v127
    %1418 = vmatprep.subr.mxu0 %v136
    %1419 = vmatpush1.msra.mxu0 %v135
    %1420 = vmatprep.subr.mxu0 %v144
    %1421 = vmatpush1.msra.mxu0 %v143
    %1422 = vmatprep.subr.mxu0 %v152
    %1423 = vmatpush1.msra.mxu0 %v151
    %1424 = vmatprep.subr.mxu0 %v160
    %1425 = vmatpush1.msra.mxu0 %v159
    %1426 = vmatprep.subr.mxu0 %v168
    %1427 = vmatpush1.msra.mxu0 %v167
    %1428 = vmatprep.subr.mxu0 %v176
    %1429 = vmatpush1.msra.mxu0 %v175
    %1430 = vmatprep.subr.mxu0 %v184
    %1431 = vmatpush1.msra.mxu0 %v183
    %1432 = vmatprep.subr.mxu0 %v192
    %1433 = vmatpush1.msra.mxu0 %v191
    %1434 = vmatprep.subr.mxu0 %v200
    %1435 = vmatpush1.msra.mxu0 %v199
    %1436 = vmatprep.subr.mxu0 %v208
    %1437 = vmatpush1.msra.mxu0 %v207
    %1438 = vmatprep.subr.mxu0 %v216
    %1439 = vmatpush1.msra.mxu0 %v215
    %1440 = vmatprep.subr.mxu0 %v224
    %1441 = vmatpush1.msra.mxu0 %v223
    %1442 = vmatprep.subr.mxu0 %v232
    %1443 = vmatpush1.msra.mxu0 %v231
    %1444 = vmatprep.subr.mxu0 %v240
    %1445 = vmatpush1.msra.mxu0 %v239
    %1446 = vmatprep.subr.mxu0 %v248
    %1447 = vmatpush1.msra.mxu0 %v247
    %1448 = vmatprep.subr.mxu0 %v256
    %1449 = vmatpush1.msra.mxu0 %v255
    %1450 = vmatprep.subr.mxu0 %v264
    %1451 = vmatpush1.msra.mxu0 %v263
    %1452 = vmatprep.subr.mxu0 %v272
    %1453 = vmatpush1.msra.mxu0 %v271
    %1454 = vmatprep.subr.mxu0 %v280
    %1455 = vmatpush1.msra.mxu0 %v279
    %1456 = vmatprep.mubr.f32.mxu0 %v1389
    %1457 = vmatmul.mubr.f32.gmra.mrb[0].mxu0 %v1365
    %v1458 = vpop.f32.mrb[0].mxu0
    %v1459 = vadd.f32 0.0, %v1458
    %v1460 = vpop.f32.mrb[0].mxu0
    %v1461 = vadd.f32 0.0, %v1460
    %1462 = vdwg.mxu0
    %1463 = vmatprep.subr.mxu0 %v34
    %1464 = vmatpush1.msra.mxu0 %v33
    %1465 = vmatprep.subr.mxu0 %v42
    %1466 = vmatpush1.msra.mxu0 %v41
    %1467 = vmatprep.subr.mxu0 %v50
    %1468 = vmatpush1.msra.mxu0 %v49
    %1469 = vmatprep.subr.mxu0 %v58
    %1470 = vmatpush1.msra.mxu0 %v57
    %1471 = vmatprep.subr.mxu0 %v66
    %1472 = vmatpush1.msra.mxu0 %v65
    %1473 = vmatprep.subr.mxu0 %v74
    %1474 = vmatpush1.msra.mxu0 %v73
    %1475 = vmatprep.subr.mxu0 %v82
    %1476 = vmatpush1.msra.mxu0 %v81
    %1477 = vmatprep.subr.mxu0 %v90
    %1478 = vmatpush1.msra.mxu0 %v89
    %1479 = vmatprep.subr.mxu0 %v98
    %1480 = vmatpush1.msra.mxu0 %v97
    %1481 = vmatprep.subr.mxu0 %v106
    %1482 = vmatpush1.msra.mxu0 %v105
    %1483 = vmatprep.subr.mxu0 %v114
    %1484 = vmatpush1.msra.mxu0 %v113
    %1485 = vmatprep.subr.mxu0 %v122
    %1486 = vmatpush1.msra.mxu0 %v121
    %1487 = vmatprep.subr.mxu0 %v130
    %1488 = vmatpush1.msra.mxu0 %v129
    %1489 = vmatprep.subr.mxu0 %v138
    %1490 = vmatpush1.msra.mxu0 %v137
    %1491 = vmatprep.subr.mxu0 %v146
    %1492 = vmatpush1.msra.mxu0 %v145
    %1493 = vmatprep.subr.mxu0 %v154
    %1494 = vmatpush1.msra.mxu0 %v153
    %1495 = vmatprep.subr.mxu0 %v162
    %1496 = vmatpush1.msra.mxu0 %v161
    %1497 = vmatprep.subr.mxu0 %v170
    %1498 = vmatpush1.msra.mxu0 %v169
    %1499 = vmatprep.subr.mxu0 %v178
    %1500 = vmatpush1.msra.mxu0 %v177
    %1501 = vmatprep.subr.mxu0 %v186
    %1502 = vmatpush1.msra.mxu0 %v185
    %1503 = vmatprep.subr.mxu0 %v194
    %1504 = vmatpush1.msra.mxu0 %v193
    %1505 = vmatprep.subr.mxu0 %v202
    %1506 = vmatpush1.msra.mxu0 %v201
    %1507 = vmatprep.subr.mxu0 %v210
    %1508 = vmatpush1.msra.mxu0 %v209
    %1509 = vmatprep.subr.mxu0 %v218
    %1510 = vmatpush1.msra.mxu0 %v217
    %1511 = vmatprep.subr.mxu0 %v226
    %1512 = vmatpush1.msra.mxu0 %v225
    %1513 = vmatprep.subr.mxu0 %v234
    %1514 = vmatpush1.msra.mxu0 %v233
    %1515 = vmatprep.subr.mxu0 %v242
    %1516 = vmatpush1.msra.mxu0 %v241
    %1517 = vmatprep.subr.mxu0 %v250
    %1518 = vmatpush1.msra.mxu0 %v249
    %1519 = vmatprep.subr.mxu0 %v258
    %1520 = vmatpush1.msra.mxu0 %v257
    %1521 = vmatprep.subr.mxu0 %v266
    %1522 = vmatpush1.msra.mxu0 %v265
    %1523 = vmatprep.subr.mxu0 %v274
    %1524 = vmatpush1.msra.mxu0 %v273
    %1525 = vmatprep.subr.mxu0 %v282
    %1526 = vmatpush1.msra.mxu0 %v281
    %1527 = vmatprep.mubr.f32.mxu0 %v1389
    %1528 = vmatmul.mubr.f32.gmra.mrb[0].mxu0 %v1365
    %v1529 = vpop.f32.mrb[0].mxu0
    %v1530 = vadd.f32 0.0, %v1529
    %v1531 = vpop.f32.mrb[0].mxu0
    %v1532 = vadd.f32 0.0, %v1531
    %1533 = vdwg.mxu0
    %1534 = vmatprep.subr.mxu0 %v36
    %1535 = vmatpush1.msra.mxu0 %v35
    %1536 = vmatprep.subr.mxu0 %v44
    %1537 = vmatpush1.msra.mxu0 %v43
    %1538 = vmatprep.subr.mxu0 %v52
    %1539 = vmatpush1.msra.mxu0 %v51
    %1540 = vmatprep.subr.mxu0 %v60
    %1541 = vmatpush1.msra.mxu0 %v59
    %1542 = vmatprep.subr.mxu0 %v68
    %1543 = vmatpush1.msra.mxu0 %v67
    %1544 = vmatprep.subr.mxu0 %v76
    %1545 = vmatpush1.msra.mxu0 %v75
    %1546 = vmatprep.subr.mxu0 %v84
    %1547 = vmatpush1.msra.mxu0 %v83
    %1548 = vmatprep.subr.mxu0 %v92
    %1549 = vmatpush1.msra.mxu0 %v91
    %1550 = vmatprep.subr.mxu0 %v100
    %1551 = vmatpush1.msra.mxu0 %v99
    %1552 = vmatprep.subr.mxu0 %v108
    %1553 = vmatpush1.msra.mxu0 %v107
    %1554 = vmatprep.subr.mxu0 %v116
    %1555 = vmatpush1.msra.mxu0 %v115
    %1556 = vmatprep.subr.mxu0 %v124
    %1557 = vmatpush1.msra.mxu0 %v123
    %1558 = vmatprep.subr.mxu0 %v132
    %1559 = vmatpush1.msra.mxu0 %v131
    %1560 = vmatprep.subr.mxu0 %v140
    %1561 = vmatpush1.msra.mxu0 %v139
    %1562 = vmatprep.subr.mxu0 %v148
    %1563 = vmatpush1.msra.mxu0 %v147
    %1564 = vmatprep.subr.mxu0 %v156
    %1565 = vmatpush1.msra.mxu0 %v155
    %1566 = vmatprep.subr.mxu0 %v164
    %1567 = vmatpush1.msra.mxu0 %v163
    %1568 = vmatprep.subr.mxu0 %v172
    %1569 = vmatpush1.msra.mxu0 %v171
    %1570 = vmatprep.subr.mxu0 %v180
    %1571 = vmatpush1.msra.mxu0 %v179
    %1572 = vmatprep.subr.mxu0 %v188
    %1573 = vmatpush1.msra.mxu0 %v187
    %1574 = vmatprep.subr.mxu0 %v196
    %1575 = vmatpush1.msra.mxu0 %v195
    %1576 = vmatprep.subr.mxu0 %v204
    %1577 = vmatpush1.msra.mxu0 %v203
    %1578 = vmatprep.subr.mxu0 %v212
    %1579 = vmatpush1.msra.mxu0 %v211
    %1580 = vmatprep.subr.mxu0 %v220
    %1581 = vmatpush1.msra.mxu0 %v219
    %1582 = vmatprep.subr.mxu0 %v228
    %1583 = vmatpush1.msra.mxu0 %v227
    %1584 = vmatprep.subr.mxu0 %v236
    %1585 = vmatpush1.msra.mxu0 %v235
    %1586 = vmatprep.subr.mxu0 %v244
    %1587 = vmatpush1.msra.mxu0 %v243
    %1588 = vmatprep.subr.mxu0 %v252
    %1589 = vmatpush1.msra.mxu0 %v251
    %1590 = vmatprep.subr.mxu0 %v260
    %1591 = vmatpush1.msra.mxu0 %v259
    %1592 = vmatprep.subr.mxu0 %v268
    %1593 = vmatpush1.msra.mxu0 %v267
    %1594 = vmatprep.subr.mxu0 %v276
    %1595 = vmatpush1.msra.mxu0 %v275
    %1596 = vmatprep.subr.mxu0 %v284
    %1597 = vmatpush1.msra.mxu0 %v283
    %1598 = vmatprep.mubr.f32.mxu0 %v1389
    %1599 = vmatmul.mubr.f32.gmra.mrb[0].mxu0 %v1365
    %v1600 = vpop.f32.mrb[0].mxu0
    %v1601 = vadd.f32 0.0, %v1600
    %v1602 = vpop.f32.mrb[0].mxu0
    %v1603 = vadd.f32 0.0, %v1602
    %1604 = vdwg.mxu0
    %1605 = vmatprep.subr.mxu0 %v38
    %1606 = vmatpush1.msra.mxu0 %v37
    %1607 = vmatprep.subr.mxu0 %v46
    %1608 = vmatpush1.msra.mxu0 %v45
    %1609 = vmatprep.subr.mxu0 %v54
    %1610 = vmatpush1.msra.mxu0 %v53
    %1611 = vmatprep.subr.mxu0 %v62
    %1612 = vmatpush1.msra.mxu0 %v61
    %1613 = vmatprep.subr.mxu0 %v70
    %1614 = vmatpush1.msra.mxu0 %v69
    %1615 = vmatprep.subr.mxu0 %v78
    %1616 = vmatpush1.msra.mxu0 %v77
    %1617 = vmatprep.subr.mxu0 %v86
    %1618 = vmatpush1.msra.mxu0 %v85
    %1619 = vmatprep.subr.mxu0 %v94
    %1620 = vmatpush1.msra.mxu0 %v93
    %1621 = vmatprep.subr.mxu0 %v102
    %1622 = vmatpush1.msra.mxu0 %v101
    %1623 = vmatprep.subr.mxu0 %v110
    %1624 = vmatpush1.msra.mxu0 %v109
    %1625 = vmatprep.subr.mxu0 %v118
    %1626 = vmatpush1.msra.mxu0 %v117
    %1627 = vmatprep.subr.mxu0 %v126
    %1628 = vmatpush1.msra.mxu0 %v125
    %1629 = vmatprep.subr.mxu0 %v134
    %1630 = vmatpush1.msra.mxu0 %v133
    %1631 = vmatprep.subr.mxu0 %v142
    %1632 = vmatpush1.msra.mxu0 %v141
    %1633 = vmatprep.subr.mxu0 %v150
    %1634 = vmatpush1.msra.mxu0 %v149
    %1635 = vmatprep.subr.mxu0 %v158
    %1636 = vmatpush1.msra.mxu0 %v157
    %1637 = vmatprep.subr.mxu0 %v166
    %1638 = vmatpush1.msra.mxu0 %v165
    %1639 = vmatprep.subr.mxu0 %v174
    %1640 = vmatpush1.msra.mxu0 %v173
    %1641 = vmatprep.subr.mxu0 %v182
    %1642 = vmatpush1.msra.mxu0 %v181
    %1643 = vmatprep.subr.mxu0 %v190
    %1644 = vmatpush1.msra.mxu0 %v189
    %1645 = vmatprep.subr.mxu0 %v198
    %1646 = vmatpush1.msra.mxu0 %v197
    %1647 = vmatprep.subr.mxu0 %v206
    %1648 = vmatpush1.msra.mxu0 %v205
    %1649 = vmatprep.subr.mxu0 %v214
    %1650 = vmatpush1.msra.mxu0 %v213
    %1651 = vmatprep.subr.mxu0 %v222
    %1652 = vmatpush1.msra.mxu0 %v221
    %1653 = vmatprep.subr.mxu0 %v230
    %1654 = vmatpush1.msra.mxu0 %v229
    %1655 = vmatprep.subr.mxu0 %v238
    %1656 = vmatpush1.msra.mxu0 %v237
    %1657 = vmatprep.subr.mxu0 %v246
    %1658 = vmatpush1.msra.mxu0 %v245
    %1659 = vmatprep.subr.mxu0 %v254
    %1660 = vmatpush1.msra.mxu0 %v253
    %1661 = vmatprep.subr.mxu0 %v262
    %1662 = vmatpush1.msra.mxu0 %v261
    %1663 = vmatprep.subr.mxu0 %v270
    %1664 = vmatpush1.msra.mxu0 %v269
    %1665 = vmatprep.subr.mxu0 %v278
    %1666 = vmatpush1.msra.mxu0 %v277
    %1667 = vmatprep.subr.mxu0 %v286
    %1668 = vmatpush1.msra.mxu0 %v285
    %1669 = vmatprep.mubr.f32.mxu0 %v1389
    %1670 = vmatmul.mubr.f32.gmra.mrb[0].mxu0 %v1365
    %v1671 = vpop.f32.mrb[0].mxu0
    %v1672 = vadd.f32 0.0, %v1671
    %v1673 = vpop.f32.mrb[0].mxu0
    %v1674 = vadd.f32 0.0, %v1673
    %1675 = vdwg.mxu0
    %s1676 = scalar_lea.vmem %s1, 64
    %v1677 = vld [vmem:[%s1676] sm:$0xff]
    %v1678 = vld [vmem:[%s1676 + $0x8] sm:$0xff]
    %v1681 = vcombine.high %v1677, %v1677
    %v1682 = vcombine.high %v1678, %v1678
    %v1685 = vadd.f32 %v1459, %v1677
    %v1686 = vadd.f32 %v1461, %v1681
    %v1687 = vadd.f32 %v1530, %v1678
    %v1688 = vadd.f32 %v1532, %v1682
    %v1689 = vadd.f32 %v1601, %v292
    %v1690 = vadd.f32 %v1603, %v296
    %v1691 = vadd.f32 %v1672, %v300
    %v1692 = vadd.f32 %v1674, %v304
    %v1693 = vxor.u32 %v1685, 2147483648
    %v1694 = vxor.u32 %v1686, 2147483648
    %v1695 = vxor.u32 %v1687, 2147483648
    %v1696 = vmul.f32 %v1693, 1.442695
    %v1697 = vpow.pop %v1696
    %v1698 = vmul.f32 %v1694, 1.442695
    %v1699 = vpow.pop %v1698
    %v1700 = vmul.f32 %v1695, 1.442695
    %v1701 = vpow.pop %v1700
    %v1702 = vadd.f32 %v1697, 1.0
    %v1703 = vadd.f32 %v1699, 1.0
    %v1704 = vadd.f32 %v1701, 1.0
    %v1705 = vrcp.pop %v1702
    %v1706 = vmul.f32 1.0, %v1705
    %v1707 = vrcp.pop %v1703
    %v1708 = vmul.f32 1.0, %v1707
    %v1709 = vrcp.pop %v1704
    %v1710 = vmul.f32 1.0, %v1709
    %v1711 = vtanh.pop %v1688
    %v1712 = vmul.f32 %v1708, %v1363
    %v1713 = vmul.f32 %v1706, %v1711
    %v1714 = vadd.f32 %v1712, %v1713
    %v1715 = vtanh.pop %v1714
    %v1716 = vmul.f32 %v1710, %v1715
    %v1717 = vxor.u32 %v1689, 2147483648
    %v1718 = vxor.u32 %v1690, 2147483648
    %v1719 = vxor.u32 %v1691, 2147483648
    %v1720 = vmul.f32 %v1717, 1.442695
    %v1721 = vpow.pop %v1720
    %v1722 = vmul.f32 %v1718, 1.442695
    %v1723 = vpow.pop %v1722
    %v1724 = vmul.f32 %v1719, 1.442695
    %v1725 = vpow.pop %v1724
    %v1726 = vadd.f32 %v1721, 1.0
    %v1727 = vadd.f32 %v1723, 1.0
    %v1728 = vadd.f32 %v1725, 1.0
    %v1729 = vrcp.pop %v1726
    %v1730 = vmul.f32 1.0, %v1729
    %v1731 = vrcp.pop %v1727
    %v1732 = vmul.f32 1.0, %v1731
    %v1733 = vrcp.pop %v1728
    %v1734 = vmul.f32 1.0, %v1733
    %v1735 = vtanh.pop %v1692
    %v1736 = vmul.f32 %v1732, %v1387
    %v1737 = vmul.f32 %v1730, %v1735
    %v1738 = vadd.f32 %v1736, %v1737
    %v1739 = vtanh.pop %v1738
    %v1740 = vmul.f32 %v1734, %v1739
    %vm1741 = vcmp.eq.s32.totalorder %v312, 4
    %v1742 = vsel %vm1741, %v1740, %v1391
    %1743 = vmatprep.subr.mxu0 %v32
    %1744 = vmatpush1.msra.mxu0 %v31
    %1745 = vmatprep.subr.mxu0 %v40
    %1746 = vmatpush1.msra.mxu0 %v39
    %1747 = vmatprep.subr.mxu0 %v48
    %1748 = vmatpush1.msra.mxu0 %v47
    %1749 = vmatprep.subr.mxu0 %v56
    %1750 = vmatpush1.msra.mxu0 %v55
    %1751 = vmatprep.subr.mxu0 %v64
    %1752 = vmatpush1.msra.mxu0 %v63
    %1753 = vmatprep.subr.mxu0 %v72
    %1754 = vmatpush1.msra.mxu0 %v71
    %1755 = vmatprep.subr.mxu0 %v80
    %1756 = vmatpush1.msra.mxu0 %v79
    %1757 = vmatprep.subr.mxu0 %v88
    %1758 = vmatpush1.msra.mxu0 %v87
    %1759 = vmatprep.subr.mxu0 %v96
    %1760 = vmatpush1.msra.mxu0 %v95
    %1761 = vmatprep.subr.mxu0 %v104
    %1762 = vmatpush1.msra.mxu0 %v103
    %1763 = vmatprep.subr.mxu0 %v112
    %1764 = vmatpush1.msra.mxu0 %v111
    %1765 = vmatprep.subr.mxu0 %v120
    %1766 = vmatpush1.msra.mxu0 %v119
    %1767 = vmatprep.subr.mxu0 %v128
    %1768 = vmatpush1.msra.mxu0 %v127
    %1769 = vmatprep.subr.mxu0 %v136
    %1770 = vmatpush1.msra.mxu0 %v135
    %1771 = vmatprep.subr.mxu0 %v144
    %1772 = vmatpush1.msra.mxu0 %v143
    %1773 = vmatprep.subr.mxu0 %v152
    %1774 = vmatpush1.msra.mxu0 %v151
    %1775 = vmatprep.subr.mxu0 %v160
    %1776 = vmatpush1.msra.mxu0 %v159
    %1777 = vmatprep.subr.mxu0 %v168
    %1778 = vmatpush1.msra.mxu0 %v167
    %1779 = vmatprep.subr.mxu0 %v176
    %1780 = vmatpush1.msra.mxu0 %v175
    %1781 = vmatprep.subr.mxu0 %v184
    %1782 = vmatpush1.msra.mxu0 %v183
    %1783 = vmatprep.subr.mxu0 %v192
    %1784 = vmatpush1.msra.mxu0 %v191
    %1785 = vmatprep.subr.mxu0 %v200
    %1786 = vmatpush1.msra.mxu0 %v199
    %1787 = vmatprep.subr.mxu0 %v208
    %1788 = vmatpush1.msra.mxu0 %v207
    %1789 = vmatprep.subr.mxu0 %v216
    %1790 = vmatpush1.msra.mxu0 %v215
    %1791 = vmatprep.subr.mxu0 %v224
    %1792 = vmatpush1.msra.mxu0 %v223
    %1793 = vmatprep.subr.mxu0 %v232
    %1794 = vmatpush1.msra.mxu0 %v231
    %1795 = vmatprep.subr.mxu0 %v240
    %1796 = vmatpush1.msra.mxu0 %v239
    %1797 = vmatprep.subr.mxu0 %v248
    %1798 = vmatpush1.msra.mxu0 %v247
    %1799 = vmatprep.subr.mxu0 %v256
    %1800 = vmatpush1.msra.mxu0 %v255
    %1801 = vmatprep.subr.mxu0 %v264
    %1802 = vmatpush1.msra.mxu0 %v263
    %1803 = vmatprep.subr.mxu0 %v272
    %1804 = vmatpush1.msra.mxu0 %v271
    %1805 = vmatprep.subr.mxu0 %v280
    %1806 = vmatpush1.msra.mxu0 %v279
    %1807 = vmatprep.mubr.f32.mxu0 %v1740
    %1808 = vmatmul.mubr.f32.gmra.mrb[0].mxu0 %v1716
    %v1809 = vpop.f32.mrb[0].mxu0
    %v1810 = vadd.f32 0.0, %v1809
    %v1811 = vpop.f32.mrb[0].mxu0
    %v1812 = vadd.f32 0.0, %v1811
    %1813 = vdwg.mxu0
    %1814 = vmatprep.subr.mxu0 %v34
    %1815 = vmatpush1.msra.mxu0 %v33
    %1816 = vmatprep.subr.mxu0 %v42
    %1817 = vmatpush1.msra.mxu0 %v41
    %1818 = vmatprep.subr.mxu0 %v50
    %1819 = vmatpush1.msra.mxu0 %v49
    %1820 = vmatprep.subr.mxu0 %v58
    %1821 = vmatpush1.msra.mxu0 %v57
    %1822 = vmatprep.subr.mxu0 %v66
    %1823 = vmatpush1.msra.mxu0 %v65
    %1824 = vmatprep.subr.mxu0 %v74
    %1825 = vmatpush1.msra.mxu0 %v73
    %1826 = vmatprep.subr.mxu0 %v82
    %1827 = vmatpush1.msra.mxu0 %v81
    %1828 = vmatprep.subr.mxu0 %v90
    %1829 = vmatpush1.msra.mxu0 %v89
    %1830 = vmatprep.subr.mxu0 %v98
    %1831 = vmatpush1.msra.mxu0 %v97
    %1832 = vmatprep.subr.mxu0 %v106
    %1833 = vmatpush1.msra.mxu0 %v105
    %1834 = vmatprep.subr.mxu0 %v114
    %1835 = vmatpush1.msra.mxu0 %v113
    %1836 = vmatprep.subr.mxu0 %v122
    %1837 = vmatpush1.msra.mxu0 %v121
    %1838 = vmatprep.subr.mxu0 %v130
    %1839 = vmatpush1.msra.mxu0 %v129
    %1840 = vmatprep.subr.mxu0 %v138
    %1841 = vmatpush1.msra.mxu0 %v137
    %1842 = vmatprep.subr.mxu0 %v146
    %1843 = vmatpush1.msra.mxu0 %v145
    %1844 = vmatprep.subr.mxu0 %v154
    %1845 = vmatpush1.msra.mxu0 %v153
    %1846 = vmatprep.subr.mxu0 %v162
    %1847 = vmatpush1.msra.mxu0 %v161
    %1848 = vmatprep.subr.mxu0 %v170
    %1849 = vmatpush1.msra.mxu0 %v169
    %1850 = vmatprep.subr.mxu0 %v178
    %1851 = vmatpush1.msra.mxu0 %v177
    %1852 = vmatprep.subr.mxu0 %v186
    %1853 = vmatpush1.msra.mxu0 %v185
    %1854 = vmatprep.subr.mxu0 %v194
    %1855 = vmatpush1.msra.mxu0 %v193
    %1856 = vmatprep.subr.mxu0 %v202
    %1857 = vmatpush1.msra.mxu0 %v201
    %1858 = vmatprep.subr.mxu0 %v210
    %1859 = vmatpush1.msra.mxu0 %v209
    %1860 = vmatprep.subr.mxu0 %v218
    %1861 = vmatpush1.msra.mxu0 %v217
    %1862 = vmatprep.subr.mxu0 %v226
    %1863 = vmatpush1.msra.mxu0 %v225
    %1864 = vmatprep.subr.mxu0 %v234
    %1865 = vmatpush1.msra.mxu0 %v233
    %1866 = vmatprep.subr.mxu0 %v242
    %1867 = vmatpush1.msra.mxu0 %v241
    %1868 = vmatprep.subr.mxu0 %v250
    %1869 = vmatpush1.msra.mxu0 %v249
    %1870 = vmatprep.subr.mxu0 %v258
    %1871 = vmatpush1.msra.mxu0 %v257
    %1872 = vmatprep.subr.mxu0 %v266
    %1873 = vmatpush1.msra.mxu0 %v265
    %1874 = vmatprep.subr.mxu0 %v274
    %1875 = vmatpush1.msra.mxu0 %v273
    %1876 = vmatprep.subr.mxu0 %v282
    %1877 = vmatpush1.msra.mxu0 %v281
    %1878 = vmatprep.mubr.f32.mxu0 %v1740
    %1879 = vmatmul.mubr.f32.gmra.mrb[0].mxu0 %v1716
    %v1880 = vpop.f32.mrb[0].mxu0
    %v1881 = vadd.f32 0.0, %v1880
    %v1882 = vpop.f32.mrb[0].mxu0
    %v1883 = vadd.f32 0.0, %v1882
    %1884 = vdwg.mxu0
    %1885 = vmatprep.subr.mxu0 %v36
    %1886 = vmatpush1.msra.mxu0 %v35
    %1887 = vmatprep.subr.mxu0 %v44
    %1888 = vmatpush1.msra.mxu0 %v43
    %1889 = vmatprep.subr.mxu0 %v52
    %1890 = vmatpush1.msra.mxu0 %v51
    %1891 = vmatprep.subr.mxu0 %v60
    %1892 = vmatpush1.msra.mxu0 %v59
    %1893 = vmatprep.subr.mxu0 %v68
    %1894 = vmatpush1.msra.mxu0 %v67
    %1895 = vmatprep.subr.mxu0 %v76
    %1896 = vmatpush1.msra.mxu0 %v75
    %1897 = vmatprep.subr.mxu0 %v84
    %1898 = vmatpush1.msra.mxu0 %v83
    %1899 = vmatprep.subr.mxu0 %v92
    %1900 = vmatpush1.msra.mxu0 %v91
    %1901 = vmatprep.subr.mxu0 %v100
    %1902 = vmatpush1.msra.mxu0 %v99
    %1903 = vmatprep.subr.mxu0 %v108
    %1904 = vmatpush1.msra.mxu0 %v107
    %1905 = vmatprep.subr.mxu0 %v116
    %1906 = vmatpush1.msra.mxu0 %v115
    %1907 = vmatprep.subr.mxu0 %v124
    %1908 = vmatpush1.msra.mxu0 %v123
    %1909 = vmatprep.subr.mxu0 %v132
    %1910 = vmatpush1.msra.mxu0 %v131
    %1911 = vmatprep.subr.mxu0 %v140
    %1912 = vmatpush1.msra.mxu0 %v139
    %1913 = vmatprep.subr.mxu0 %v148
    %1914 = vmatpush1.msra.mxu0 %v147
    %1915 = vmatprep.subr.mxu0 %v156
    %1916 = vmatpush1.msra.mxu0 %v155
    %1917 = vmatprep.subr.mxu0 %v164
    %1918 = vmatpush1.msra.mxu0 %v163
    %1919 = vmatprep.subr.mxu0 %v172
    %1920 = vmatpush1.msra.mxu0 %v171
    %1921 = vmatprep.subr.mxu0 %v180
    %1922 = vmatpush1.msra.mxu0 %v179
    %1923 = vmatprep.subr.mxu0 %v188
    %1924 = vmatpush1.msra.mxu0 %v187
    %1925 = vmatprep.subr.mxu0 %v196
    %1926 = vmatpush1.msra.mxu0 %v195
    %1927 = vmatprep.subr.mxu0 %v204
    %1928 = vmatpush1.msra.mxu0 %v203
    %1929 = vmatprep.subr.mxu0 %v212
    %1930 = vmatpush1.msra.mxu0 %v211
    %1931 = vmatprep.subr.mxu0 %v220
    %1932 = vmatpush1.msra.mxu0 %v219
    %1933 = vmatprep.subr.mxu0 %v228
    %1934 = vmatpush1.msra.mxu0 %v227
    %1935 = vmatprep.subr.mxu0 %v236
    %1936 = vmatpush1.msra.mxu0 %v235
    %1937 = vmatprep.subr.mxu0 %v244
    %1938 = vmatpush1.msra.mxu0 %v243
    %1939 = vmatprep.subr.mxu0 %v252
    %1940 = vmatpush1.msra.mxu0 %v251
    %1941 = vmatprep.subr.mxu0 %v260
    %1942 = vmatpush1.msra.mxu0 %v259
    %1943 = vmatprep.subr.mxu0 %v268
    %1944 = vmatpush1.msra.mxu0 %v267
    %1945 = vmatprep.subr.mxu0 %v276
    %1946 = vmatpush1.msra.mxu0 %v275
    %1947 = vmatprep.subr.mxu0 %v284
    %1948 = vmatpush1.msra.mxu0 %v283
    %1949 = vmatprep.mubr.f32.mxu0 %v1740
    %1950 = vmatmul.mubr.f32.gmra.mrb[0].mxu0 %v1716
    %v1951 = vpop.f32.mrb[0].mxu0
    %v1952 = vadd.f32 0.0, %v1951
    %v1953 = vpop.f32.mrb[0].mxu0
    %v1954 = vadd.f32 0.0, %v1953
    %1955 = vdwg.mxu0
    %1956 = vmatprep.subr.mxu0 %v38
    %1957 = vmatpush1.msra.mxu0 %v37
    %1958 = vmatprep.subr.mxu0 %v46
    %1959 = vmatpush1.msra.mxu0 %v45
    %1960 = vmatprep.subr.mxu0 %v54
    %1961 = vmatpush1.msra.mxu0 %v53
    %1962 = vmatprep.subr.mxu0 %v62
    %1963 = vmatpush1.msra.mxu0 %v61
    %1964 = vmatprep.subr.mxu0 %v70
    %1965 = vmatpush1.msra.mxu0 %v69
    %1966 = vmatprep.subr.mxu0 %v78
    %1967 = vmatpush1.msra.mxu0 %v77
    %1968 = vmatprep.subr.mxu0 %v86
    %1969 = vmatpush1.msra.mxu0 %v85
    %1970 = vmatprep.subr.mxu0 %v94
    %1971 = vmatpush1.msra.mxu0 %v93
    %1972 = vmatprep.subr.mxu0 %v102
    %1973 = vmatpush1.msra.mxu0 %v101
    %1974 = vmatprep.subr.mxu0 %v110
    %1975 = vmatpush1.msra.mxu0 %v109
    %1976 = vmatprep.subr.mxu0 %v118
    %1977 = vmatpush1.msra.mxu0 %v117
    %1978 = vmatprep.subr.mxu0 %v126
    %1979 = vmatpush1.msra.mxu0 %v125
    %1980 = vmatprep.subr.mxu0 %v134
    %1981 = vmatpush1.msra.mxu0 %v133
    %1982 = vmatprep.subr.mxu0 %v142
    %1983 = vmatpush1.msra.mxu0 %v141
    %1984 = vmatprep.subr.mxu0 %v150
    %1985 = vmatpush1.msra.mxu0 %v149
    %1986 = vmatprep.subr.mxu0 %v158
    %1987 = vmatpush1.msra.mxu0 %v157
    %1988 = vmatprep.subr.mxu0 %v166
    %1989 = vmatpush1.msra.mxu0 %v165
    %1990 = vmatprep.subr.mxu0 %v174
    %1991 = vmatpush1.msra.mxu0 %v173
    %1992 = vmatprep.subr.mxu0 %v182
    %1993 = vmatpush1.msra.mxu0 %v181
    %1994 = vmatprep.subr.mxu0 %v190
    %1995 = vmatpush1.msra.mxu0 %v189
    %1996 = vmatprep.subr.mxu0 %v198
    %1997 = vmatpush1.msra.mxu0 %v197
    %1998 = vmatprep.subr.mxu0 %v206
    %1999 = vmatpush1.msra.mxu0 %v205
    %2000 = vmatprep.subr.mxu0 %v214
    %2001 = vmatpush1.msra.mxu0 %v213
    %2002 = vmatprep.subr.mxu0 %v222
    %2003 = vmatpush1.msra.mxu0 %v221
    %2004 = vmatprep.subr.mxu0 %v230
    %2005 = vmatpush1.msra.mxu0 %v229
    %2006 = vmatprep.subr.mxu0 %v238
    %2007 = vmatpush1.msra.mxu0 %v237
    %2008 = vmatprep.subr.mxu0 %v246
    %2009 = vmatpush1.msra.mxu0 %v245
    %2010 = vmatprep.subr.mxu0 %v254
    %2011 = vmatpush1.msra.mxu0 %v253
    %2012 = vmatprep.subr.mxu0 %v262
    %2013 = vmatpush1.msra.mxu0 %v261
    %2014 = vmatprep.subr.mxu0 %v270
    %2015 = vmatpush1.msra.mxu0 %v269
    %2016 = vmatprep.subr.mxu0 %v278
    %2017 = vmatpush1.msra.mxu0 %v277
    %2018 = vmatprep.subr.mxu0 %v286
    %2019 = vmatpush1.msra.mxu0 %v285
    %2020 = vmatprep.mubr.f32.mxu0 %v1740
    %2021 = vmatmul.mubr.f32.gmra.mrb[0].mxu0 %v1716
    %v2022 = vpop.f32.mrb[0].mxu0
    %v2023 = vadd.f32 0.0, %v2022
    %v2024 = vpop.f32.mrb[0].mxu0
    %v2025 = vadd.f32 0.0, %v2024
    %2026 = vdwg.mxu0
    %s2027 = scalar_lea.vmem %s1, 80
    %v2028 = vld [vmem:[%s2027] sm:$0xff]
    %v2029 = vld [vmem:[%s2027 + $0x8] sm:$0xff]
    %v2032 = vcombine.high %v2028, %v2028
    %v2033 = vcombine.high %v2029, %v2029
    %v2036 = vadd.f32 %v1810, %v2028
    %v2037 = vadd.f32 %v1812, %v2032
    %v2038 = vadd.f32 %v1881, %v2029
    %v2039 = vadd.f32 %v1883, %v2033
    %v2040 = vadd.f32 %v1952, %v292
    %v2041 = vadd.f32 %v1954, %v296
    %v2042 = vadd.f32 %v2023, %v300
    %v2043 = vadd.f32 %v2025, %v304
    %v2044 = vxor.u32 %v2036, 2147483648
    %v2045 = vxor.u32 %v2037, 2147483648
    %v2046 = vxor.u32 %v2038, 2147483648
    %v2047 = vmul.f32 %v2044, 1.442695
    %v2048 = vpow.pop %v2047
    %v2049 = vmul.f32 %v2045, 1.442695
    %v2050 = vpow.pop %v2049
    %v2051 = vmul.f32 %v2046, 1.442695
    %v2052 = vpow.pop %v2051
    %v2053 = vadd.f32 %v2048, 1.0
    %v2054 = vadd.f32 %v2050, 1.0
    %v2055 = vadd.f32 %v2052, 1.0
    %v2056 = vrcp.pop %v2053
    %v2057 = vmul.f32 1.0, %v2056
    %v2058 = vrcp.pop %v2054
    %v2059 = vmul.f32 1.0, %v2058
    %v2060 = vrcp.pop %v2055
    %v2061 = vmul.f32 1.0, %v2060
    %v2062 = vtanh.pop %v2039
    %v2063 = vmul.f32 %v2059, %v1714
    %v2064 = vmul.f32 %v2057, %v2062
    %v2065 = vadd.f32 %v2063, %v2064
    %v2066 = vtanh.pop %v2065
    %v2067 = vmul.f32 %v2061, %v2066
    %v2068 = vxor.u32 %v2040, 2147483648
    %v2069 = vxor.u32 %v2041, 2147483648
    %v2070 = vxor.u32 %v2042, 2147483648
    %v2071 = vmul.f32 %v2068, 1.442695
    %v2072 = vpow.pop %v2071
    %v2073 = vmul.f32 %v2069, 1.442695
    %v2074 = vpow.pop %v2073
    %v2075 = vmul.f32 %v2070, 1.442695
    %v2076 = vpow.pop %v2075
    %v2077 = vadd.f32 %v2072, 1.0
    %v2078 = vadd.f32 %v2074, 1.0
    %v2079 = vadd.f32 %v2076, 1.0
    %v2080 = vrcp.pop %v2077
    %v2081 = vmul.f32 1.0, %v2080
    %v2082 = vrcp.pop %v2078
    %v2083 = vmul.f32 1.0, %v2082
    %v2084 = vrcp.pop %v2079
    %v2085 = vmul.f32 1.0, %v2084
    %v2086 = vtanh.pop %v2043
    %v2087 = vmul.f32 %v2083, %v1738
    %v2088 = vmul.f32 %v2081, %v2086
    %v2089 = vadd.f32 %v2087, %v2088
    %v2090 = vtanh.pop %v2089
    %v2091 = vmul.f32 %v2085, %v2090
    %vm2092 = vcmp.eq.s32.totalorder %v312, 5
    %v2093 = vsel %vm2092, %v2091, %v1742
    %2094 = vmatprep.subr.mxu0 %v32
    %2095 = vmatpush1.msra.mxu0 %v31
    %2096 = vmatprep.subr.mxu0 %v40
    %2097 = vmatpush1.msra.mxu0 %v39
    %2098 = vmatprep.subr.mxu0 %v48
    %2099 = vmatpush1.msra.mxu0 %v47
    %2100 = vmatprep.subr.mxu0 %v56
    %2101 = vmatpush1.msra.mxu0 %v55
    %2102 = vmatprep.subr.mxu0 %v64
    %2103 = vmatpush1.msra.mxu0 %v63
    %2104 = vmatprep.subr.mxu0 %v72
    %2105 = vmatpush1.msra.mxu0 %v71
    %2106 = vmatprep.subr.mxu0 %v80
    %2107 = vmatpush1.msra.mxu0 %v79
    %2108 = vmatprep.subr.mxu0 %v88
    %2109 = vmatpush1.msra.mxu0 %v87
    %2110 = vmatprep.subr.mxu0 %v96
    %2111 = vmatpush1.msra.mxu0 %v95
    %2112 = vmatprep.subr.mxu0 %v104
    %2113 = vmatpush1.msra.mxu0 %v103
    %2114 = vmatprep.subr.mxu0 %v112
    %2115 = vmatpush1.msra.mxu0 %v111
    %2116 = vmatprep.subr.mxu0 %v120
    %2117 = vmatpush1.msra.mxu0 %v119
    %2118 = vmatprep.subr.mxu0 %v128
    %2119 = vmatpush1.msra.mxu0 %v127
    %2120 = vmatprep.subr.mxu0 %v136
    %2121 = vmatpush1.msra.mxu0 %v135
    %2122 = vmatprep.subr.mxu0 %v144
    %2123 = vmatpush1.msra.mxu0 %v143
    %2124 = vmatprep.subr.mxu0 %v152
    %2125 = vmatpush1.msra.mxu0 %v151
    %2126 = vmatprep.subr.mxu0 %v160
    %2127 = vmatpush1.msra.mxu0 %v159
    %2128 = vmatprep.subr.mxu0 %v168
    %2129 = vmatpush1.msra.mxu0 %v167
    %2130 = vmatprep.subr.mxu0 %v176
    %2131 = vmatpush1.msra.mxu0 %v175
    %2132 = vmatprep.subr.mxu0 %v184
    %2133 = vmatpush1.msra.mxu0 %v183
    %2134 = vmatprep.subr.mxu0 %v192
    %2135 = vmatpush1.msra.mxu0 %v191
    %2136 = vmatprep.subr.mxu0 %v200
    %2137 = vmatpush1.msra.mxu0 %v199
    %2138 = vmatprep.subr.mxu0 %v208
    %2139 = vmatpush1.msra.mxu0 %v207
    %2140 = vmatprep.subr.mxu0 %v216
    %2141 = vmatpush1.msra.mxu0 %v215
    %2142 = vmatprep.subr.mxu0 %v224
    %2143 = vmatpush1.msra.mxu0 %v223
    %2144 = vmatprep.subr.mxu0 %v232
    %2145 = vmatpush1.msra.mxu0 %v231
    %2146 = vmatprep.subr.mxu0 %v240
    %2147 = vmatpush1.msra.mxu0 %v239
    %2148 = vmatprep.subr.mxu0 %v248
    %2149 = vmatpush1.msra.mxu0 %v247
    %2150 = vmatprep.subr.mxu0 %v256
    %2151 = vmatpush1.msra.mxu0 %v255
    %2152 = vmatprep.subr.mxu0 %v264
    %2153 = vmatpush1.msra.mxu0 %v263
    %2154 = vmatprep.subr.mxu0 %v272
    %2155 = vmatpush1.msra.mxu0 %v271
    %2156 = vmatprep.subr.mxu0 %v280
    %2157 = vmatpush1.msra.mxu0 %v279
    %2158 = vmatprep.mubr.f32.mxu0 %v2091
    %2159 = vmatmul.mubr.f32.gmra.mrb[0].mxu0 %v2067
    %v2160 = vpop.f32.mrb[0].mxu0
    %v2161 = vadd.f32 0.0, %v2160
    %v2162 = vpop.f32.mrb[0].mxu0
    %v2163 = vadd.f32 0.0, %v2162
    %2164 = vdwg.mxu0
    %2165 = vmatprep.subr.mxu0 %v34
    %2166 = vmatpush1.msra.mxu0 %v33
    %2167 = vmatprep.subr.mxu0 %v42
    %2168 = vmatpush1.msra.mxu0 %v41
    %2169 = vmatprep.subr.mxu0 %v50
    %2170 = vmatpush1.msra.mxu0 %v49
    %2171 = vmatprep.subr.mxu0 %v58
    %2172 = vmatpush1.msra.mxu0 %v57
    %2173 = vmatprep.subr.mxu0 %v66
    %2174 = vmatpush1.msra.mxu0 %v65
    %2175 = vmatprep.subr.mxu0 %v74
    %2176 = vmatpush1.msra.mxu0 %v73
    %2177 = vmatprep.subr.mxu0 %v82
    %2178 = vmatpush1.msra.mxu0 %v81
    %2179 = vmatprep.subr.mxu0 %v90
    %2180 = vmatpush1.msra.mxu0 %v89
    %2181 = vmatprep.subr.mxu0 %v98
    %2182 = vmatpush1.msra.mxu0 %v97
    %2183 = vmatprep.subr.mxu0 %v106
    %2184 = vmatpush1.msra.mxu0 %v105
    %2185 = vmatprep.subr.mxu0 %v114
    %2186 = vmatpush1.msra.mxu0 %v113
    %2187 = vmatprep.subr.mxu0 %v122
    %2188 = vmatpush1.msra.mxu0 %v121
    %2189 = vmatprep.subr.mxu0 %v130
    %2190 = vmatpush1.msra.mxu0 %v129
    %2191 = vmatprep.subr.mxu0 %v138
    %2192 = vmatpush1.msra.mxu0 %v137
    %2193 = vmatprep.subr.mxu0 %v146
    %2194 = vmatpush1.msra.mxu0 %v145
    %2195 = vmatprep.subr.mxu0 %v154
    %2196 = vmatpush1.msra.mxu0 %v153
    %2197 = vmatprep.subr.mxu0 %v162
    %2198 = vmatpush1.msra.mxu0 %v161
    %2199 = vmatprep.subr.mxu0 %v170
    %2200 = vmatpush1.msra.mxu0 %v169
    %2201 = vmatprep.subr.mxu0 %v178
    %2202 = vmatpush1.msra.mxu0 %v177
    %2203 = vmatprep.subr.mxu0 %v186
    %2204 = vmatpush1.msra.mxu0 %v185
    %2205 = vmatprep.subr.mxu0 %v194
    %2206 = vmatpush1.msra.mxu0 %v193
    %2207 = vmatprep.subr.mxu0 %v202
    %2208 = vmatpush1.msra.mxu0 %v201
    %2209 = vmatprep.subr.mxu0 %v210
    %2210 = vmatpush1.msra.mxu0 %v209
    %2211 = vmatprep.subr.mxu0 %v218
    %2212 = vmatpush1.msra.mxu0 %v217
    %2213 = vmatprep.subr.mxu0 %v226
    %2214 = vmatpush1.msra.mxu0 %v225
    %2215 = vmatprep.subr.mxu0 %v234
    %2216 = vmatpush1.msra.mxu0 %v233
    %2217 = vmatprep.subr.mxu0 %v242
    %2218 = vmatpush1.msra.mxu0 %v241
    %2219 = vmatprep.subr.mxu0 %v250
    %2220 = vmatpush1.msra.mxu0 %v249
    %2221 = vmatprep.subr.mxu0 %v258
    %2222 = vmatpush1.msra.mxu0 %v257
    %2223 = vmatprep.subr.mxu0 %v266
    %2224 = vmatpush1.msra.mxu0 %v265
    %2225 = vmatprep.subr.mxu0 %v274
    %2226 = vmatpush1.msra.mxu0 %v273
    %2227 = vmatprep.subr.mxu0 %v282
    %2228 = vmatpush1.msra.mxu0 %v281
    %2229 = vmatprep.mubr.f32.mxu0 %v2091
    %2230 = vmatmul.mubr.f32.gmra.mrb[0].mxu0 %v2067
    %v2231 = vpop.f32.mrb[0].mxu0
    %v2232 = vadd.f32 0.0, %v2231
    %v2233 = vpop.f32.mrb[0].mxu0
    %v2234 = vadd.f32 0.0, %v2233
    %2235 = vdwg.mxu0
    %2236 = vmatprep.subr.mxu0 %v36
    %2237 = vmatpush1.msra.mxu0 %v35
    %2238 = vmatprep.subr.mxu0 %v44
    %2239 = vmatpush1.msra.mxu0 %v43
    %2240 = vmatprep.subr.mxu0 %v52
    %2241 = vmatpush1.msra.mxu0 %v51
    %2242 = vmatprep.subr.mxu0 %v60
    %2243 = vmatpush1.msra.mxu0 %v59
    %2244 = vmatprep.subr.mxu0 %v68
    %2245 = vmatpush1.msra.mxu0 %v67
    %2246 = vmatprep.subr.mxu0 %v76
    %2247 = vmatpush1.msra.mxu0 %v75
    %2248 = vmatprep.subr.mxu0 %v84
    %2249 = vmatpush1.msra.mxu0 %v83
    %2250 = vmatprep.subr.mxu0 %v92
    %2251 = vmatpush1.msra.mxu0 %v91
    %2252 = vmatprep.subr.mxu0 %v100
    %2253 = vmatpush1.msra.mxu0 %v99
    %2254 = vmatprep.subr.mxu0 %v108
    %2255 = vmatpush1.msra.mxu0 %v107
    %2256 = vmatprep.subr.mxu0 %v116
    %2257 = vmatpush1.msra.mxu0 %v115
    %2258 = vmatprep.subr.mxu0 %v124
    %2259 = vmatpush1.msra.mxu0 %v123
    %2260 = vmatprep.subr.mxu0 %v132
    %2261 = vmatpush1.msra.mxu0 %v131
    %2262 = vmatprep.subr.mxu0 %v140
    %2263 = vmatpush1.msra.mxu0 %v139
    %2264 = vmatprep.subr.mxu0 %v148
    %2265 = vmatpush1.msra.mxu0 %v147
    %2266 = vmatprep.subr.mxu0 %v156
    %2267 = vmatpush1.msra.mxu0 %v155
    %2268 = vmatprep.subr.mxu0 %v164
    %2269 = vmatpush1.msra.mxu0 %v163
    %2270 = vmatprep.subr.mxu0 %v172
    %2271 = vmatpush1.msra.mxu0 %v171
    %2272 = vmatprep.subr.mxu0 %v180
    %2273 = vmatpush1.msra.mxu0 %v179
    %2274 = vmatprep.subr.mxu0 %v188
    %2275 = vmatpush1.msra.mxu0 %v187
    %2276 = vmatprep.subr.mxu0 %v196
    %2277 = vmatpush1.msra.mxu0 %v195
    %2278 = vmatprep.subr.mxu0 %v204
    %2279 = vmatpush1.msra.mxu0 %v203
    %2280 = vmatprep.subr.mxu0 %v212
    %2281 = vmatpush1.msra.mxu0 %v211
    %2282 = vmatprep.subr.mxu0 %v220
    %2283 = vmatpush1.msra.mxu0 %v219
    %2284 = vmatprep.subr.mxu0 %v228
    %2285 = vmatpush1.msra.mxu0 %v227
    %2286 = vmatprep.subr.mxu0 %v236
    %2287 = vmatpush1.msra.mxu0 %v235
    %2288 = vmatprep.subr.mxu0 %v244
    %2289 = vmatpush1.msra.mxu0 %v243
    %2290 = vmatprep.subr.mxu0 %v252
    %2291 = vmatpush1.msra.mxu0 %v251
    %2292 = vmatprep.subr.mxu0 %v260
    %2293 = vmatpush1.msra.mxu0 %v259
    %2294 = vmatprep.subr.mxu0 %v268
    %2295 = vmatpush1.msra.mxu0 %v267
    %2296 = vmatprep.subr.mxu0 %v276
    %2297 = vmatpush1.msra.mxu0 %v275
    %2298 = vmatprep.subr.mxu0 %v284
    %2299 = vmatpush1.msra.mxu0 %v283
    %2300 = vmatprep.mubr.f32.mxu0 %v2091
    %2301 = vmatmul.mubr.f32.gmra.mrb[0].mxu0 %v2067
    %v2302 = vpop.f32.mrb[0].mxu0
    %v2303 = vadd.f32 0.0, %v2302
    %v2304 = vpop.f32.mrb[0].mxu0
    %v2305 = vadd.f32 0.0, %v2304
    %2306 = vdwg.mxu0
    %2307 = vmatprep.subr.mxu0 %v38
    %2308 = vmatpush1.msra.mxu0 %v37
    %2309 = vmatprep.subr.mxu0 %v46
    %2310 = vmatpush1.msra.mxu0 %v45
    %2311 = vmatprep.subr.mxu0 %v54
    %2312 = vmatpush1.msra.mxu0 %v53
    %2313 = vmatprep.subr.mxu0 %v62
    %2314 = vmatpush1.msra.mxu0 %v61
    %2315 = vmatprep.subr.mxu0 %v70
    %2316 = vmatpush1.msra.mxu0 %v69
    %2317 = vmatprep.subr.mxu0 %v78
    %2318 = vmatpush1.msra.mxu0 %v77
    %2319 = vmatprep.subr.mxu0 %v86
    %2320 = vmatpush1.msra.mxu0 %v85
    %2321 = vmatprep.subr.mxu0 %v94
    %2322 = vmatpush1.msra.mxu0 %v93
    %2323 = vmatprep.subr.mxu0 %v102
    %2324 = vmatpush1.msra.mxu0 %v101
    %2325 = vmatprep.subr.mxu0 %v110
    %2326 = vmatpush1.msra.mxu0 %v109
    %2327 = vmatprep.subr.mxu0 %v118
    %2328 = vmatpush1.msra.mxu0 %v117
    %2329 = vmatprep.subr.mxu0 %v126
    %2330 = vmatpush1.msra.mxu0 %v125
    %2331 = vmatprep.subr.mxu0 %v134
    %2332 = vmatpush1.msra.mxu0 %v133
    %2333 = vmatprep.subr.mxu0 %v142
    %2334 = vmatpush1.msra.mxu0 %v141
    %2335 = vmatprep.subr.mxu0 %v150
    %2336 = vmatpush1.msra.mxu0 %v149
    %2337 = vmatprep.subr.mxu0 %v158
    %2338 = vmatpush1.msra.mxu0 %v157
    %2339 = vmatprep.subr.mxu0 %v166
    %2340 = vmatpush1.msra.mxu0 %v165
    %2341 = vmatprep.subr.mxu0 %v174
    %2342 = vmatpush1.msra.mxu0 %v173
    %2343 = vmatprep.subr.mxu0 %v182
    %2344 = vmatpush1.msra.mxu0 %v181
    %2345 = vmatprep.subr.mxu0 %v190
    %2346 = vmatpush1.msra.mxu0 %v189
    %2347 = vmatprep.subr.mxu0 %v198
    %2348 = vmatpush1.msra.mxu0 %v197
    %2349 = vmatprep.subr.mxu0 %v206
    %2350 = vmatpush1.msra.mxu0 %v205
    %2351 = vmatprep.subr.mxu0 %v214
    %2352 = vmatpush1.msra.mxu0 %v213
    %2353 = vmatprep.subr.mxu0 %v222
    %2354 = vmatpush1.msra.mxu0 %v221
    %2355 = vmatprep.subr.mxu0 %v230
    %2356 = vmatpush1.msra.mxu0 %v229
    %2357 = vmatprep.subr.mxu0 %v238
    %2358 = vmatpush1.msra.mxu0 %v237
    %2359 = vmatprep.subr.mxu0 %v246
    %2360 = vmatpush1.msra.mxu0 %v245
    %2361 = vmatprep.subr.mxu0 %v254
    %2362 = vmatpush1.msra.mxu0 %v253
    %2363 = vmatprep.subr.mxu0 %v262
    %2364 = vmatpush1.msra.mxu0 %v261
    %2365 = vmatprep.subr.mxu0 %v270
    %2366 = vmatpush1.msra.mxu0 %v269
    %2367 = vmatprep.subr.mxu0 %v278
    %2368 = vmatpush1.msra.mxu0 %v277
    %2369 = vmatprep.subr.mxu0 %v286
    %2370 = vmatpush1.msra.mxu0 %v285
    %2371 = vmatprep.mubr.f32.mxu0 %v2091
    %2372 = vmatmul.mubr.f32.gmra.mrb[0].mxu0 %v2067
    %v2373 = vpop.f32.mrb[0].mxu0
    %v2374 = vadd.f32 0.0, %v2373
    %v2375 = vpop.f32.mrb[0].mxu0
    %v2376 = vadd.f32 0.0, %v2375
    %2377 = vdwg.mxu0
    %s2378 = scalar_lea.vmem %s1, 96
    %v2379 = vld [vmem:[%s2378] sm:$0xff]
    %v2380 = vld [vmem:[%s2378 + $0x8] sm:$0xff]
    %v2383 = vcombine.high %v2379, %v2379
    %v2384 = vcombine.high %v2380, %v2380
    %v2387 = vadd.f32 %v2161, %v2379
    %v2388 = vadd.f32 %v2163, %v2383
    %v2389 = vadd.f32 %v2232, %v2380
    %v2390 = vadd.f32 %v2234, %v2384
    %v2391 = vadd.f32 %v2303, %v292
    %v2392 = vadd.f32 %v2305, %v296
    %v2393 = vadd.f32 %v2374, %v300
    %v2394 = vadd.f32 %v2376, %v304
    %v2395 = vxor.u32 %v2387, 2147483648
    %v2396 = vxor.u32 %v2388, 2147483648
    %v2397 = vxor.u32 %v2389, 2147483648
    %v2398 = vmul.f32 %v2395, 1.442695
    %v2399 = vpow.pop %v2398
    %v2400 = vmul.f32 %v2396, 1.442695
    %v2401 = vpow.pop %v2400
    %v2402 = vmul.f32 %v2397, 1.442695
    %v2403 = vpow.pop %v2402
    %v2404 = vadd.f32 %v2399, 1.0
    %v2405 = vadd.f32 %v2401, 1.0
    %v2406 = vadd.f32 %v2403, 1.0
    %v2407 = vrcp.pop %v2404
    %v2408 = vmul.f32 1.0, %v2407
    %v2409 = vrcp.pop %v2405
    %v2410 = vmul.f32 1.0, %v2409
    %v2411 = vrcp.pop %v2406
    %v2412 = vmul.f32 1.0, %v2411
    %v2413 = vtanh.pop %v2390
    %v2414 = vmul.f32 %v2410, %v2065
    %v2415 = vmul.f32 %v2408, %v2413
    %v2416 = vadd.f32 %v2414, %v2415
    %v2417 = vtanh.pop %v2416
    %v2418 = vmul.f32 %v2412, %v2417
    %v2419 = vxor.u32 %v2391, 2147483648
    %v2420 = vxor.u32 %v2392, 2147483648
    %v2421 = vxor.u32 %v2393, 2147483648
    %v2422 = vmul.f32 %v2419, 1.442695
    %v2423 = vpow.pop %v2422
    %v2424 = vmul.f32 %v2420, 1.442695
    %v2425 = vpow.pop %v2424
    %v2426 = vmul.f32 %v2421, 1.442695
    %v2427 = vpow.pop %v2426
    %v2428 = vadd.f32 %v2423, 1.0
    %v2429 = vadd.f32 %v2425, 1.0
    %v2430 = vadd.f32 %v2427, 1.0
    %v2431 = vrcp.pop %v2428
    %v2432 = vmul.f32 1.0, %v2431
    %v2433 = vrcp.pop %v2429
    %v2434 = vmul.f32 1.0, %v2433
    %v2435 = vrcp.pop %v2430
    %v2436 = vmul.f32 1.0, %v2435
    %v2437 = vtanh.pop %v2394
    %v2438 = vmul.f32 %v2434, %v2089
    %v2439 = vmul.f32 %v2432, %v2437
    %v2440 = vadd.f32 %v2438, %v2439
    %v2441 = vtanh.pop %v2440
    %v2442 = vmul.f32 %v2436, %v2441
    %vm2443 = vcmp.eq.s32.totalorder %v312, 6
    %v2444 = vsel %vm2443, %v2442, %v2093
    %2445 = vmatprep.subr.mxu0 %v32
    %2446 = vmatpush1.msra.mxu0 %v31
    %2447 = vmatprep.subr.mxu0 %v40
    %2448 = vmatpush1.msra.mxu0 %v39
    %2449 = vmatprep.subr.mxu0 %v48
    %2450 = vmatpush1.msra.mxu0 %v47
    %2451 = vmatprep.subr.mxu0 %v56
    %2452 = vmatpush1.msra.mxu0 %v55
    %2453 = vmatprep.subr.mxu0 %v64
    %2454 = vmatpush1.msra.mxu0 %v63
    %2455 = vmatprep.subr.mxu0 %v72
    %2456 = vmatpush1.msra.mxu0 %v71
    %2457 = vmatprep.subr.mxu0 %v80
    %2458 = vmatpush1.msra.mxu0 %v79
    %2459 = vmatprep.subr.mxu0 %v88
    %2460 = vmatpush1.msra.mxu0 %v87
    %2461 = vmatprep.subr.mxu0 %v96
    %2462 = vmatpush1.msra.mxu0 %v95
    %2463 = vmatprep.subr.mxu0 %v104
    %2464 = vmatpush1.msra.mxu0 %v103
    %2465 = vmatprep.subr.mxu0 %v112
    %2466 = vmatpush1.msra.mxu0 %v111
    %2467 = vmatprep.subr.mxu0 %v120
    %2468 = vmatpush1.msra.mxu0 %v119
    %2469 = vmatprep.subr.mxu0 %v128
    %2470 = vmatpush1.msra.mxu0 %v127
    %2471 = vmatprep.subr.mxu0 %v136
    %2472 = vmatpush1.msra.mxu0 %v135
    %2473 = vmatprep.subr.mxu0 %v144
    %2474 = vmatpush1.msra.mxu0 %v143
    %2475 = vmatprep.subr.mxu0 %v152
    %2476 = vmatpush1.msra.mxu0 %v151
    %2477 = vmatprep.subr.mxu0 %v160
    %2478 = vmatpush1.msra.mxu0 %v159
    %2479 = vmatprep.subr.mxu0 %v168
    %2480 = vmatpush1.msra.mxu0 %v167
    %2481 = vmatprep.subr.mxu0 %v176
    %2482 = vmatpush1.msra.mxu0 %v175
    %2483 = vmatprep.subr.mxu0 %v184
    %2484 = vmatpush1.msra.mxu0 %v183
    %2485 = vmatprep.subr.mxu0 %v192
    %2486 = vmatpush1.msra.mxu0 %v191
    %2487 = vmatprep.subr.mxu0 %v200
    %2488 = vmatpush1.msra.mxu0 %v199
    %2489 = vmatprep.subr.mxu0 %v208
    %2490 = vmatpush1.msra.mxu0 %v207
    %2491 = vmatprep.subr.mxu0 %v216
    %2492 = vmatpush1.msra.mxu0 %v215
    %2493 = vmatprep.subr.mxu0 %v224
    %2494 = vmatpush1.msra.mxu0 %v223
    %2495 = vmatprep.subr.mxu0 %v232
    %2496 = vmatpush1.msra.mxu0 %v231
    %2497 = vmatprep.subr.mxu0 %v240
    %2498 = vmatpush1.msra.mxu0 %v239
    %2499 = vmatprep.subr.mxu0 %v248
    %2500 = vmatpush1.msra.mxu0 %v247
    %2501 = vmatprep.subr.mxu0 %v256
    %2502 = vmatpush1.msra.mxu0 %v255
    %2503 = vmatprep.subr.mxu0 %v264
    %2504 = vmatpush1.msra.mxu0 %v263
    %2505 = vmatprep.subr.mxu0 %v272
    %2506 = vmatpush1.msra.mxu0 %v271
    %2507 = vmatprep.subr.mxu0 %v280
    %2508 = vmatpush1.msra.mxu0 %v279
    %2509 = vmatprep.mubr.f32.mxu0 %v2442
    %2510 = vmatmul.mubr.f32.gmra.mrb[0].mxu0 %v2418
    %v2511 = vpop.f32.mrb[0].mxu0
    %v2512 = vadd.f32 0.0, %v2511
    %v2513 = vpop.f32.mrb[0].mxu0
    %v2514 = vadd.f32 0.0, %v2513
    %2515 = vdwg.mxu0
    %2516 = vmatprep.subr.mxu0 %v34
    %2517 = vmatpush1.msra.mxu0 %v33
    %2518 = vmatprep.subr.mxu0 %v42
    %2519 = vmatpush1.msra.mxu0 %v41
    %2520 = vmatprep.subr.mxu0 %v50
    %2521 = vmatpush1.msra.mxu0 %v49
    %2522 = vmatprep.subr.mxu0 %v58
    %2523 = vmatpush1.msra.mxu0 %v57
    %2524 = vmatprep.subr.mxu0 %v66
    %2525 = vmatpush1.msra.mxu0 %v65
    %2526 = vmatprep.subr.mxu0 %v74
    %2527 = vmatpush1.msra.mxu0 %v73
    %2528 = vmatprep.subr.mxu0 %v82
    %2529 = vmatpush1.msra.mxu0 %v81
    %2530 = vmatprep.subr.mxu0 %v90
    %2531 = vmatpush1.msra.mxu0 %v89
    %2532 = vmatprep.subr.mxu0 %v98
    %2533 = vmatpush1.msra.mxu0 %v97
    %2534 = vmatprep.subr.mxu0 %v106
    %2535 = vmatpush1.msra.mxu0 %v105
    %2536 = vmatprep.subr.mxu0 %v114
    %2537 = vmatpush1.msra.mxu0 %v113
    %2538 = vmatprep.subr.mxu0 %v122
    %2539 = vmatpush1.msra.mxu0 %v121
    %2540 = vmatprep.subr.mxu0 %v130
    %2541 = vmatpush1.msra.mxu0 %v129
    %2542 = vmatprep.subr.mxu0 %v138
    %2543 = vmatpush1.msra.mxu0 %v137
    %2544 = vmatprep.subr.mxu0 %v146
    %2545 = vmatpush1.msra.mxu0 %v145
    %2546 = vmatprep.subr.mxu0 %v154
    %2547 = vmatpush1.msra.mxu0 %v153
    %2548 = vmatprep.subr.mxu0 %v162
    %2549 = vmatpush1.msra.mxu0 %v161
    %2550 = vmatprep.subr.mxu0 %v170
    %2551 = vmatpush1.msra.mxu0 %v169
    %2552 = vmatprep.subr.mxu0 %v178
    %2553 = vmatpush1.msra.mxu0 %v177
    %2554 = vmatprep.subr.mxu0 %v186
    %2555 = vmatpush1.msra.mxu0 %v185
    %2556 = vmatprep.subr.mxu0 %v194
    %2557 = vmatpush1.msra.mxu0 %v193
    %2558 = vmatprep.subr.mxu0 %v202
    %2559 = vmatpush1.msra.mxu0 %v201
    %2560 = vmatprep.subr.mxu0 %v210
    %2561 = vmatpush1.msra.mxu0 %v209
    %2562 = vmatprep.subr.mxu0 %v218
    %2563 = vmatpush1.msra.mxu0 %v217
    %2564 = vmatprep.subr.mxu0 %v226
    %2565 = vmatpush1.msra.mxu0 %v225
    %2566 = vmatprep.subr.mxu0 %v234
    %2567 = vmatpush1.msra.mxu0 %v233
    %2568 = vmatprep.subr.mxu0 %v242
    %2569 = vmatpush1.msra.mxu0 %v241
    %2570 = vmatprep.subr.mxu0 %v250
    %2571 = vmatpush1.msra.mxu0 %v249
    %2572 = vmatprep.subr.mxu0 %v258
    %2573 = vmatpush1.msra.mxu0 %v257
    %2574 = vmatprep.subr.mxu0 %v266
    %2575 = vmatpush1.msra.mxu0 %v265
    %2576 = vmatprep.subr.mxu0 %v274
    %2577 = vmatpush1.msra.mxu0 %v273
    %2578 = vmatprep.subr.mxu0 %v282
    %2579 = vmatpush1.msra.mxu0 %v281
    %2580 = vmatprep.mubr.f32.mxu0 %v2442
    %2581 = vmatmul.mubr.f32.gmra.mrb[0].mxu0 %v2418
    %v2582 = vpop.f32.mrb[0].mxu0
    %v2583 = vadd.f32 0.0, %v2582
    %v2584 = vpop.f32.mrb[0].mxu0
    %v2585 = vadd.f32 0.0, %v2584
    %2586 = vdwg.mxu0
    %2587 = vmatprep.subr.mxu0 %v36
    %2588 = vmatpush1.msra.mxu0 %v35
    %2589 = vmatprep.subr.mxu0 %v44
    %2590 = vmatpush1.msra.mxu0 %v43
    %2591 = vmatprep.subr.mxu0 %v52
    %2592 = vmatpush1.msra.mxu0 %v51
    %2593 = vmatprep.subr.mxu0 %v60
    %2594 = vmatpush1.msra.mxu0 %v59
    %2595 = vmatprep.subr.mxu0 %v68
    %2596 = vmatpush1.msra.mxu0 %v67
    %2597 = vmatprep.subr.mxu0 %v76
    %2598 = vmatpush1.msra.mxu0 %v75
    %2599 = vmatprep.subr.mxu0 %v84
    %2600 = vmatpush1.msra.mxu0 %v83
    %2601 = vmatprep.subr.mxu0 %v92
    %2602 = vmatpush1.msra.mxu0 %v91
    %2603 = vmatprep.subr.mxu0 %v100
    %2604 = vmatpush1.msra.mxu0 %v99
    %2605 = vmatprep.subr.mxu0 %v108
    %2606 = vmatpush1.msra.mxu0 %v107
    %2607 = vmatprep.subr.mxu0 %v116
    %2608 = vmatpush1.msra.mxu0 %v115
    %2609 = vmatprep.subr.mxu0 %v124
    %2610 = vmatpush1.msra.mxu0 %v123
    %2611 = vmatprep.subr.mxu0 %v132
    %2612 = vmatpush1.msra.mxu0 %v131
    %2613 = vmatprep.subr.mxu0 %v140
    %2614 = vmatpush1.msra.mxu0 %v139
    %2615 = vmatprep.subr.mxu0 %v148
    %2616 = vmatpush1.msra.mxu0 %v147
    %2617 = vmatprep.subr.mxu0 %v156
    %2618 = vmatpush1.msra.mxu0 %v155
    %2619 = vmatprep.subr.mxu0 %v164
    %2620 = vmatpush1.msra.mxu0 %v163
    %2621 = vmatprep.subr.mxu0 %v172
    %2622 = vmatpush1.msra.mxu0 %v171
    %2623 = vmatprep.subr.mxu0 %v180
    %2624 = vmatpush1.msra.mxu0 %v179
    %2625 = vmatprep.subr.mxu0 %v188
    %2626 = vmatpush1.msra.mxu0 %v187
    %2627 = vmatprep.subr.mxu0 %v196
    %2628 = vmatpush1.msra.mxu0 %v195
    %2629 = vmatprep.subr.mxu0 %v204
    %2630 = vmatpush1.msra.mxu0 %v203
    %2631 = vmatprep.subr.mxu0 %v212
    %2632 = vmatpush1.msra.mxu0 %v211
    %2633 = vmatprep.subr.mxu0 %v220
    %2634 = vmatpush1.msra.mxu0 %v219
    %2635 = vmatprep.subr.mxu0 %v228
    %2636 = vmatpush1.msra.mxu0 %v227
    %2637 = vmatprep.subr.mxu0 %v236
    %2638 = vmatpush1.msra.mxu0 %v235
    %2639 = vmatprep.subr.mxu0 %v244
    %2640 = vmatpush1.msra.mxu0 %v243
    %2641 = vmatprep.subr.mxu0 %v252
    %2642 = vmatpush1.msra.mxu0 %v251
    %2643 = vmatprep.subr.mxu0 %v260
    %2644 = vmatpush1.msra.mxu0 %v259
    %2645 = vmatprep.subr.mxu0 %v268
    %2646 = vmatpush1.msra.mxu0 %v267
    %2647 = vmatprep.subr.mxu0 %v276
    %2648 = vmatpush1.msra.mxu0 %v275
    %2649 = vmatprep.subr.mxu0 %v284
    %2650 = vmatpush1.msra.mxu0 %v283
    %2651 = vmatprep.mubr.f32.mxu0 %v2442
    %2652 = vmatmul.mubr.f32.gmra.mrb[0].mxu0 %v2418
    %v2653 = vpop.f32.mrb[0].mxu0
    %v2654 = vadd.f32 0.0, %v2653
    %v2655 = vpop.f32.mrb[0].mxu0
    %v2656 = vadd.f32 0.0, %v2655
    %2657 = vdwg.mxu0
    %2658 = vmatprep.subr.mxu0 %v38
    %2659 = vmatpush1.msra.mxu0 %v37
    %2660 = vmatprep.subr.mxu0 %v46
    %2661 = vmatpush1.msra.mxu0 %v45
    %2662 = vmatprep.subr.mxu0 %v54
    %2663 = vmatpush1.msra.mxu0 %v53
    %2664 = vmatprep.subr.mxu0 %v62
    %2665 = vmatpush1.msra.mxu0 %v61
    %2666 = vmatprep.subr.mxu0 %v70
    %2667 = vmatpush1.msra.mxu0 %v69
    %2668 = vmatprep.subr.mxu0 %v78
    %2669 = vmatpush1.msra.mxu0 %v77
    %2670 = vmatprep.subr.mxu0 %v86
    %2671 = vmatpush1.msra.mxu0 %v85
    %2672 = vmatprep.subr.mxu0 %v94
    %2673 = vmatpush1.msra.mxu0 %v93
    %2674 = vmatprep.subr.mxu0 %v102
    %2675 = vmatpush1.msra.mxu0 %v101
    %2676 = vmatprep.subr.mxu0 %v110
    %2677 = vmatpush1.msra.mxu0 %v109
    %2678 = vmatprep.subr.mxu0 %v118
    %2679 = vmatpush1.msra.mxu0 %v117
    %2680 = vmatprep.subr.mxu0 %v126
    %2681 = vmatpush1.msra.mxu0 %v125
    %2682 = vmatprep.subr.mxu0 %v134
    %2683 = vmatpush1.msra.mxu0 %v133
    %2684 = vmatprep.subr.mxu0 %v142
    %2685 = vmatpush1.msra.mxu0 %v141
    %2686 = vmatprep.subr.mxu0 %v150
    %2687 = vmatpush1.msra.mxu0 %v149
    %2688 = vmatprep.subr.mxu0 %v158
    %2689 = vmatpush1.msra.mxu0 %v157
    %2690 = vmatprep.subr.mxu0 %v166
    %2691 = vmatpush1.msra.mxu0 %v165
    %2692 = vmatprep.subr.mxu0 %v174
    %2693 = vmatpush1.msra.mxu0 %v173
    %2694 = vmatprep.subr.mxu0 %v182
    %2695 = vmatpush1.msra.mxu0 %v181
    %2696 = vmatprep.subr.mxu0 %v190
    %2697 = vmatpush1.msra.mxu0 %v189
    %2698 = vmatprep.subr.mxu0 %v198
    %2699 = vmatpush1.msra.mxu0 %v197
    %2700 = vmatprep.subr.mxu0 %v206
    %2701 = vmatpush1.msra.mxu0 %v205
    %2702 = vmatprep.subr.mxu0 %v214
    %2703 = vmatpush1.msra.mxu0 %v213
    %2704 = vmatprep.subr.mxu0 %v222
    %2705 = vmatpush1.msra.mxu0 %v221
    %2706 = vmatprep.subr.mxu0 %v230
    %2707 = vmatpush1.msra.mxu0 %v229
    %2708 = vmatprep.subr.mxu0 %v238
    %2709 = vmatpush1.msra.mxu0 %v237
    %2710 = vmatprep.subr.mxu0 %v246
    %2711 = vmatpush1.msra.mxu0 %v245
    %2712 = vmatprep.subr.mxu0 %v254
    %2713 = vmatpush1.msra.mxu0 %v253
    %2714 = vmatprep.subr.mxu0 %v262
    %2715 = vmatpush1.msra.mxu0 %v261
    %2716 = vmatprep.subr.mxu0 %v270
    %2717 = vmatpush1.msra.mxu0 %v269
    %2718 = vmatprep.subr.mxu0 %v278
    %2719 = vmatpush1.msra.mxu0 %v277
    %2720 = vmatprep.subr.mxu0 %v286
    %2721 = vmatpush1.msra.mxu0 %v285
    %2722 = vmatprep.mubr.f32.mxu0 %v2442
    %2723 = vmatmul.mubr.f32.gmra.mrb[0].mxu0 %v2418
    %v2724 = vpop.f32.mrb[0].mxu0
    %v2725 = vadd.f32 0.0, %v2724
    %v2726 = vpop.f32.mrb[0].mxu0
    %v2727 = vadd.f32 0.0, %v2726
    %2728 = vdwg.mxu0
    %s2729 = scalar_lea.vmem %s1, 112
    %v2730 = vld [vmem:[%s2729] sm:$0xff]
    %v2731 = vld [vmem:[%s2729 + $0x8] sm:$0xff]
    %v2734 = vcombine.high %v2730, %v2730
    %v2735 = vcombine.high %v2731, %v2731
    %v2738 = vadd.f32 %v2512, %v2730
    %v2739 = vadd.f32 %v2514, %v2734
    %v2740 = vadd.f32 %v2583, %v2731
    %v2741 = vadd.f32 %v2585, %v2735
    %v2742 = vadd.f32 %v2654, %v292
    %v2743 = vadd.f32 %v2656, %v296
    %v2744 = vadd.f32 %v2725, %v300
    %v2745 = vadd.f32 %v2727, %v304
    %v2746 = vxor.u32 %v2738, 2147483648
    %v2747 = vxor.u32 %v2739, 2147483648
    %v2748 = vxor.u32 %v2740, 2147483648
    %v2749 = vmul.f32 %v2746, 1.442695
    %v2750 = vpow.pop %v2749
    %v2751 = vmul.f32 %v2747, 1.442695
    %v2752 = vpow.pop %v2751
    %v2753 = vmul.f32 %v2748, 1.442695
    %v2754 = vpow.pop %v2753
    %v2755 = vadd.f32 %v2750, 1.0
    %v2756 = vadd.f32 %v2752, 1.0
    %v2757 = vadd.f32 %v2754, 1.0
    %v2758 = vrcp.pop %v2755
    %v2759 = vmul.f32 1.0, %v2758
    %v2760 = vrcp.pop %v2756
    %v2761 = vmul.f32 1.0, %v2760
    %v2762 = vrcp.pop %v2757
    %v2763 = vmul.f32 1.0, %v2762
    %v2764 = vtanh.pop %v2741
    %v2765 = vmul.f32 %v2761, %v2416
    %v2766 = vmul.f32 %v2759, %v2764
    %v2767 = vadd.f32 %v2765, %v2766
    %v2768 = vtanh.pop %v2767
    %v2769 = vmul.f32 %v2763, %v2768
    %v2770 = vxor.u32 %v2742, 2147483648
    %v2771 = vxor.u32 %v2743, 2147483648
    %v2772 = vxor.u32 %v2744, 2147483648
    %v2773 = vmul.f32 %v2770, 1.442695
    %v2774 = vpow.pop %v2773
    %v2775 = vmul.f32 %v2771, 1.442695
    %v2776 = vpow.pop %v2775
    %v2777 = vmul.f32 %v2772, 1.442695
    %v2778 = vpow.pop %v2777
    %v2779 = vadd.f32 %v2774, 1.0
    %v2780 = vadd.f32 %v2776, 1.0
    %v2781 = vadd.f32 %v2778, 1.0
    %v2782 = vrcp.pop %v2779
    %v2783 = vmul.f32 1.0, %v2782
    %v2784 = vrcp.pop %v2780
    %v2785 = vmul.f32 1.0, %v2784
    %v2786 = vrcp.pop %v2781
    %v2787 = vmul.f32 1.0, %v2786
    %v2788 = vtanh.pop %v2745
    %v2789 = vmul.f32 %v2785, %v2440
    %v2790 = vmul.f32 %v2783, %v2788
    %v2791 = vadd.f32 %v2789, %v2790
    %v2792 = vtanh.pop %v2791
    %v2793 = vmul.f32 %v2787, %v2792
    %vm2794 = vcmp.eq.s32.totalorder %v312, 7
    %v2795 = vsel %vm2794, %v2793, %v2444
    %2796 = vmatprep.subr.mxu0 %v36
    %2797 = vmatpush1.msra.mxu0 %v35
    %2798 = vmatprep.subr.mxu0 %v44
    %2799 = vmatpush1.msra.mxu0 %v43
    %2800 = vmatprep.subr.mxu0 %v52
    %2801 = vmatpush1.msra.mxu0 %v51
    %2802 = vmatprep.subr.mxu0 %v60
    %2803 = vmatpush1.msra.mxu0 %v59
    %2804 = vmatprep.subr.mxu0 %v68
    %2805 = vmatpush1.msra.mxu0 %v67
    %2806 = vmatprep.subr.mxu0 %v76
    %2807 = vmatpush1.msra.mxu0 %v75
    %2808 = vmatprep.subr.mxu0 %v84
    %2809 = vmatpush1.msra.mxu0 %v83
    %2810 = vmatprep.subr.mxu0 %v92
    %2811 = vmatpush1.msra.mxu0 %v91
    %2812 = vmatprep.subr.mxu0 %v100
    %2813 = vmatpush1.msra.mxu0 %v99
    %2814 = vmatprep.subr.mxu0 %v108
    %2815 = vmatpush1.msra.mxu0 %v107
    %2816 = vmatprep.subr.mxu0 %v116
    %2817 = vmatpush1.msra.mxu0 %v115
    %2818 = vmatprep.subr.mxu0 %v124
    %2819 = vmatpush1.msra.mxu0 %v123
    %2820 = vmatprep.subr.mxu0 %v132
    %2821 = vmatpush1.msra.mxu0 %v131
    %2822 = vmatprep.subr.mxu0 %v140
    %2823 = vmatpush1.msra.mxu0 %v139
    %2824 = vmatprep.subr.mxu0 %v148
    %2825 = vmatpush1.msra.mxu0 %v147
    %2826 = vmatprep.subr.mxu0 %v156
    %2827 = vmatpush1.msra.mxu0 %v155
    %2828 = vmatprep.subr.mxu0 %v164
    %2829 = vmatpush1.msra.mxu0 %v163
    %2830 = vmatprep.subr.mxu0 %v172
    %2831 = vmatpush1.msra.mxu0 %v171
    %2832 = vmatprep.subr.mxu0 %v180
    %2833 = vmatpush1.msra.mxu0 %v179
    %2834 = vmatprep.subr.mxu0 %v188
    %2835 = vmatpush1.msra.mxu0 %v187
    %2836 = vmatprep.subr.mxu0 %v196
    %2837 = vmatpush1.msra.mxu0 %v195
    %2838 = vmatprep.subr.mxu0 %v204
    %2839 = vmatpush1.msra.mxu0 %v203
    %2840 = vmatprep.subr.mxu0 %v212
    %2841 = vmatpush1.msra.mxu0 %v211
    %2842 = vmatprep.subr.mxu0 %v220
    %2843 = vmatpush1.msra.mxu0 %v219
    %2844 = vmatprep.subr.mxu0 %v228
    %2845 = vmatpush1.msra.mxu0 %v227
    %2846 = vmatprep.subr.mxu0 %v236
    %2847 = vmatpush1.msra.mxu0 %v235
    %2848 = vmatprep.subr.mxu0 %v244
    %2849 = vmatpush1.msra.mxu0 %v243
    %2850 = vmatprep.subr.mxu0 %v252
    %2851 = vmatpush1.msra.mxu0 %v251
    %2852 = vmatprep.subr.mxu0 %v260
    %2853 = vmatpush1.msra.mxu0 %v259
    %2854 = vmatprep.subr.mxu0 %v268
    %2855 = vmatpush1.msra.mxu0 %v267
    %2856 = vmatprep.subr.mxu0 %v276
    %2857 = vmatpush1.msra.mxu0 %v275
    %2858 = vmatprep.subr.mxu0 %v284
    %2859 = vmatpush1.msra.mxu0 %v283
    %2860 = vmatprep.mubr.f32.mxu0 %v2793
    %2861 = vmatmul.mubr.f32.gmra.mrb[0].mxu0 %v2769
    %v2862 = vpop.f32.mrb[0].mxu0
    %v2863 = vadd.f32 0.0, %v2862
    %v2864 = vpop.f32.mrb[0].mxu0
    %v2865 = vadd.f32 0.0, %v2864
    %2866 = vdwg.mxu0
    %2867 = vmatprep.subr.mxu0 %v38
    %2868 = vmatpush1.msra.mxu0 %v37
    %2869 = vmatprep.subr.mxu0 %v46
    %2870 = vmatpush1.msra.mxu0 %v45
    %2871 = vmatprep.subr.mxu0 %v54
    %2872 = vmatpush1.msra.mxu0 %v53
    %2873 = vmatprep.subr.mxu0 %v62
    %2874 = vmatpush1.msra.mxu0 %v61
    %2875 = vmatprep.subr.mxu0 %v70
    %2876 = vmatpush1.msra.mxu0 %v69
    %2877 = vmatprep.subr.mxu0 %v78
    %2878 = vmatpush1.msra.mxu0 %v77
    %2879 = vmatprep.subr.mxu0 %v86
    %2880 = vmatpush1.msra.mxu0 %v85
    %2881 = vmatprep.subr.mxu0 %v94
    %2882 = vmatpush1.msra.mxu0 %v93
    %2883 = vmatprep.subr.mxu0 %v102
    %2884 = vmatpush1.msra.mxu0 %v101
    %2885 = vmatprep.subr.mxu0 %v110
    %2886 = vmatpush1.msra.mxu0 %v109
    %2887 = vmatprep.subr.mxu0 %v118
    %2888 = vmatpush1.msra.mxu0 %v117
    %2889 = vmatprep.subr.mxu0 %v126
    %2890 = vmatpush1.msra.mxu0 %v125
    %2891 = vmatprep.subr.mxu0 %v134
    %2892 = vmatpush1.msra.mxu0 %v133
    %2893 = vmatprep.subr.mxu0 %v142
    %2894 = vmatpush1.msra.mxu0 %v141
    %2895 = vmatprep.subr.mxu0 %v150
    %2896 = vmatpush1.msra.mxu0 %v149
    %2897 = vmatprep.subr.mxu0 %v158
    %2898 = vmatpush1.msra.mxu0 %v157
    %2899 = vmatprep.subr.mxu0 %v166
    %2900 = vmatpush1.msra.mxu0 %v165
    %2901 = vmatprep.subr.mxu0 %v174
    %2902 = vmatpush1.msra.mxu0 %v173
    %2903 = vmatprep.subr.mxu0 %v182
    %2904 = vmatpush1.msra.mxu0 %v181
    %2905 = vmatprep.subr.mxu0 %v190
    %2906 = vmatpush1.msra.mxu0 %v189
    %2907 = vmatprep.subr.mxu0 %v198
    %2908 = vmatpush1.msra.mxu0 %v197
    %2909 = vmatprep.subr.mxu0 %v206
    %2910 = vmatpush1.msra.mxu0 %v205
    %2911 = vmatprep.subr.mxu0 %v214
    %2912 = vmatpush1.msra.mxu0 %v213
    %2913 = vmatprep.subr.mxu0 %v222
    %2914 = vmatpush1.msra.mxu0 %v221
    %2915 = vmatprep.subr.mxu0 %v230
    %2916 = vmatpush1.msra.mxu0 %v229
    %2917 = vmatprep.subr.mxu0 %v238
    %2918 = vmatpush1.msra.mxu0 %v237
    %2919 = vmatprep.subr.mxu0 %v246
    %2920 = vmatpush1.msra.mxu0 %v245
    %2921 = vmatprep.subr.mxu0 %v254
    %2922 = vmatpush1.msra.mxu0 %v253
    %2923 = vmatprep.subr.mxu0 %v262
    %2924 = vmatpush1.msra.mxu0 %v261
    %2925 = vmatprep.subr.mxu0 %v270
    %2926 = vmatpush1.msra.mxu0 %v269
    %2927 = vmatprep.subr.mxu0 %v278
    %2928 = vmatpush1.msra.mxu0 %v277
    %2929 = vmatprep.subr.mxu0 %v286
    %2930 = vmatpush1.msra.mxu0 %v285
    %2931 = vmatprep.mubr.f32.mxu0 %v2793
    %2932 = vmatmul.mubr.f32.gmra.mrb[0].mxu0 %v2769
    %v2933 = vpop.f32.mrb[0].mxu0
    %v2934 = vadd.f32 0.0, %v2933
    %v2935 = vpop.f32.mrb[0].mxu0
    %v2936 = vadd.f32 0.0, %v2935
    %2937 = vdwg.mxu0
    %v2938 = vadd.f32 %v2863, %v292
    %v2939 = vadd.f32 %v2865, %v296
    %v2940 = vadd.f32 %v2934, %v300
    %v2941 = vadd.f32 %v2936, %v304
    %v2942 = vxor.u32 %v2938, 2147483648
    %v2943 = vxor.u32 %v2939, 2147483648
    %v2944 = vxor.u32 %v2940, 2147483648
    %v2945 = vmul.f32 %v2942, 1.442695
    %v2946 = vpow.pop %v2945
    %v2947 = vmul.f32 %v2943, 1.442695
    %v2948 = vpow.pop %v2947
    %v2949 = vmul.f32 %v2944, 1.442695
    %v2950 = vpow.pop %v2949
    %v2951 = vadd.f32 %v2946, 1.0
    %v2952 = vadd.f32 %v2948, 1.0
    %v2953 = vadd.f32 %v2950, 1.0
    %v2954 = vrcp.pop %v2951
    %v2955 = vmul.f32 1.0, %v2954
    %v2956 = vrcp.pop %v2952
    %v2957 = vmul.f32 1.0, %v2956
    %v2958 = vrcp.pop %v2953
    %v2959 = vmul.f32 1.0, %v2958
    %v2960 = vtanh.pop %v2941
    %v2961 = vmul.f32 %v2957, %v2791
    %v2962 = vmul.f32 %v2955, %v2960
    %v2963 = vadd.f32 %v2961, %v2962
    %v2964 = vtanh.pop %v2963
    %v2965 = vmul.f32 %v2959, %v2964
    %vm2966 = vcmp.eq.s32.totalorder %v312, 8
    %v2967 = vsel %vm2966, %v2965, %v2795
    %2968 = vst [vmem:[%s4] sm:$0xf] %v2967
    // Predicated region
    $region22: #{dl_model_forward.1} parent=1 // pred_check
      _
    $region23: #{dl_model_forward.1} parent=1 // pred_check_branch
      %2970 = sbr.rel (0) target = $region25
    $region24: #{dl_model_forward.1} parent=1 // pred_region
      _
    $region25: #{dl_model_forward.1} parent=1 // pred_fallthru
      _
    // Predicated region
    $region26: #{dl_model_forward.1} parent=1 // pred_check
      _
    $region27: #{dl_model_forward.1} parent=1 // pred_check_branch
      %2972 = sbr.rel (0) target = $region29
    $region28: #{dl_model_forward.1} parent=1 // pred_region
      _
    $region29: #{dl_model_forward.1} parent=1 // pred_fallthru
      _
    %2973 = vsyncpa [#allocation3], 1

</llo_original>
